<compile_context>
chip_gen: v5e
topology: v5e:2x2
jax: 0.10.0
libtpu: 0.0.40
codegen_flags: <defaults>
</compile_context>

<pallas_src>
import functools
import math

import numpy as np
import jax
import jax.numpy as jnp
from jax.experimental import pallas as pl
from jax.experimental.pallas import tpu as pltpu


def _dcn_kernel(xwin_ref, xrows_ref, w_off_ref, b_off_ref, w_main_ref,
                scale_ref, shift_ref, out_ref,
                *, H, W, TH, pad, hp_expand, mxu_dtype):
    f32 = jnp.float32
    Ci = xwin_ref.shape[2]
    CiHp = xrows_ref.shape[1]
    Wp = xrows_ref.shape[2]
    Hp = CiHp // Ci
    Cho = out_ref.shape[1]
    THW = out_ref.shape[2]

    def mm_main(a, b):  # main-conv matmul; optionally bf16 operands, f32 accumulation
        return jnp.dot(a.astype(mxu_dtype), b.astype(mxu_dtype),
                       preferred_element_type=f32)

    xw = xwin_ref[0, 0]            # (Ci, THW + 2*pad)  zero-padded flattened window
    xr = xrows_ref[0]              # (Ci*Hp, Wp)        zero-padded image, rows stacked

    # ---- output-pixel coordinates, computed in-kernel (no rowcol input/DMA) ---------
    lane = jax.lax.broadcasted_iota(jnp.int32, (1, THW), 1).astype(f32)
    h_loc = jnp.floor(lane / float(W))          # exact: lane < 2^23, W << 2^11
    wb = lane - h_loc * float(W)                # global output col (float, integral)
    hb = h_loc + (pl.program_id(1) * TH).astype(f32)   # global output row

    # column-validity masks of the plain 3x3 conv, hoisted (kw == 1 is always valid)
    ok_l = (wb >= 1.0).astype(f32)              # kw == 0
    ok_r = (wb < float(W - 1)).astype(f32)      # kw == 2

    # ---- 1) offset/mask 3x3 conv as ONE fused K = 9*Ci MXU matmul -------------------
    patches = []
    for kh in range(3):
        for kw in range(3):
            s = (kh - 1) * W + (kw - 1)                      # static flat shift
            patch = xw[:, pad + s:pad + s + THW]             # (Ci, THW)
            if kw == 0:
                patch = patch * ok_l
            elif kw == 2:
                patch = patch * ok_r
            patches.append(patch)
    pmat = jnp.concatenate(patches, axis=0)                  # (9*Ci, THW)
    offmask = jnp.dot(w_off_ref[...], pmat,
                      preferred_element_type=f32) + b_off_ref[...]   # (27, THW), f32
    masks = jax.nn.sigmoid(offmask[18:27, :])                # (9, THW), one EUP pass

    r_iota = jax.lax.broadcasted_iota(jnp.int32, (Hp, THW), 0)
    q_iota = jax.lax.broadcasted_iota(jnp.int32, (Wp, THW), 0)

    # ---- 2)+3) modulated deformable bilinear sampling + main 3x3 conv ---------------
    # TODO(synk): at production Ci*Hp*THW convert this static unroll to a
    # lax.fori_loop(unroll=2) accumulation to bound live ranges (neutral here).
    acc = jnp.zeros((Cho, THW), f32)
    for k in range(9):
        kh, kw = k // 3, k % 3
        dy = offmask[2 * k:2 * k + 1, :]        # (1, THW) sublane-row reads
        dx = offmask[2 * k + 1:2 * k + 2, :]
        m = masks[k:k + 1, :]

        hs = hb + float(kh - 1) + dy            # sample position (float)
        ws = wb + float(kw - 1) + dx
        vm = (((hs > -1.0) & (ws > -1.0) &
               (hs < float(H)) & (ws < float(W))).astype(f32)) * m   # validity * mask

        hl = jnp.floor(hs)
        wl = jnp.floor(ws)
        lh = hs - hl
        lw = ws - wl
        # corner indices in *padded* coordinates; clipping is safe because any clipped
        # corner either lands on the zero padding or is zeroed by the validity mask.
        r0 = jnp.clip(hl.astype(jnp.int32) + 1, 0, Hp - 1)
        r1 = jnp.clip(hl.astype(jnp.int32) + 2, 0, Hp - 1)
        c0 = jnp.clip(wl.astype(jnp.int32) + 1, 0, Wp - 1)
        c1 = jnp.clip(wl.astype(jnp.int32) + 2, 0, Wp - 1)

        # stage 1: horizontal lerp as a small one-hot matmul on the MXU (kept f32; bf16
        # here risks the 2e-3 tolerance since it feeds the bilinear corners directly)
        csel = (jnp.where(q_iota == c0, 1.0 - lw, 0.0)
                + jnp.where(q_iota == c1, lw, 0.0))               # (Wp, THW)
        y = jnp.dot(xr, csel, preferred_element_type=f32)         # (Ci*Hp, THW)

        # stage 2: vertical-lerp selector built at (Hp, THW) only, with validity*mask
        # folded into this small operand.
        rsel = ((jnp.where(r_iota == r0, 1.0 - lh, 0.0)
                 + jnp.where(r_iota == r1, lh, 0.0)) * vm)        # (Hp, THW)

        if hp_expand:
            # small Ci: fold the vertical lerp + Hp-reduction into the MXU via the
            # Hp-expanded main weights (K = Ci*Hp).
            rsel_full = jnp.concatenate([rsel] * Ci, axis=0)      # (Ci*Hp, THW)
            acc = acc + mm_main(w_main_ref[k], y * rsel_full)     # (Cho, THW)
        else:
            # large Ci (production, not exercised by the small test below): vertical
            # lerp + Hp-reduction on the VPU/XLU, main matmul with K = Ci.
            v = jnp.sum(y.reshape(Ci, Hp, THW) * rsel[None, :, :], axis=1)  # (Ci, THW)
            acc = acc + mm_main(w_main_ref[k], v)                 # (Cho, THW)

    # ---- 4) BatchNorm (eval, folded; conv bias folded into shift) + ReLU ------------
    out = jnp.maximum(acc * scale_ref[...] + shift_ref[...], 0.0)
    out_ref[...] = out.reshape(1, Cho, THW).astype(out_ref.dtype)


def _pick_row_tile(H, W, max_lanes=4096):
    """Largest row tile dividing H whose flattened width is a 128 multiple <= max_lanes."""
    best = None
    for d in range(1, H + 1):
        if H % d == 0 and (d * W) % 128 == 0 and d * W <= max_lanes:
            best = d
    # Fallback TH=H gives a single (possibly lane-sparse / masked-store) tile.
    return best if best is not None else H


def deform_conv_forward(x_nchw, params, *, row_tile=None, mxu_dtype=jnp.float32):
    """DCNv2(3x3, dg=1, s=1, p=1, d=1) + BatchNorm2d(eval) + ReLU.

    x_nchw: (N, Ci, H, W) float32 -> (N, Cho, H, W) float32.
    Set mxu_dtype=jnp.bfloat16 on v6e/v7x for higher main-conv MXU throughput
    (offset conv / gather matmul stay f32); re-validate tolerance if enabled.
    """
    N, Ci, H, W = x_nchw.shape
    Cho = params["w_main"].shape[0]
    Hp, Wp = H + 2, W + 2

    TH = row_tile if row_tile is not None else _pick_row_tile(H, W)
    assert H % TH == 0, "row_tile must divide H"
    n_t = H // TH
    THW = TH * W
    assert n_t == 1 or THW % 128 == 0, "tile lane width must be a multiple of 128"
    pad = W + 1                          # covers the +-(W+1) flat shifts of a 3x3 conv
    Lw = THW + 2 * pad
    # Hp-expanded main weights only while small; at production Ci the expansion blows
    # VMEM (v7x: 64 MiB) and multiplies main-matmul FLOPs by Hp.
    hp_expand = Ci < 64

    x = x_nchw.astype(jnp.float32)
    # TODO(synk): x_win materializes one extra input-sized array in HBM; an
    # element-offset BlockSpec / manual DMA over x_flat_pad would avoid that traffic.
    x_flat_pad = jnp.pad(x.reshape(N, Ci, H * W), ((0, 0), (0, 0), (pad, pad)))
    x_win = jnp.stack([x_flat_pad[:, :, t * THW:t * THW + Lw] for t in range(n_t)],
                      axis=1)                                        # (N, n_t, Ci, Lw)
    # zero-padded image with channel-major row stacking for the column-gather matmul
    xrows = jnp.pad(x, ((0, 0), (0, 0), (1, 1), (1, 1))).reshape(N, Ci * Hp, Wp)

    # offset-conv weights reordered tap-major for the single fused K=9*Ci matmul:
    #   w_off_big[o, k*Ci + c] = w_off[o, c, kh, kw],  k = kh*3 + kw
    w_off_big = jnp.transpose(params["w_off"].astype(jnp.float32),
                              (0, 2, 3, 1)).reshape(27, 9 * Ci)
    # main-conv weights, tap-major: w_main_t[k, o, c] = w_main[o, c, kh, kw]
    w_main_t = jnp.transpose(params["w_main"].astype(jnp.float32),
                             (2, 3, 0, 1)).reshape(9, Cho, Ci)
    if hp_expand:
        #   w_main_k[k, o, c*Hp + r] = w_main[o, c, kh, kw]
        w_main_k = jnp.broadcast_to(w_main_t[:, :, :, None],
                                    (9, Cho, Ci, Hp)).reshape(9, Cho, Ci * Hp)
    else:
        w_main_k = w_main_t
    Kmain = w_main_k.shape[2]

    b_off = params["b_off"].reshape(27, 1).astype(jnp.float32)
    eps = 1e-5
    scale1 = (params["bn_gamma"] / jnp.sqrt(params["bn_var"] + eps)).astype(jnp.float32)
    # conv bias folded into the BN shift -> single FMA + ReLU epilogue in the kernel
    shift1 = params["bn_beta"] + (params["b_main"] - params["bn_mean"]) * scale1
    scale = scale1.reshape(Cho, 1)
    shift = shift1.astype(jnp.float32).reshape(Cho, 1)

    kernel = functools.partial(_dcn_kernel, H=H, W=W, TH=TH, pad=pad,
                               hp_expand=hp_expand, mxu_dtype=mxu_dtype)

    # scoped-VMEM budget: generous on v5e/v6e (128 MiB physical), headroom on v7x (64 MiB)
    try:
        vmem_cap = int(pltpu.get_tpu_info().vmem_capacity_bytes)
    except Exception:
        vmem_cap = 128 * 1024 * 1024
    vmem_limit = int(min(96 * 1024 * 1024, (vmem_cap * 3) // 4))

    flops = 2 * N * n_t * THW * (27 * 9 * Ci + 9 * (Ci * Hp * Wp + Cho * Kmain))
    bytes_accessed = 4 * int(x_win.size + N * n_t * Ci * Hp * Wp + N * Cho * H * W
                             + N * n_t * (27 * 9 * Ci + 9 * Cho * Kmain))
    cost = pl.CostEstimate(flops=int(flops), transcendentals=int(9 * N * H * W),
                           bytes_accessed=int(bytes_accessed))

    # TODO(synk): grid-invariant inputs (xrows, weights, biases) could be
    # single-buffered (pipeline_mode=pl.Buffered(1)) to free VMEM for bigger tiles.
    out_flat = pl.pallas_call(
        kernel,
        out_shape=jax.ShapeDtypeStruct((N, Cho, H * W), jnp.float32),
        grid_spec=pltpu.PrefetchScalarGridSpec(
            num_scalar_prefetch=0,
            grid=(N, n_t),
            in_specs=[
                pl.BlockSpec((1, 1, Ci, Lw), lambda n, t: (n, t, 0, 0)),
                pl.BlockSpec((1, Ci * Hp, Wp), lambda n, t: (n, 0, 0)),
                pl.BlockSpec((27, 9 * Ci), lambda n, t: (0, 0)),
                pl.BlockSpec((27, 1), lambda n, t: (0, 0)),
                pl.BlockSpec((9, Cho, Kmain), lambda n, t: (0, 0, 0)),
                pl.BlockSpec((Cho, 1), lambda n, t: (0, 0)),
                pl.BlockSpec((Cho, 1), lambda n, t: (0, 0)),
            ],
            out_specs=pl.BlockSpec((1, Cho, THW), lambda n, t: (n, 0, t)),
        ),
        compiler_params=pltpu.CompilerParams(
            dimension_semantics=("parallel", "parallel"),
            vmem_limit_bytes=vmem_limit),
        cost_estimate=cost,
    )(x_win, xrows, w_off_big, b_off, w_main_k, scale, shift)

    return out_flat.reshape(N, Cho, H, W)


# ---------------------------- numpy reference (float64) ---------------------------
def reference_numpy(x_nchw, params):
    x = np.asarray(x_nchw, dtype=np.float64)
    N, Ci, H, W = x.shape
    w_off = np.asarray(params["w_off"], np.float64)     # (27, Ci, 3, 3)
    b_off = np.asarray(params["b_off"], np.float64)
    w_main = np.asarray(params["w_main"], np.float64)   # (Cho, Ci, 3, 3)
    b_main = np.asarray(params["b_main"], np.float64)
    Cho = w_main.shape[0]

    # offset/mask conv (plain 3x3, pad=1)
    xp = np.pad(x, ((0, 0), (0, 0), (1, 1), (1, 1)))
    offmask = np.zeros((N, 27, H, W))
    for co in range(27):
        acc = np.full((N, H, W), b_off[co])
        for ci in range(Ci):
            for kh in range(3):
                for kw in range(3):
                    acc += w_off[co, ci, kh, kw] * xp[:, ci, kh:kh + H, kw:kw + W]
        offmask[:, co] = acc
    offset = offmask[:, :18]
    mask = 1.0 / (1.0 + np.exp(-offmask[:, 18:]))

    out = np.zeros((N, Cho, H, W))
    hh, ww = np.meshgrid(np.arange(H), np.arange(W), indexing="ij")
    wflat = w_main.reshape(Cho, Ci * 9)
    for n in range(N):
        cols = np.zeros((Ci * 9, H, W))
        for k in range(9):
            kh, kw = k // 3, k % 3
            dy, dx, m = offset[n, 2 * k], offset[n, 2 * k + 1], mask[n, k]
            hs = hh + (kh - 1) + dy
            ws = ww + (kw - 1) + dx
            valid = (hs > -1) & (ws > -1) & (hs < H) & (ws < W)
            hl = np.floor(hs).astype(np.int64)
            wl = np.floor(ws).astype(np.int64)
            lh, lw = hs - hl, ws - wl

            def corner(r, c):
                ok = (r >= 0) & (r < H) & (c >= 0) & (c < W)
                rc = np.clip(r, 0, H - 1)
                cc = np.clip(c, 0, W - 1)
                return x[n][:, rc, cc] * ok

            v = ((1 - lh) * (1 - lw) * corner(hl, wl)
                 + (1 - lh) * lw * corner(hl, wl + 1)
                 + lh * (1 - lw) * corner(hl + 1, wl)
                 + lh * lw * corner(hl + 1, wl + 1))
            v = v * valid * m
            for ci in range(Ci):
                cols[ci * 9 + k] = v[ci]
        out[n] = np.tensordot(wflat, cols, axes=([1], [0])) + b_main[:, None, None]

    gamma = np.asarray(params["bn_gamma"], np.float64)[None, :, None, None]
    beta = np.asarray(params["bn_beta"], np.float64)[None, :, None, None]
    mean = np.asarray(params["bn_mean"], np.float64)[None, :, None, None]
    var = np.asarray(params["bn_var"], np.float64)[None, :, None, None]
    out = (out - mean) / np.sqrt(var + 1e-5) * gamma + beta
    return np.maximum(out, 0.0)


if __name__ == "__main__":
    key = jax.random.PRNGKey(0)
    N, Ci, H, W, Cho = 2, 4, 16, 16, 8
    ks = jax.random.split(key, 10)
    x = jax.random.normal(ks[0], (N, Ci, H, W), jnp.float32)

    stdv = 1.0 / math.sqrt(Ci * 9)
    params = {
        # DCNv2 main conv weight/bias (uniform(-stdv, stdv) like reset_parameters)
        "w_main": jax.random.uniform(ks[1], (Cho, Ci, 3, 3), jnp.float32, -stdv, stdv),
        "b_main": jax.random.uniform(ks[2], (Cho,), jnp.float32, -stdv, stdv),
        # NOTE: PyTorch DCN zero-inits conv_offset_mask; small nonzero values are used
        # here (deterministically) so the bilinear-sampling path is actually exercised.
        "w_off": 0.3 * jax.random.normal(ks[3], (27, Ci, 3, 3), jnp.float32),
        "b_off": 0.1 * jax.random.normal(ks[4], (27,), jnp.float32),
        # BatchNorm2d params / running stats (eval-mode semantics)
        "bn_gamma": jax.random.uniform(ks[5], (Cho,), jnp.float32, 0.5, 1.5),
        "bn_beta": 0.1 * jax.random.normal(ks[6], (Cho,), jnp.float32),
        "bn_mean": 0.1 * jax.random.normal(ks[7], (Cho,), jnp.float32),
        "bn_var": jax.random.uniform(ks[8], (Cho,), jnp.float32, 0.5, 1.5),
    }

    # row_tile=8 -> (2 batches x 2 row tiles) grid, 128-lane output blocks.
    y = jax.block_until_ready(deform_conv_forward(x, params, row_tile=8))
    assert y.shape == (N, Cho, H, W) and y.dtype == jnp.float32

    y_ref = reference_numpy(np.asarray(x), params)
    np.testing.assert_allclose(np.asarray(y), y_ref, rtol=2e-3, atol=2e-3)
    print("KERNEL_OK")
</pallas_src>

<mosaic_0001>
module attributes {stable_mosaic.version = 11 : i64} {
  func.func @_dcn_kernel(%arg0: i32, %arg1: i32, %arg2: memref<1x1x4x162xf32, #tpu.memory_space<vmem>>, %arg3: memref<1x72x18xf32, #tpu.memory_space<vmem>>, %arg4: memref<27x36xf32, #tpu.memory_space<vmem>>, %arg5: memref<27x1xf32, #tpu.memory_space<vmem>>, %arg6: memref<9x8x72xf32, #tpu.memory_space<vmem>>, %arg7: memref<8x1xf32, #tpu.memory_space<vmem>>, %arg8: memref<8x1xf32, #tpu.memory_space<vmem>>, %arg9: memref<1x8x128xf32, #tpu.memory_space<vmem>>) attributes {dimension_semantics = [#tpu.dimension_semantics<parallel>, #tpu.dimension_semantics<parallel>], iteration_bounds = array<i64: 2, 2>, scalar_prefetch = 0 : i64, scratch_operands = 0 : i64, tpu.core_type = #tpu.core_type<tc>, window_params = [{transform_indices = @transform_0, window_bounds = array<i64: 1, 1, 4, 162>}, {transform_indices = @transform_1, window_bounds = array<i64: 1, 72, 18>}, {pipeline_mode = #tpu.pipeline_mode<synchronous>, transform_indices = @transform_2, window_bounds = array<i64: 27, 36>}, {pipeline_mode = #tpu.pipeline_mode<synchronous>, transform_indices = @transform_3, window_bounds = array<i64: 27, 1>}, {pipeline_mode = #tpu.pipeline_mode<synchronous>, transform_indices = @transform_4, window_bounds = array<i64: 9, 8, 72>}, {pipeline_mode = #tpu.pipeline_mode<synchronous>, transform_indices = @transform_5, window_bounds = array<i64: 8, 1>}, {pipeline_mode = #tpu.pipeline_mode<synchronous>, transform_indices = @transform_6, window_bounds = array<i64: 8, 1>}, {transform_indices = @transform_7, window_bounds = array<i64: 1, 8, 128>}]} {
    %c0 = arith.constant 0 : index
    %c0_0 = arith.constant 0 : index
    %c0_1 = arith.constant 0 : index
    %c0_2 = arith.constant 0 : index
    %0 = vector.load %arg2[%c0, %c0_0, %c0_1, %c0_2] : memref<1x1x4x162xf32, #tpu.memory_space<vmem>>, vector<1x1x4x162xf32>
    %1 = vector.shape_cast %0 : vector<1x1x4x162xf32> to vector<4x162xf32>
    %c0_3 = arith.constant 0 : index
    %c0_4 = arith.constant 0 : index
    %c0_5 = arith.constant 0 : index
    %2 = vector.load %arg3[%c0_3, %c0_4, %c0_5] : memref<1x72x18xf32, #tpu.memory_space<vmem>>, vector<1x72x18xf32>
    %3 = vector.shape_cast %2 : vector<1x72x18xf32> to vector<72x18xf32>
    %4 = tpu.iota {dimensions = array<i32: 1>} : vector<1x128xi32>
    %5 = arith.sitofp %4 : vector<1x128xi32> to vector<1x128xf32>
    %cst = arith.constant 1.600000e+01 : f32
    %6 = vector.broadcast %cst : f32 to vector<1x128xf32>
    %7 = arith.divf %5, %6 : vector<1x128xf32>
    %8 = math.floor %7 : vector<1x128xf32>
    %cst_6 = arith.constant 1.600000e+01 : f32
    %9 = vector.broadcast %cst_6 : f32 to vector<1x128xf32>
    %10 = arith.mulf %8, %9 : vector<1x128xf32>
    %11 = arith.subf %5, %10 : vector<1x128xf32>
    %c8_i32 = arith.constant 8 : i32
    %12 = arith.muli %arg1, %c8_i32 : i32
    %13 = arith.sitofp %12 : i32 to f32
    %14 = vector.broadcast %13 : f32 to vector<1x128xf32>
    %15 = arith.addf %8, %14 : vector<1x128xf32>
    %cst_7 = arith.constant 1.000000e+00 : f32
    %16 = vector.broadcast %cst_7 : f32 to vector<1x128xf32>
    %17 = arith.cmpf oge, %11, %16 : vector<1x128xf32>
    %18 = arith.extui %17 : vector<1x128xi1> to vector<1x128xi32>
    %19 = arith.sitofp %18 : vector<1x128xi32> to vector<1x128xf32>
    %cst_8 = arith.constant 1.500000e+01 : f32
    %20 = vector.broadcast %cst_8 : f32 to vector<1x128xf32>
    %21 = arith.cmpf olt, %11, %20 : vector<1x128xf32>
    %22 = arith.extui %21 : vector<1x128xi1> to vector<1x128xi32>
    %23 = arith.sitofp %22 : vector<1x128xi32> to vector<1x128xf32>
    %24 = vector.extract_strided_slice %1 {offsets = [0, 0], sizes = [4, 128], strides = [1, 1]} : vector<4x162xf32> to vector<4x128xf32>
    %25 = vector.broadcast %19 : vector<1x128xf32> to vector<4x128xf32>
    %26 = arith.mulf %24, %25 : vector<4x128xf32>
    %27 = vector.extract_strided_slice %1 {offsets = [0, 1], sizes = [4, 128], strides = [1, 1]} : vector<4x162xf32> to vector<4x128xf32>
    %28 = vector.extract_strided_slice %1 {offsets = [0, 2], sizes = [4, 128], strides = [1, 1]} : vector<4x162xf32> to vector<4x128xf32>
    %29 = vector.broadcast %23 : vector<1x128xf32> to vector<4x128xf32>
    %30 = arith.mulf %28, %29 : vector<4x128xf32>
    %31 = vector.extract_strided_slice %1 {offsets = [0, 16], sizes = [4, 128], strides = [1, 1]} : vector<4x162xf32> to vector<4x128xf32>
    %32 = vector.broadcast %19 : vector<1x128xf32> to vector<4x128xf32>
    %33 = arith.mulf %31, %32 : vector<4x128xf32>
    %34 = vector.extract_strided_slice %1 {offsets = [0, 17], sizes = [4, 128], strides = [1, 1]} : vector<4x162xf32> to vector<4x128xf32>
    %35 = vector.extract_strided_slice %1 {offsets = [0, 18], sizes = [4, 128], strides = [1, 1]} : vector<4x162xf32> to vector<4x128xf32>
    %36 = vector.broadcast %23 : vector<1x128xf32> to vector<4x128xf32>
    %37 = arith.mulf %35, %36 : vector<4x128xf32>
    %38 = vector.extract_strided_slice %1 {offsets = [0, 32], sizes = [4, 128], strides = [1, 1]} : vector<4x162xf32> to vector<4x128xf32>
    %39 = vector.broadcast %19 : vector<1x128xf32> to vector<4x128xf32>
    %40 = arith.mulf %38, %39 : vector<4x128xf32>
    %41 = vector.extract_strided_slice %1 {offsets = [0, 33], sizes = [4, 128], strides = [1, 1]} : vector<4x162xf32> to vector<4x128xf32>
    %42 = vector.extract_strided_slice %1 {offsets = [0, 34], sizes = [4, 128], strides = [1, 1]} : vector<4x162xf32> to vector<4x128xf32>
    %43 = vector.broadcast %23 : vector<1x128xf32> to vector<4x128xf32>
    %44 = arith.mulf %42, %43 : vector<4x128xf32>
    %45 = tpu.concatenate %26, %27, %30, %33, %34, %37, %40, %41, %44 in 0 : vector<4x128xf32>, vector<4x128xf32>, vector<4x128xf32>, vector<4x128xf32>, vector<4x128xf32>, vector<4x128xf32>, vector<4x128xf32>, vector<4x128xf32>, vector<4x128xf32> -> vector<36x128xf32>
    %c0_9 = arith.constant 0 : index
    %c0_10 = arith.constant 0 : index
    %46 = vector.load %arg4[%c0_9, %c0_10] : memref<27x36xf32, #tpu.memory_space<vmem>>, vector<27x36xf32>
    %cst_11 = arith.constant dense<0.000000e+00> : vector<27x128xf32>
    %47 = tpu.matmul %46, %45, %cst_11 {dimension_numbers = #tpu.dot_dimension_numbers<[1], [0], [0], [1], [0, 0, 1, 1], [], []>} : vector<27x36xf32>, vector<36x128xf32>, vector<27x128xf32> -> vector<27x128xf32>
    %c0_12 = arith.constant 0 : index
    %c0_13 = arith.constant 0 : index
    %48 = vector.load %arg5[%c0_12, %c0_13] : memref<27x1xf32, #tpu.memory_space<vmem>>, vector<27x1xf32>
    %49 = vector.broadcast %48 : vector<27x1xf32> to vector<27x128xf32>
    %50 = arith.addf %47, %49 : vector<27x128xf32>
    %51 = vector.extract_strided_slice %50 {offsets = [18, 0], sizes = [9, 128], strides = [1, 1]} : vector<27x128xf32> to vector<9x128xf32>
    %52 = arith.negf %51 : vector<9x128xf32>
    %53 = math.exp %52 : vector<9x128xf32>
    %cst_14 = arith.constant 1.000000e+00 : f32
    %54 = vector.broadcast %cst_14 : f32 to vector<9x128xf32>
    %55 = arith.addf %54, %53 : vector<9x128xf32>
    %56 = arith.divf %54, %55 : vector<9x128xf32>
    %57 = tpu.iota {dimensions = array<i32: 0>} : vector<18x128xi32>
    %58 = tpu.iota {dimensions = array<i32: 0>} : vector<18x128xi32>
    %cst_15 = arith.constant 0.000000e+00 : f32
    %59 = vector.broadcast %cst_15 : f32 to vector<8x128xf32>
    %60 = vector.extract_strided_slice %50 {offsets = [0, 0], sizes = [1, 128], strides = [1, 1]} : vector<27x128xf32> to vector<1x128xf32>
    %61 = vector.extract_strided_slice %50 {offsets = [1, 0], sizes = [1, 128], strides = [1, 1]} : vector<27x128xf32> to vector<1x128xf32>
    %62 = vector.extract_strided_slice %56 {offsets = [0, 0], sizes = [1, 128], strides = [1, 1]} : vector<9x128xf32> to vector<1x128xf32>
    %cst_16 = arith.constant -1.000000e+00 : f32
    %63 = vector.broadcast %cst_16 : f32 to vector<1x128xf32>
    %64 = arith.addf %15, %63 : vector<1x128xf32>
    %65 = arith.addf %64, %60 : vector<1x128xf32>
    %cst_17 = arith.constant -1.000000e+00 : f32
    %66 = vector.broadcast %cst_17 : f32 to vector<1x128xf32>
    %67 = arith.addf %11, %66 : vector<1x128xf32>
    %68 = arith.addf %67, %61 : vector<1x128xf32>
    %cst_18 = arith.constant -1.000000e+00 : f32
    %69 = vector.broadcast %cst_18 : f32 to vector<1x128xf32>
    %70 = arith.cmpf ogt, %65, %69 : vector<1x128xf32>
    %cst_19 = arith.constant -1.000000e+00 : f32
    %71 = vector.broadcast %cst_19 : f32 to vector<1x128xf32>
    %72 = arith.cmpf ogt, %68, %71 : vector<1x128xf32>
    %73 = arith.andi %70, %72 : vector<1x128xi1>
    %cst_20 = arith.constant 1.600000e+01 : f32
    %74 = vector.broadcast %cst_20 : f32 to vector<1x128xf32>
    %75 = arith.cmpf olt, %65, %74 : vector<1x128xf32>
    %76 = arith.andi %73, %75 : vector<1x128xi1>
    %cst_21 = arith.constant 1.600000e+01 : f32
    %77 = vector.broadcast %cst_21 : f32 to vector<1x128xf32>
    %78 = arith.cmpf olt, %68, %77 : vector<1x128xf32>
    %79 = arith.andi %76, %78 : vector<1x128xi1>
    %80 = arith.extui %79 : vector<1x128xi1> to vector<1x128xi32>
    %81 = arith.sitofp %80 : vector<1x128xi32> to vector<1x128xf32>
    %82 = arith.mulf %81, %62 : vector<1x128xf32>
    %83 = math.floor %65 : vector<1x128xf32>
    %84 = math.floor %68 : vector<1x128xf32>
    %85 = arith.subf %65, %83 : vector<1x128xf32>
    %86 = arith.subf %68, %84 : vector<1x128xf32>
    %87 = arith.fptosi %83 : vector<1x128xf32> to vector<1x128xi32>
    %c1_i32 = arith.constant 1 : i32
    %88 = vector.broadcast %c1_i32 : i32 to vector<1x128xi32>
    %89 = arith.addi %87, %88 : vector<1x128xi32>
    %c0_i32 = arith.constant 0 : i32
    %c17_i32 = arith.constant 17 : i32
    %90 = vector.broadcast %c0_i32 : i32 to vector<1x128xi32>
    %91 = arith.maxsi %90, %89 : vector<1x128xi32>
    %92 = vector.broadcast %c17_i32 : i32 to vector<1x128xi32>
    %93 = arith.minsi %92, %91 : vector<1x128xi32>
    %94 = arith.fptosi %83 : vector<1x128xf32> to vector<1x128xi32>
    %c2_i32 = arith.constant 2 : i32
    %95 = vector.broadcast %c2_i32 : i32 to vector<1x128xi32>
    %96 = arith.addi %94, %95 : vector<1x128xi32>
    %c0_i32_22 = arith.constant 0 : i32
    %c17_i32_23 = arith.constant 17 : i32
    %97 = vector.broadcast %c0_i32_22 : i32 to vector<1x128xi32>
    %98 = arith.maxsi %97, %96 : vector<1x128xi32>
    %99 = vector.broadcast %c17_i32_23 : i32 to vector<1x128xi32>
    %100 = arith.minsi %99, %98 : vector<1x128xi32>
    %101 = arith.fptosi %84 : vector<1x128xf32> to vector<1x128xi32>
    %c1_i32_24 = arith.constant 1 : i32
    %102 = vector.broadcast %c1_i32_24 : i32 to vector<1x128xi32>
    %103 = arith.addi %101, %102 : vector<1x128xi32>
    %c0_i32_25 = arith.constant 0 : i32
    %c17_i32_26 = arith.constant 17 : i32
    %104 = vector.broadcast %c0_i32_25 : i32 to vector<1x128xi32>
    %105 = arith.maxsi %104, %103 : vector<1x128xi32>
    %106 = vector.broadcast %c17_i32_26 : i32 to vector<1x128xi32>
    %107 = arith.minsi %106, %105 : vector<1x128xi32>
    %108 = arith.fptosi %84 : vector<1x128xf32> to vector<1x128xi32>
    %c2_i32_27 = arith.constant 2 : i32
    %109 = vector.broadcast %c2_i32_27 : i32 to vector<1x128xi32>
    %110 = arith.addi %108, %109 : vector<1x128xi32>
    %c0_i32_28 = arith.constant 0 : i32
    %c17_i32_29 = arith.constant 17 : i32
    %111 = vector.broadcast %c0_i32_28 : i32 to vector<1x128xi32>
    %112 = arith.maxsi %111, %110 : vector<1x128xi32>
    %113 = vector.broadcast %c17_i32_29 : i32 to vector<1x128xi32>
    %114 = arith.minsi %113, %112 : vector<1x128xi32>
    %115 = vector.broadcast %107 : vector<1x128xi32> to vector<18x128xi32>
    %116 = arith.cmpi eq, %58, %115 : vector<18x128xi32>
    %cst_30 = arith.constant 1.000000e+00 : f32
    %117 = vector.broadcast %cst_30 : f32 to vector<1x128xf32>
    %118 = arith.subf %117, %86 : vector<1x128xf32>
    %cst_31 = arith.constant 0.000000e+00 : f32
    %119 = vector.shape_cast %118 : vector<1x128xf32> to vector<1x128xf32>
    %120 = vector.broadcast %119 : vector<1x128xf32> to vector<18x128xf32>
    %121 = vector.broadcast %cst_31 : f32 to vector<18x128xf32>
    %122 = arith.select %116, %120, %121 : vector<18x128xi1>, vector<18x128xf32>
    %123 = vector.broadcast %114 : vector<1x128xi32> to vector<18x128xi32>
    %124 = arith.cmpi eq, %58, %123 : vector<18x128xi32>
    %cst_32 = arith.constant 0.000000e+00 : f32
    %125 = vector.shape_cast %86 : vector<1x128xf32> to vector<1x128xf32>
    %126 = vector.broadcast %125 : vector<1x128xf32> to vector<18x128xf32>
    %127 = vector.broadcast %cst_32 : f32 to vector<18x128xf32>
    %128 = arith.select %124, %126, %127 : vector<18x128xi1>, vector<18x128xf32>
    %129 = arith.addf %122, %128 : vector<18x128xf32>
    %cst_33 = arith.constant dense<0.000000e+00> : vector<72x128xf32>
    %130 = tpu.matmul %3, %129, %cst_33 {dimension_numbers = #tpu.dot_dimension_numbers<[1], [0], [0], [1], [0, 0, 1, 1], [], []>} : vector<72x18xf32>, vector<18x128xf32>, vector<72x128xf32> -> vector<72x128xf32>
    %131 = vector.broadcast %93 : vector<1x128xi32> to vector<18x128xi32>
    %132 = arith.cmpi eq, %57, %131 : vector<18x128xi32>
    %cst_34 = arith.constant 1.000000e+00 : f32
    %133 = vector.broadcast %cst_34 : f32 to vector<1x128xf32>
    %134 = arith.subf %133, %85 : vector<1x128xf32>
    %cst_35 = arith.constant 0.000000e+00 : f32
    %135 = vector.shape_cast %134 : vector<1x128xf32> to vector<1x128xf32>
    %136 = vector.broadcast %135 : vector<1x128xf32> to vector<18x128xf32>
    %137 = vector.broadcast %cst_35 : f32 to vector<18x128xf32>
    %138 = arith.select %132, %136, %137 : vector<18x128xi1>, vector<18x128xf32>
    %139 = vector.broadcast %100 : vector<1x128xi32> to vector<18x128xi32>
    %140 = arith.cmpi eq, %57, %139 : vector<18x128xi32>
    %cst_36 = arith.constant 0.000000e+00 : f32
    %141 = vector.shape_cast %85 : vector<1x128xf32> to vector<1x128xf32>
    %142 = vector.broadcast %141 : vector<1x128xf32> to vector<18x128xf32>
    %143 = vector.broadcast %cst_36 : f32 to vector<18x128xf32>
    %144 = arith.select %140, %142, %143 : vector<18x128xi1>, vector<18x128xf32>
    %145 = arith.addf %138, %144 : vector<18x128xf32>
    %146 = vector.broadcast %82 : vector<1x128xf32> to vector<18x128xf32>
    %147 = arith.mulf %145, %146 : vector<18x128xf32>
    %148 = tpu.concatenate %147, %147, %147, %147 in 0 : vector<18x128xf32>, vector<18x128xf32>, vector<18x128xf32>, vector<18x128xf32> -> vector<72x128xf32>
    %c0_37 = arith.constant 0 : index
    %c0_38 = arith.constant 0 : index
    %c0_39 = arith.constant 0 : index
    %149 = vector.load %arg6[%c0_37, %c0_38, %c0_39] : memref<9x8x72xf32, #tpu.memory_space<vmem>>, vector<1x8x72xf32>
    %150 = vector.shape_cast %149 : vector<1x8x72xf32> to vector<8x72xf32>
    %151 = arith.mulf %130, %148 : vector<72x128xf32>
    %cst_40 = arith.constant dense<0.000000e+00> : vector<8x128xf32>
    %152 = tpu.matmul %150, %151, %cst_40 {dimension_numbers = #tpu.dot_dimension_numbers<[1], [0], [0], [1], [0, 0, 1, 1], [], []>} : vector<8x72xf32>, vector<72x128xf32>, vector<8x128xf32> -> vector<8x128xf32>
    %153 = arith.addf %59, %152 : vector<8x128xf32>
    %154 = vector.extract_strided_slice %50 {offsets = [2, 0], sizes = [1, 128], strides = [1, 1]} : vector<27x128xf32> to vector<1x128xf32>
    %155 = vector.extract_strided_slice %50 {offsets = [3, 0], sizes = [1, 128], strides = [1, 1]} : vector<27x128xf32> to vector<1x128xf32>
    %156 = vector.extract_strided_slice %56 {offsets = [1, 0], sizes = [1, 128], strides = [1, 1]} : vector<9x128xf32> to vector<1x128xf32>
    %cst_41 = arith.constant -1.000000e+00 : f32
    %157 = vector.broadcast %cst_41 : f32 to vector<1x128xf32>
    %158 = arith.addf %15, %157 : vector<1x128xf32>
    %159 = arith.addf %158, %154 : vector<1x128xf32>
    %cst_42 = arith.constant 0.000000e+00 : f32
    %160 = vector.broadcast %cst_42 : f32 to vector<1x128xf32>
    %161 = arith.addf %11, %160 : vector<1x128xf32>
    %162 = arith.addf %161, %155 : vector<1x128xf32>
    %cst_43 = arith.constant -1.000000e+00 : f32
    %163 = vector.broadcast %cst_43 : f32 to vector<1x128xf32>
    %164 = arith.cmpf ogt, %159, %163 : vector<1x128xf32>
    %cst_44 = arith.constant -1.000000e+00 : f32
    %165 = vector.broadcast %cst_44 : f32 to vector<1x128xf32>
    %166 = arith.cmpf ogt, %162, %165 : vector<1x128xf32>
    %167 = arith.andi %164, %166 : vector<1x128xi1>
    %cst_45 = arith.constant 1.600000e+01 : f32
    %168 = vector.broadcast %cst_45 : f32 to vector<1x128xf32>
    %169 = arith.cmpf olt, %159, %168 : vector<1x128xf32>
    %170 = arith.andi %167, %169 : vector<1x128xi1>
    %cst_46 = arith.constant 1.600000e+01 : f32
    %171 = vector.broadcast %cst_46 : f32 to vector<1x128xf32>
    %172 = arith.cmpf olt, %162, %171 : vector<1x128xf32>
    %173 = arith.andi %170, %172 : vector<1x128xi1>
    %174 = arith.extui %173 : vector<1x128xi1> to vector<1x128xi32>
    %175 = arith.sitofp %174 : vector<1x128xi32> to vector<1x128xf32>
    %176 = arith.mulf %175, %156 : vector<1x128xf32>
    %177 = math.floor %159 : vector<1x128xf32>
    %178 = math.floor %162 : vector<1x128xf32>
    %179 = arith.subf %159, %177 : vector<1x128xf32>
    %180 = arith.subf %162, %178 : vector<1x128xf32>
    %181 = arith.fptosi %177 : vector<1x128xf32> to vector<1x128xi32>
    %c1_i32_47 = arith.constant 1 : i32
    %182 = vector.broadcast %c1_i32_47 : i32 to vector<1x128xi32>
    %183 = arith.addi %181, %182 : vector<1x128xi32>
    %c0_i32_48 = arith.constant 0 : i32
    %c17_i32_49 = arith.constant 17 : i32
    %184 = vector.broadcast %c0_i32_48 : i32 to vector<1x128xi32>
    %185 = arith.maxsi %184, %183 : vector<1x128xi32>
    %186 = vector.broadcast %c17_i32_49 : i32 to vector<1x128xi32>
    %187 = arith.minsi %186, %185 : vector<1x128xi32>
    %188 = arith.fptosi %177 : vector<1x128xf32> to vector<1x128xi32>
    %c2_i32_50 = arith.constant 2 : i32
    %189 = vector.broadcast %c2_i32_50 : i32 to vector<1x128xi32>
    %190 = arith.addi %188, %189 : vector<1x128xi32>
    %c0_i32_51 = arith.constant 0 : i32
    %c17_i32_52 = arith.constant 17 : i32
    %191 = vector.broadcast %c0_i32_51 : i32 to vector<1x128xi32>
    %192 = arith.maxsi %191, %190 : vector<1x128xi32>
    %193 = vector.broadcast %c17_i32_52 : i32 to vector<1x128xi32>
    %194 = arith.minsi %193, %192 : vector<1x128xi32>
    %195 = arith.fptosi %178 : vector<1x128xf32> to vector<1x128xi32>
    %c1_i32_53 = arith.constant 1 : i32
    %196 = vector.broadcast %c1_i32_53 : i32 to vector<1x128xi32>
    %197 = arith.addi %195, %196 : vector<1x128xi32>
    %c0_i32_54 = arith.constant 0 : i32
    %c17_i32_55 = arith.constant 17 : i32
    %198 = vector.broadcast %c0_i32_54 : i32 to vector<1x128xi32>
    %199 = arith.maxsi %198, %197 : vector<1x128xi32>
    %200 = vector.broadcast %c17_i32_55 : i32 to vector<1x128xi32>
    %201 = arith.minsi %200, %199 : vector<1x128xi32>
    %202 = arith.fptosi %178 : vector<1x128xf32> to vector<1x128xi32>
    %c2_i32_56 = arith.constant 2 : i32
    %203 = vector.broadcast %c2_i32_56 : i32 to vector<1x128xi32>
    %204 = arith.addi %202, %203 : vector<1x128xi32>
    %c0_i32_57 = arith.constant 0 : i32
    %c17_i32_58 = arith.constant 17 : i32
    %205 = vector.broadcast %c0_i32_57 : i32 to vector<1x128xi32>
    %206 = arith.maxsi %205, %204 : vector<1x128xi32>
    %207 = vector.broadcast %c17_i32_58 : i32 to vector<1x128xi32>
    %208 = arith.minsi %207, %206 : vector<1x128xi32>
    %209 = vector.broadcast %201 : vector<1x128xi32> to vector<18x128xi32>
    %210 = arith.cmpi eq, %58, %209 : vector<18x128xi32>
    %cst_59 = arith.constant 1.000000e+00 : f32
    %211 = vector.broadcast %cst_59 : f32 to vector<1x128xf32>
    %212 = arith.subf %211, %180 : vector<1x128xf32>
    %cst_60 = arith.constant 0.000000e+00 : f32
    %213 = vector.shape_cast %212 : vector<1x128xf32> to vector<1x128xf32>
    %214 = vector.broadcast %213 : vector<1x128xf32> to vector<18x128xf32>
    %215 = vector.broadcast %cst_60 : f32 to vector<18x128xf32>
    %216 = arith.select %210, %214, %215 : vector<18x128xi1>, vector<18x128xf32>
    %217 = vector.broadcast %208 : vector<1x128xi32> to vector<18x128xi32>
    %218 = arith.cmpi eq, %58, %217 : vector<18x128xi32>
    %cst_61 = arith.constant 0.000000e+00 : f32
    %219 = vector.shape_cast %180 : vector<1x128xf32> to vector<1x128xf32>
    %220 = vector.broadcast %219 : vector<1x128xf32> to vector<18x128xf32>
    %221 = vector.broadcast %cst_61 : f32 to vector<18x128xf32>
    %222 = arith.select %218, %220, %221 : vector<18x128xi1>, vector<18x128xf32>
    %223 = arith.addf %216, %222 : vector<18x128xf32>
    %cst_62 = arith.constant dense<0.000000e+00> : vector<72x128xf32>
    %224 = tpu.matmul %3, %223, %cst_62 {dimension_numbers = #tpu.dot_dimension_numbers<[1], [0], [0], [1], [0, 0, 1, 1], [], []>} : vector<72x18xf32>, vector<18x128xf32>, vector<72x128xf32> -> vector<72x128xf32>
    %225 = vector.broadcast %187 : vector<1x128xi32> to vector<18x128xi32>
    %226 = arith.cmpi eq, %57, %225 : vector<18x128xi32>
    %cst_63 = arith.constant 1.000000e+00 : f32
    %227 = vector.broadcast %cst_63 : f32 to vector<1x128xf32>
    %228 = arith.subf %227, %179 : vector<1x128xf32>
    %cst_64 = arith.constant 0.000000e+00 : f32
    %229 = vector.shape_cast %228 : vector<1x128xf32> to vector<1x128xf32>
    %230 = vector.broadcast %229 : vector<1x128xf32> to vector<18x128xf32>
    %231 = vector.broadcast %cst_64 : f32 to vector<18x128xf32>
    %232 = arith.select %226, %230, %231 : vector<18x128xi1>, vector<18x128xf32>
    %233 = vector.broadcast %194 : vector<1x128xi32> to vector<18x128xi32>
    %234 = arith.cmpi eq, %57, %233 : vector<18x128xi32>
    %cst_65 = arith.constant 0.000000e+00 : f32
    %235 = vector.shape_cast %179 : vector<1x128xf32> to vector<1x128xf32>
    %236 = vector.broadcast %235 : vector<1x128xf32> to vector<18x128xf32>
    %237 = vector.broadcast %cst_65 : f32 to vector<18x128xf32>
    %238 = arith.select %234, %236, %237 : vector<18x128xi1>, vector<18x128xf32>
    %239 = arith.addf %232, %238 : vector<18x128xf32>
    %240 = vector.broadcast %176 : vector<1x128xf32> to vector<18x128xf32>
    %241 = arith.mulf %239, %240 : vector<18x128xf32>
    %242 = tpu.concatenate %241, %241, %241, %241 in 0 : vector<18x128xf32>, vector<18x128xf32>, vector<18x128xf32>, vector<18x128xf32> -> vector<72x128xf32>
    %c1 = arith.constant 1 : index
    %c0_66 = arith.constant 0 : index
    %c0_67 = arith.constant 0 : index
    %243 = vector.load %arg6[%c1, %c0_66, %c0_67] : memref<9x8x72xf32, #tpu.memory_space<vmem>>, vector<1x8x72xf32>
    %244 = vector.shape_cast %243 : vector<1x8x72xf32> to vector<8x72xf32>
    %245 = arith.mulf %224, %242 : vector<72x128xf32>
    %cst_68 = arith.constant dense<0.000000e+00> : vector<8x128xf32>
    %246 = tpu.matmul %244, %245, %cst_68 {dimension_numbers = #tpu.dot_dimension_numbers<[1], [0], [0], [1], [0, 0, 1, 1], [], []>} : vector<8x72xf32>, vector<72x128xf32>, vector<8x128xf32> -> vector<8x128xf32>
    %247 = arith.addf %153, %246 : vector<8x128xf32>
    %248 = vector.extract_strided_slice %50 {offsets = [4, 0], sizes = [1, 128], strides = [1, 1]} : vector<27x128xf32> to vector<1x128xf32>
    %249 = vector.extract_strided_slice %50 {offsets = [5, 0], sizes = [1, 128], strides = [1, 1]} : vector<27x128xf32> to vector<1x128xf32>
    %250 = vector.extract_strided_slice %56 {offsets = [2, 0], sizes = [1, 128], strides = [1, 1]} : vector<9x128xf32> to vector<1x128xf32>
    %cst_69 = arith.constant -1.000000e+00 : f32
    %251 = vector.broadcast %cst_69 : f32 to vector<1x128xf32>
    %252 = arith.addf %15, %251 : vector<1x128xf32>
    %253 = arith.addf %252, %248 : vector<1x128xf32>
    %cst_70 = arith.constant 1.000000e+00 : f32
    %254 = vector.broadcast %cst_70 : f32 to vector<1x128xf32>
    %255 = arith.addf %11, %254 : vector<1x128xf32>
    %256 = arith.addf %255, %249 : vector<1x128xf32>
    %cst_71 = arith.constant -1.000000e+00 : f32
    %257 = vector.broadcast %cst_71 : f32 to vector<1x128xf32>
    %258 = arith.cmpf ogt, %253, %257 : vector<1x128xf32>
    %cst_72 = arith.constant -1.000000e+00 : f32
    %259 = vector.broadcast %cst_72 : f32 to vector<1x128xf32>
    %260 = arith.cmpf ogt, %256, %259 : vector<1x128xf32>
    %261 = arith.andi %258, %260 : vector<1x128xi1>
    %cst_73 = arith.constant 1.600000e+01 : f32
    %262 = vector.broadcast %cst_73 : f32 to vector<1x128xf32>
    %263 = arith.cmpf olt, %253, %262 : vector<1x128xf32>
    %264 = arith.andi %261, %263 : vector<1x128xi1>
    %cst_74 = arith.constant 1.600000e+01 : f32
    %265 = vector.broadcast %cst_74 : f32 to vector<1x128xf32>
    %266 = arith.cmpf olt, %256, %265 : vector<1x128xf32>
    %267 = arith.andi %264, %266 : vector<1x128xi1>
    %268 = arith.extui %267 : vector<1x128xi1> to vector<1x128xi32>
    %269 = arith.sitofp %268 : vector<1x128xi32> to vector<1x128xf32>
    %270 = arith.mulf %269, %250 : vector<1x128xf32>
    %271 = math.floor %253 : vector<1x128xf32>
    %272 = math.floor %256 : vector<1x128xf32>
    %273 = arith.subf %253, %271 : vector<1x128xf32>
    %274 = arith.subf %256, %272 : vector<1x128xf32>
    %275 = arith.fptosi %271 : vector<1x128xf32> to vector<1x128xi32>
    %c1_i32_75 = arith.constant 1 : i32
    %276 = vector.broadcast %c1_i32_75 : i32 to vector<1x128xi32>
    %277 = arith.addi %275, %276 : vector<1x128xi32>
    %c0_i32_76 = arith.constant 0 : i32
    %c17_i32_77 = arith.constant 17 : i32
    %278 = vector.broadcast %c0_i32_76 : i32 to vector<1x128xi32>
    %279 = arith.maxsi %278, %277 : vector<1x128xi32>
    %280 = vector.broadcast %c17_i32_77 : i32 to vector<1x128xi32>
    %281 = arith.minsi %280, %279 : vector<1x128xi32>
    %282 = arith.fptosi %271 : vector<1x128xf32> to vector<1x128xi32>
    %c2_i32_78 = arith.constant 2 : i32
    %283 = vector.broadcast %c2_i32_78 : i32 to vector<1x128xi32>
    %284 = arith.addi %282, %283 : vector<1x128xi32>
    %c0_i32_79 = arith.constant 0 : i32
    %c17_i32_80 = arith.constant 17 : i32
    %285 = vector.broadcast %c0_i32_79 : i32 to vector<1x128xi32>
    %286 = arith.maxsi %285, %284 : vector<1x128xi32>
    %287 = vector.broadcast %c17_i32_80 : i32 to vector<1x128xi32>
    %288 = arith.minsi %287, %286 : vector<1x128xi32>
    %289 = arith.fptosi %272 : vector<1x128xf32> to vector<1x128xi32>
    %c1_i32_81 = arith.constant 1 : i32
    %290 = vector.broadcast %c1_i32_81 : i32 to vector<1x128xi32>
    %291 = arith.addi %289, %290 : vector<1x128xi32>
    %c0_i32_82 = arith.constant 0 : i32
    %c17_i32_83 = arith.constant 17 : i32
    %292 = vector.broadcast %c0_i32_82 : i32 to vector<1x128xi32>
    %293 = arith.maxsi %292, %291 : vector<1x128xi32>
    %294 = vector.broadcast %c17_i32_83 : i32 to vector<1x128xi32>
    %295 = arith.minsi %294, %293 : vector<1x128xi32>
    %296 = arith.fptosi %272 : vector<1x128xf32> to vector<1x128xi32>
    %c2_i32_84 = arith.constant 2 : i32
    %297 = vector.broadcast %c2_i32_84 : i32 to vector<1x128xi32>
    %298 = arith.addi %296, %297 : vector<1x128xi32>
    %c0_i32_85 = arith.constant 0 : i32
    %c17_i32_86 = arith.constant 17 : i32
    %299 = vector.broadcast %c0_i32_85 : i32 to vector<1x128xi32>
    %300 = arith.maxsi %299, %298 : vector<1x128xi32>
    %301 = vector.broadcast %c17_i32_86 : i32 to vector<1x128xi32>
    %302 = arith.minsi %301, %300 : vector<1x128xi32>
    %303 = vector.broadcast %295 : vector<1x128xi32> to vector<18x128xi32>
    %304 = arith.cmpi eq, %58, %303 : vector<18x128xi32>
    %cst_87 = arith.constant 1.000000e+00 : f32
    %305 = vector.broadcast %cst_87 : f32 to vector<1x128xf32>
    %306 = arith.subf %305, %274 : vector<1x128xf32>
    %cst_88 = arith.constant 0.000000e+00 : f32
    %307 = vector.shape_cast %306 : vector<1x128xf32> to vector<1x128xf32>
    %308 = vector.broadcast %307 : vector<1x128xf32> to vector<18x128xf32>
    %309 = vector.broadcast %cst_88 : f32 to vector<18x128xf32>
    %310 = arith.select %304, %308, %309 : vector<18x128xi1>, vector<18x128xf32>
    %311 = vector.broadcast %302 : vector<1x128xi32> to vector<18x128xi32>
    %312 = arith.cmpi eq, %58, %311 : vector<18x128xi32>
    %cst_89 = arith.constant 0.000000e+00 : f32
    %313 = vector.shape_cast %274 : vector<1x128xf32> to vector<1x128xf32>
    %314 = vector.broadcast %313 : vector<1x128xf32> to vector<18x128xf32>
    %315 = vector.broadcast %cst_89 : f32 to vector<18x128xf32>
    %316 = arith.select %312, %314, %315 : vector<18x128xi1>, vector<18x128xf32>
    %317 = arith.addf %310, %316 : vector<18x128xf32>
    %cst_90 = arith.constant dense<0.000000e+00> : vector<72x128xf32>
    %318 = tpu.matmul %3, %317, %cst_90 {dimension_numbers = #tpu.dot_dimension_numbers<[1], [0], [0], [1], [0, 0, 1, 1], [], []>} : vector<72x18xf32>, vector<18x128xf32>, vector<72x128xf32> -> vector<72x128xf32>
    %319 = vector.broadcast %281 : vector<1x128xi32> to vector<18x128xi32>
    %320 = arith.cmpi eq, %57, %319 : vector<18x128xi32>
    %cst_91 = arith.constant 1.000000e+00 : f32
    %321 = vector.broadcast %cst_91 : f32 to vector<1x128xf32>
    %322 = arith.subf %321, %273 : vector<1x128xf32>
    %cst_92 = arith.constant 0.000000e+00 : f32
    %323 = vector.shape_cast %322 : vector<1x128xf32> to vector<1x128xf32>
    %324 = vector.broadcast %323 : vector<1x128xf32> to vector<18x128xf32>
    %325 = vector.broadcast %cst_92 : f32 to vector<18x128xf32>
    %326 = arith.select %320, %324, %325 : vector<18x128xi1>, vector<18x128xf32>
    %327 = vector.broadcast %288 : vector<1x128xi32> to vector<18x128xi32>
    %328 = arith.cmpi eq, %57, %327 : vector<18x128xi32>
    %cst_93 = arith.constant 0.000000e+00 : f32
    %329 = vector.shape_cast %273 : vector<1x128xf32> to vector<1x128xf32>
    %330 = vector.broadcast %329 : vector<1x128xf32> to vector<18x128xf32>
    %331 = vector.broadcast %cst_93 : f32 to vector<18x128xf32>
    %332 = arith.select %328, %330, %331 : vector<18x128xi1>, vector<18x128xf32>
    %333 = arith.addf %326, %332 : vector<18x128xf32>
    %334 = vector.broadcast %270 : vector<1x128xf32> to vector<18x128xf32>
    %335 = arith.mulf %333, %334 : vector<18x128xf32>
    %336 = tpu.concatenate %335, %335, %335, %335 in 0 : vector<18x128xf32>, vector<18x128xf32>, vector<18x128xf32>, vector<18x128xf32> -> vector<72x128xf32>
    %c2 = arith.constant 2 : index
    %c0_94 = arith.constant 0 : index
    %c0_95 = arith.constant 0 : index
    %337 = vector.load %arg6[%c2, %c0_94, %c0_95] : memref<9x8x72xf32, #tpu.memory_space<vmem>>, vector<1x8x72xf32>
    %338 = vector.shape_cast %337 : vector<1x8x72xf32> to vector<8x72xf32>
    %339 = arith.mulf %318, %336 : vector<72x128xf32>
    %cst_96 = arith.constant dense<0.000000e+00> : vector<8x128xf32>
    %340 = tpu.matmul %338, %339, %cst_96 {dimension_numbers = #tpu.dot_dimension_numbers<[1], [0], [0], [1], [0, 0, 1, 1], [], []>} : vector<8x72xf32>, vector<72x128xf32>, vector<8x128xf32> -> vector<8x128xf32>
    %341 = arith.addf %247, %340 : vector<8x128xf32>
    %342 = vector.extract_strided_slice %50 {offsets = [6, 0], sizes = [1, 128], strides = [1, 1]} : vector<27x128xf32> to vector<1x128xf32>
    %343 = vector.extract_strided_slice %50 {offsets = [7, 0], sizes = [1, 128], strides = [1, 1]} : vector<27x128xf32> to vector<1x128xf32>
    %344 = vector.extract_strided_slice %56 {offsets = [3, 0], sizes = [1, 128], strides = [1, 1]} : vector<9x128xf32> to vector<1x128xf32>
    %cst_97 = arith.constant 0.000000e+00 : f32
    %345 = vector.broadcast %cst_97 : f32 to vector<1x128xf32>
    %346 = arith.addf %15, %345 : vector<1x128xf32>
    %347 = arith.addf %346, %342 : vector<1x128xf32>
    %cst_98 = arith.constant -1.000000e+00 : f32
    %348 = vector.broadcast %cst_98 : f32 to vector<1x128xf32>
    %349 = arith.addf %11, %348 : vector<1x128xf32>
    %350 = arith.addf %349, %343 : vector<1x128xf32>
    %cst_99 = arith.constant -1.000000e+00 : f32
    %351 = vector.broadcast %cst_99 : f32 to vector<1x128xf32>
    %352 = arith.cmpf ogt, %347, %351 : vector<1x128xf32>
    %cst_100 = arith.constant -1.000000e+00 : f32
    %353 = vector.broadcast %cst_100 : f32 to vector<1x128xf32>
    %354 = arith.cmpf ogt, %350, %353 : vector<1x128xf32>
    %355 = arith.andi %352, %354 : vector<1x128xi1>
    %cst_101 = arith.constant 1.600000e+01 : f32
    %356 = vector.broadcast %cst_101 : f32 to vector<1x128xf32>
    %357 = arith.cmpf olt, %347, %356 : vector<1x128xf32>
    %358 = arith.andi %355, %357 : vector<1x128xi1>
    %cst_102 = arith.constant 1.600000e+01 : f32
    %359 = vector.broadcast %cst_102 : f32 to vector<1x128xf32>
    %360 = arith.cmpf olt, %350, %359 : vector<1x128xf32>
    %361 = arith.andi %358, %360 : vector<1x128xi1>
    %362 = arith.extui %361 : vector<1x128xi1> to vector<1x128xi32>
    %363 = arith.sitofp %362 : vector<1x128xi32> to vector<1x128xf32>
    %364 = arith.mulf %363, %344 : vector<1x128xf32>
    %365 = math.floor %347 : vector<1x128xf32>
    %366 = math.floor %350 : vector<1x128xf32>
    %367 = arith.subf %347, %365 : vector<1x128xf32>
    %368 = arith.subf %350, %366 : vector<1x128xf32>
    %369 = arith.fptosi %365 : vector<1x128xf32> to vector<1x128xi32>
    %c1_i32_103 = arith.constant 1 : i32
    %370 = vector.broadcast %c1_i32_103 : i32 to vector<1x128xi32>
    %371 = arith.addi %369, %370 : vector<1x128xi32>
    %c0_i32_104 = arith.constant 0 : i32
    %c17_i32_105 = arith.constant 17 : i32
    %372 = vector.broadcast %c0_i32_104 : i32 to vector<1x128xi32>
    %373 = arith.maxsi %372, %371 : vector<1x128xi32>
    %374 = vector.broadcast %c17_i32_105 : i32 to vector<1x128xi32>
    %375 = arith.minsi %374, %373 : vector<1x128xi32>
    %376 = arith.fptosi %365 : vector<1x128xf32> to vector<1x128xi32>
    %c2_i32_106 = arith.constant 2 : i32
    %377 = vector.broadcast %c2_i32_106 : i32 to vector<1x128xi32>
    %378 = arith.addi %376, %377 : vector<1x128xi32>
    %c0_i32_107 = arith.constant 0 : i32
    %c17_i32_108 = arith.constant 17 : i32
    %379 = vector.broadcast %c0_i32_107 : i32 to vector<1x128xi32>
    %380 = arith.maxsi %379, %378 : vector<1x128xi32>
    %381 = vector.broadcast %c17_i32_108 : i32 to vector<1x128xi32>
    %382 = arith.minsi %381, %380 : vector<1x128xi32>
    %383 = arith.fptosi %366 : vector<1x128xf32> to vector<1x128xi32>
    %c1_i32_109 = arith.constant 1 : i32
    %384 = vector.broadcast %c1_i32_109 : i32 to vector<1x128xi32>
    %385 = arith.addi %383, %384 : vector<1x128xi32>
    %c0_i32_110 = arith.constant 0 : i32
    %c17_i32_111 = arith.constant 17 : i32
    %386 = vector.broadcast %c0_i32_110 : i32 to vector<1x128xi32>
    %387 = arith.maxsi %386, %385 : vector<1x128xi32>
    %388 = vector.broadcast %c17_i32_111 : i32 to vector<1x128xi32>
    %389 = arith.minsi %388, %387 : vector<1x128xi32>
    %390 = arith.fptosi %366 : vector<1x128xf32> to vector<1x128xi32>
    %c2_i32_112 = arith.constant 2 : i32
    %391 = vector.broadcast %c2_i32_112 : i32 to vector<1x128xi32>
    %392 = arith.addi %390, %391 : vector<1x128xi32>
    %c0_i32_113 = arith.constant 0 : i32
    %c17_i32_114 = arith.constant 17 : i32
    %393 = vector.broadcast %c0_i32_113 : i32 to vector<1x128xi32>
    %394 = arith.maxsi %393, %392 : vector<1x128xi32>
    %395 = vector.broadcast %c17_i32_114 : i32 to vector<1x128xi32>
    %396 = arith.minsi %395, %394 : vector<1x128xi32>
    %397 = vector.broadcast %389 : vector<1x128xi32> to vector<18x128xi32>
    %398 = arith.cmpi eq, %58, %397 : vector<18x128xi32>
    %cst_115 = arith.constant 1.000000e+00 : f32
    %399 = vector.broadcast %cst_115 : f32 to vector<1x128xf32>
    %400 = arith.subf %399, %368 : vector<1x128xf32>
    %cst_116 = arith.constant 0.000000e+00 : f32
    %401 = vector.shape_cast %400 : vector<1x128xf32> to vector<1x128xf32>
    %402 = vector.broadcast %401 : vector<1x128xf32> to vector<18x128xf32>
    %403 = vector.broadcast %cst_116 : f32 to vector<18x128xf32>
    %404 = arith.select %398, %402, %403 : vector<18x128xi1>, vector<18x128xf32>
    %405 = vector.broadcast %396 : vector<1x128xi32> to vector<18x128xi32>
    %406 = arith.cmpi eq, %58, %405 : vector<18x128xi32>
    %cst_117 = arith.constant 0.000000e+00 : f32
    %407 = vector.shape_cast %368 : vector<1x128xf32> to vector<1x128xf32>
    %408 = vector.broadcast %407 : vector<1x128xf32> to vector<18x128xf32>
    %409 = vector.broadcast %cst_117 : f32 to vector<18x128xf32>
    %410 = arith.select %406, %408, %409 : vector<18x128xi1>, vector<18x128xf32>
    %411 = arith.addf %404, %410 : vector<18x128xf32>
    %cst_118 = arith.constant dense<0.000000e+00> : vector<72x128xf32>
    %412 = tpu.matmul %3, %411, %cst_118 {dimension_numbers = #tpu.dot_dimension_numbers<[1], [0], [0], [1], [0, 0, 1, 1], [], []>} : vector<72x18xf32>, vector<18x128xf32>, vector<72x128xf32> -> vector<72x128xf32>
    %413 = vector.broadcast %375 : vector<1x128xi32> to vector<18x128xi32>
    %414 = arith.cmpi eq, %57, %413 : vector<18x128xi32>
    %cst_119 = arith.constant 1.000000e+00 : f32
    %415 = vector.broadcast %cst_119 : f32 to vector<1x128xf32>
    %416 = arith.subf %415, %367 : vector<1x128xf32>
    %cst_120 = arith.constant 0.000000e+00 : f32
    %417 = vector.shape_cast %416 : vector<1x128xf32> to vector<1x128xf32>
    %418 = vector.broadcast %417 : vector<1x128xf32> to vector<18x128xf32>
    %419 = vector.broadcast %cst_120 : f32 to vector<18x128xf32>
    %420 = arith.select %414, %418, %419 : vector<18x128xi1>, vector<18x128xf32>
    %421 = vector.broadcast %382 : vector<1x128xi32> to vector<18x128xi32>
    %422 = arith.cmpi eq, %57, %421 : vector<18x128xi32>
    %cst_121 = arith.constant 0.000000e+00 : f32
    %423 = vector.shape_cast %367 : vector<1x128xf32> to vector<1x128xf32>
    %424 = vector.broadcast %423 : vector<1x128xf32> to vector<18x128xf32>
    %425 = vector.broadcast %cst_121 : f32 to vector<18x128xf32>
    %426 = arith.select %422, %424, %425 : vector<18x128xi1>, vector<18x128xf32>
    %427 = arith.addf %420, %426 : vector<18x128xf32>
    %428 = vector.broadcast %364 : vector<1x128xf32> to vector<18x128xf32>
    %429 = arith.mulf %427, %428 : vector<18x128xf32>
    %430 = tpu.concatenate %429, %429, %429, %429 in 0 : vector<18x128xf32>, vector<18x128xf32>, vector<18x128xf32>, vector<18x128xf32> -> vector<72x128xf32>
    %c3 = arith.constant 3 : index
    %c0_122 = arith.constant 0 : index
    %c0_123 = arith.constant 0 : index
    %431 = vector.load %arg6[%c3, %c0_122, %c0_123] : memref<9x8x72xf32, #tpu.memory_space<vmem>>, vector<1x8x72xf32>
    %432 = vector.shape_cast %431 : vector<1x8x72xf32> to vector<8x72xf32>
    %433 = arith.mulf %412, %430 : vector<72x128xf32>
    %cst_124 = arith.constant dense<0.000000e+00> : vector<8x128xf32>
    %434 = tpu.matmul %432, %433, %cst_124 {dimension_numbers = #tpu.dot_dimension_numbers<[1], [0], [0], [1], [0, 0, 1, 1], [], []>} : vector<8x72xf32>, vector<72x128xf32>, vector<8x128xf32> -> vector<8x128xf32>
    %435 = arith.addf %341, %434 : vector<8x128xf32>
    %436 = vector.extract_strided_slice %50 {offsets = [8, 0], sizes = [1, 128], strides = [1, 1]} : vector<27x128xf32> to vector<1x128xf32>
    %437 = vector.extract_strided_slice %50 {offsets = [9, 0], sizes = [1, 128], strides = [1, 1]} : vector<27x128xf32> to vector<1x128xf32>
    %438 = vector.extract_strided_slice %56 {offsets = [4, 0], sizes = [1, 128], strides = [1, 1]} : vector<9x128xf32> to vector<1x128xf32>
    %cst_125 = arith.constant 0.000000e+00 : f32
    %439 = vector.broadcast %cst_125 : f32 to vector<1x128xf32>
    %440 = arith.addf %15, %439 : vector<1x128xf32>
    %441 = arith.addf %440, %436 : vector<1x128xf32>
    %cst_126 = arith.constant 0.000000e+00 : f32
    %442 = vector.broadcast %cst_126 : f32 to vector<1x128xf32>
    %443 = arith.addf %11, %442 : vector<1x128xf32>
    %444 = arith.addf %443, %437 : vector<1x128xf32>
    %cst_127 = arith.constant -1.000000e+00 : f32
    %445 = vector.broadcast %cst_127 : f32 to vector<1x128xf32>
    %446 = arith.cmpf ogt, %441, %445 : vector<1x128xf32>
    %cst_128 = arith.constant -1.000000e+00 : f32
    %447 = vector.broadcast %cst_128 : f32 to vector<1x128xf32>
    %448 = arith.cmpf ogt, %444, %447 : vector<1x128xf32>
    %449 = arith.andi %446, %448 : vector<1x128xi1>
    %cst_129 = arith.constant 1.600000e+01 : f32
    %450 = vector.broadcast %cst_129 : f32 to vector<1x128xf32>
    %451 = arith.cmpf olt, %441, %450 : vector<1x128xf32>
    %452 = arith.andi %449, %451 : vector<1x128xi1>
    %cst_130 = arith.constant 1.600000e+01 : f32
    %453 = vector.broadcast %cst_130 : f32 to vector<1x128xf32>
    %454 = arith.cmpf olt, %444, %453 : vector<1x128xf32>
    %455 = arith.andi %452, %454 : vector<1x128xi1>
    %456 = arith.extui %455 : vector<1x128xi1> to vector<1x128xi32>
    %457 = arith.sitofp %456 : vector<1x128xi32> to vector<1x128xf32>
    %458 = arith.mulf %457, %438 : vector<1x128xf32>
    %459 = math.floor %441 : vector<1x128xf32>
    %460 = math.floor %444 : vector<1x128xf32>
    %461 = arith.subf %441, %459 : vector<1x128xf32>
    %462 = arith.subf %444, %460 : vector<1x128xf32>
    %463 = arith.fptosi %459 : vector<1x128xf32> to vector<1x128xi32>
    %c1_i32_131 = arith.constant 1 : i32
    %464 = vector.broadcast %c1_i32_131 : i32 to vector<1x128xi32>
    %465 = arith.addi %463, %464 : vector<1x128xi32>
    %c0_i32_132 = arith.constant 0 : i32
    %c17_i32_133 = arith.constant 17 : i32
    %466 = vector.broadcast %c0_i32_132 : i32 to vector<1x128xi32>
    %467 = arith.maxsi %466, %465 : vector<1x128xi32>
    %468 = vector.broadcast %c17_i32_133 : i32 to vector<1x128xi32>
    %469 = arith.minsi %468, %467 : vector<1x128xi32>
    %470 = arith.fptosi %459 : vector<1x128xf32> to vector<1x128xi32>
    %c2_i32_134 = arith.constant 2 : i32
    %471 = vector.broadcast %c2_i32_134 : i32 to vector<1x128xi32>
    %472 = arith.addi %470, %471 : vector<1x128xi32>
    %c0_i32_135 = arith.constant 0 : i32
    %c17_i32_136 = arith.constant 17 : i32
    %473 = vector.broadcast %c0_i32_135 : i32 to vector<1x128xi32>
    %474 = arith.maxsi %473, %472 : vector<1x128xi32>
    %475 = vector.broadcast %c17_i32_136 : i32 to vector<1x128xi32>
    %476 = arith.minsi %475, %474 : vector<1x128xi32>
    %477 = arith.fptosi %460 : vector<1x128xf32> to vector<1x128xi32>
    %c1_i32_137 = arith.constant 1 : i32
    %478 = vector.broadcast %c1_i32_137 : i32 to vector<1x128xi32>
    %479 = arith.addi %477, %478 : vector<1x128xi32>
    %c0_i32_138 = arith.constant 0 : i32
    %c17_i32_139 = arith.constant 17 : i32
    %480 = vector.broadcast %c0_i32_138 : i32 to vector<1x128xi32>
    %481 = arith.maxsi %480, %479 : vector<1x128xi32>
    %482 = vector.broadcast %c17_i32_139 : i32 to vector<1x128xi32>
    %483 = arith.minsi %482, %481 : vector<1x128xi32>
    %484 = arith.fptosi %460 : vector<1x128xf32> to vector<1x128xi32>
    %c2_i32_140 = arith.constant 2 : i32
    %485 = vector.broadcast %c2_i32_140 : i32 to vector<1x128xi32>
    %486 = arith.addi %484, %485 : vector<1x128xi32>
    %c0_i32_141 = arith.constant 0 : i32
    %c17_i32_142 = arith.constant 17 : i32
    %487 = vector.broadcast %c0_i32_141 : i32 to vector<1x128xi32>
    %488 = arith.maxsi %487, %486 : vector<1x128xi32>
    %489 = vector.broadcast %c17_i32_142 : i32 to vector<1x128xi32>
    %490 = arith.minsi %489, %488 : vector<1x128xi32>
    %491 = vector.broadcast %483 : vector<1x128xi32> to vector<18x128xi32>
    %492 = arith.cmpi eq, %58, %491 : vector<18x128xi32>
    %cst_143 = arith.constant 1.000000e+00 : f32
    %493 = vector.broadcast %cst_143 : f32 to vector<1x128xf32>
    %494 = arith.subf %493, %462 : vector<1x128xf32>
    %cst_144 = arith.constant 0.000000e+00 : f32
    %495 = vector.shape_cast %494 : vector<1x128xf32> to vector<1x128xf32>
    %496 = vector.broadcast %495 : vector<1x128xf32> to vector<18x128xf32>
    %497 = vector.broadcast %cst_144 : f32 to vector<18x128xf32>
    %498 = arith.select %492, %496, %497 : vector<18x128xi1>, vector<18x128xf32>
    %499 = vector.broadcast %490 : vector<1x128xi32> to vector<18x128xi32>
    %500 = arith.cmpi eq, %58, %499 : vector<18x128xi32>
    %cst_145 = arith.constant 0.000000e+00 : f32
    %501 = vector.shape_cast %462 : vector<1x128xf32> to vector<1x128xf32>
    %502 = vector.broadcast %501 : vector<1x128xf32> to vector<18x128xf32>
    %503 = vector.broadcast %cst_145 : f32 to vector<18x128xf32>
    %504 = arith.select %500, %502, %503 : vector<18x128xi1>, vector<18x128xf32>
    %505 = arith.addf %498, %504 : vector<18x128xf32>
    %cst_146 = arith.constant dense<0.000000e+00> : vector<72x128xf32>
    %506 = tpu.matmul %3, %505, %cst_146 {dimension_numbers = #tpu.dot_dimension_numbers<[1], [0], [0], [1], [0, 0, 1, 1], [], []>} : vector<72x18xf32>, vector<18x128xf32>, vector<72x128xf32> -> vector<72x128xf32>
    %507 = vector.broadcast %469 : vector<1x128xi32> to vector<18x128xi32>
    %508 = arith.cmpi eq, %57, %507 : vector<18x128xi32>
    %cst_147 = arith.constant 1.000000e+00 : f32
    %509 = vector.broadcast %cst_147 : f32 to vector<1x128xf32>
    %510 = arith.subf %509, %461 : vector<1x128xf32>
    %cst_148 = arith.constant 0.000000e+00 : f32
    %511 = vector.shape_cast %510 : vector<1x128xf32> to vector<1x128xf32>
    %512 = vector.broadcast %511 : vector<1x128xf32> to vector<18x128xf32>
    %513 = vector.broadcast %cst_148 : f32 to vector<18x128xf32>
    %514 = arith.select %508, %512, %513 : vector<18x128xi1>, vector<18x128xf32>
    %515 = vector.broadcast %476 : vector<1x128xi32> to vector<18x128xi32>
    %516 = arith.cmpi eq, %57, %515 : vector<18x128xi32>
    %cst_149 = arith.constant 0.000000e+00 : f32
    %517 = vector.shape_cast %461 : vector<1x128xf32> to vector<1x128xf32>
    %518 = vector.broadcast %517 : vector<1x128xf32> to vector<18x128xf32>
    %519 = vector.broadcast %cst_149 : f32 to vector<18x128xf32>
    %520 = arith.select %516, %518, %519 : vector<18x128xi1>, vector<18x128xf32>
    %521 = arith.addf %514, %520 : vector<18x128xf32>
    %522 = vector.broadcast %458 : vector<1x128xf32> to vector<18x128xf32>
    %523 = arith.mulf %521, %522 : vector<18x128xf32>
    %524 = tpu.concatenate %523, %523, %523, %523 in 0 : vector<18x128xf32>, vector<18x128xf32>, vector<18x128xf32>, vector<18x128xf32> -> vector<72x128xf32>
    %c4 = arith.constant 4 : index
    %c0_150 = arith.constant 0 : index
    %c0_151 = arith.constant 0 : index
    %525 = vector.load %arg6[%c4, %c0_150, %c0_151] : memref<9x8x72xf32, #tpu.memory_space<vmem>>, vector<1x8x72xf32>
    %526 = vector.shape_cast %525 : vector<1x8x72xf32> to vector<8x72xf32>
    %527 = arith.mulf %506, %524 : vector<72x128xf32>
    %cst_152 = arith.constant dense<0.000000e+00> : vector<8x128xf32>
    %528 = tpu.matmul %526, %527, %cst_152 {dimension_numbers = #tpu.dot_dimension_numbers<[1], [0], [0], [1], [0, 0, 1, 1], [], []>} : vector<8x72xf32>, vector<72x128xf32>, vector<8x128xf32> -> vector<8x128xf32>
    %529 = arith.addf %435, %528 : vector<8x128xf32>
    %530 = vector.extract_strided_slice %50 {offsets = [10, 0], sizes = [1, 128], strides = [1, 1]} : vector<27x128xf32> to vector<1x128xf32>
    %531 = vector.extract_strided_slice %50 {offsets = [11, 0], sizes = [1, 128], strides = [1, 1]} : vector<27x128xf32> to vector<1x128xf32>
    %532 = vector.extract_strided_slice %56 {offsets = [5, 0], sizes = [1, 128], strides = [1, 1]} : vector<9x128xf32> to vector<1x128xf32>
    %cst_153 = arith.constant 0.000000e+00 : f32
    %533 = vector.broadcast %cst_153 : f32 to vector<1x128xf32>
    %534 = arith.addf %15, %533 : vector<1x128xf32>
    %535 = arith.addf %534, %530 : vector<1x128xf32>
    %cst_154 = arith.constant 1.000000e+00 : f32
    %536 = vector.broadcast %cst_154 : f32 to vector<1x128xf32>
    %537 = arith.addf %11, %536 : vector<1x128xf32>
    %538 = arith.addf %537, %531 : vector<1x128xf32>
    %cst_155 = arith.constant -1.000000e+00 : f32
    %539 = vector.broadcast %cst_155 : f32 to vector<1x128xf32>
    %540 = arith.cmpf ogt, %535, %539 : vector<1x128xf32>
    %cst_156 = arith.constant -1.000000e+00 : f32
    %541 = vector.broadcast %cst_156 : f32 to vector<1x128xf32>
    %542 = arith.cmpf ogt, %538, %541 : vector<1x128xf32>
    %543 = arith.andi %540, %542 : vector<1x128xi1>
    %cst_157 = arith.constant 1.600000e+01 : f32
    %544 = vector.broadcast %cst_157 : f32 to vector<1x128xf32>
    %545 = arith.cmpf olt, %535, %544 : vector<1x128xf32>
    %546 = arith.andi %543, %545 : vector<1x128xi1>
    %cst_158 = arith.constant 1.600000e+01 : f32
    %547 = vector.broadcast %cst_158 : f32 to vector<1x128xf32>
    %548 = arith.cmpf olt, %538, %547 : vector<1x128xf32>
    %549 = arith.andi %546, %548 : vector<1x128xi1>
    %550 = arith.extui %549 : vector<1x128xi1> to vector<1x128xi32>
    %551 = arith.sitofp %550 : vector<1x128xi32> to vector<1x128xf32>
    %552 = arith.mulf %551, %532 : vector<1x128xf32>
    %553 = math.floor %535 : vector<1x128xf32>
    %554 = math.floor %538 : vector<1x128xf32>
    %555 = arith.subf %535, %553 : vector<1x128xf32>
    %556 = arith.subf %538, %554 : vector<1x128xf32>
    %557 = arith.fptosi %553 : vector<1x128xf32> to vector<1x128xi32>
    %c1_i32_159 = arith.constant 1 : i32
    %558 = vector.broadcast %c1_i32_159 : i32 to vector<1x128xi32>
    %559 = arith.addi %557, %558 : vector<1x128xi32>
    %c0_i32_160 = arith.constant 0 : i32
    %c17_i32_161 = arith.constant 17 : i32
    %560 = vector.broadcast %c0_i32_160 : i32 to vector<1x128xi32>
    %561 = arith.maxsi %560, %559 : vector<1x128xi32>
    %562 = vector.broadcast %c17_i32_161 : i32 to vector<1x128xi32>
    %563 = arith.minsi %562, %561 : vector<1x128xi32>
    %564 = arith.fptosi %553 : vector<1x128xf32> to vector<1x128xi32>
    %c2_i32_162 = arith.constant 2 : i32
    %565 = vector.broadcast %c2_i32_162 : i32 to vector<1x128xi32>
    %566 = arith.addi %564, %565 : vector<1x128xi32>
    %c0_i32_163 = arith.constant 0 : i32
    %c17_i32_164 = arith.constant 17 : i32
    %567 = vector.broadcast %c0_i32_163 : i32 to vector<1x128xi32>
    %568 = arith.maxsi %567, %566 : vector<1x128xi32>
    %569 = vector.broadcast %c17_i32_164 : i32 to vector<1x128xi32>
    %570 = arith.minsi %569, %568 : vector<1x128xi32>
    %571 = arith.fptosi %554 : vector<1x128xf32> to vector<1x128xi32>
    %c1_i32_165 = arith.constant 1 : i32
    %572 = vector.broadcast %c1_i32_165 : i32 to vector<1x128xi32>
    %573 = arith.addi %571, %572 : vector<1x128xi32>
    %c0_i32_166 = arith.constant 0 : i32
    %c17_i32_167 = arith.constant 17 : i32
    %574 = vector.broadcast %c0_i32_166 : i32 to vector<1x128xi32>
    %575 = arith.maxsi %574, %573 : vector<1x128xi32>
    %576 = vector.broadcast %c17_i32_167 : i32 to vector<1x128xi32>
    %577 = arith.minsi %576, %575 : vector<1x128xi32>
    %578 = arith.fptosi %554 : vector<1x128xf32> to vector<1x128xi32>
    %c2_i32_168 = arith.constant 2 : i32
    %579 = vector.broadcast %c2_i32_168 : i32 to vector<1x128xi32>
    %580 = arith.addi %578, %579 : vector<1x128xi32>
    %c0_i32_169 = arith.constant 0 : i32
    %c17_i32_170 = arith.constant 17 : i32
    %581 = vector.broadcast %c0_i32_169 : i32 to vector<1x128xi32>
    %582 = arith.maxsi %581, %580 : vector<1x128xi32>
    %583 = vector.broadcast %c17_i32_170 : i32 to vector<1x128xi32>
    %584 = arith.minsi %583, %582 : vector<1x128xi32>
    %585 = vector.broadcast %577 : vector<1x128xi32> to vector<18x128xi32>
    %586 = arith.cmpi eq, %58, %585 : vector<18x128xi32>
    %cst_171 = arith.constant 1.000000e+00 : f32
    %587 = vector.broadcast %cst_171 : f32 to vector<1x128xf32>
    %588 = arith.subf %587, %556 : vector<1x128xf32>
    %cst_172 = arith.constant 0.000000e+00 : f32
    %589 = vector.shape_cast %588 : vector<1x128xf32> to vector<1x128xf32>
    %590 = vector.broadcast %589 : vector<1x128xf32> to vector<18x128xf32>
    %591 = vector.broadcast %cst_172 : f32 to vector<18x128xf32>
    %592 = arith.select %586, %590, %591 : vector<18x128xi1>, vector<18x128xf32>
    %593 = vector.broadcast %584 : vector<1x128xi32> to vector<18x128xi32>
    %594 = arith.cmpi eq, %58, %593 : vector<18x128xi32>
    %cst_173 = arith.constant 0.000000e+00 : f32
    %595 = vector.shape_cast %556 : vector<1x128xf32> to vector<1x128xf32>
    %596 = vector.broadcast %595 : vector<1x128xf32> to vector<18x128xf32>
    %597 = vector.broadcast %cst_173 : f32 to vector<18x128xf32>
    %598 = arith.select %594, %596, %597 : vector<18x128xi1>, vector<18x128xf32>
    %599 = arith.addf %592, %598 : vector<18x128xf32>
    %cst_174 = arith.constant dense<0.000000e+00> : vector<72x128xf32>
    %600 = tpu.matmul %3, %599, %cst_174 {dimension_numbers = #tpu.dot_dimension_numbers<[1], [0], [0], [1], [0, 0, 1, 1], [], []>} : vector<72x18xf32>, vector<18x128xf32>, vector<72x128xf32> -> vector<72x128xf32>
    %601 = vector.broadcast %563 : vector<1x128xi32> to vector<18x128xi32>
    %602 = arith.cmpi eq, %57, %601 : vector<18x128xi32>
    %cst_175 = arith.constant 1.000000e+00 : f32
    %603 = vector.broadcast %cst_175 : f32 to vector<1x128xf32>
    %604 = arith.subf %603, %555 : vector<1x128xf32>
    %cst_176 = arith.constant 0.000000e+00 : f32
    %605 = vector.shape_cast %604 : vector<1x128xf32> to vector<1x128xf32>
    %606 = vector.broadcast %605 : vector<1x128xf32> to vector<18x128xf32>
    %607 = vector.broadcast %cst_176 : f32 to vector<18x128xf32>
    %608 = arith.select %602, %606, %607 : vector<18x128xi1>, vector<18x128xf32>
    %609 = vector.broadcast %570 : vector<1x128xi32> to vector<18x128xi32>
    %610 = arith.cmpi eq, %57, %609 : vector<18x128xi32>
    %cst_177 = arith.constant 0.000000e+00 : f32
    %611 = vector.shape_cast %555 : vector<1x128xf32> to vector<1x128xf32>
    %612 = vector.broadcast %611 : vector<1x128xf32> to vector<18x128xf32>
    %613 = vector.broadcast %cst_177 : f32 to vector<18x128xf32>
    %614 = arith.select %610, %612, %613 : vector<18x128xi1>, vector<18x128xf32>
    %615 = arith.addf %608, %614 : vector<18x128xf32>
    %616 = vector.broadcast %552 : vector<1x128xf32> to vector<18x128xf32>
    %617 = arith.mulf %615, %616 : vector<18x128xf32>
    %618 = tpu.concatenate %617, %617, %617, %617 in 0 : vector<18x128xf32>, vector<18x128xf32>, vector<18x128xf32>, vector<18x128xf32> -> vector<72x128xf32>
    %c5 = arith.constant 5 : index
    %c0_178 = arith.constant 0 : index
    %c0_179 = arith.constant 0 : index
    %619 = vector.load %arg6[%c5, %c0_178, %c0_179] : memref<9x8x72xf32, #tpu.memory_space<vmem>>, vector<1x8x72xf32>
    %620 = vector.shape_cast %619 : vector<1x8x72xf32> to vector<8x72xf32>
    %621 = arith.mulf %600, %618 : vector<72x128xf32>
    %cst_180 = arith.constant dense<0.000000e+00> : vector<8x128xf32>
    %622 = tpu.matmul %620, %621, %cst_180 {dimension_numbers = #tpu.dot_dimension_numbers<[1], [0], [0], [1], [0, 0, 1, 1], [], []>} : vector<8x72xf32>, vector<72x128xf32>, vector<8x128xf32> -> vector<8x128xf32>
    %623 = arith.addf %529, %622 : vector<8x128xf32>
    %624 = vector.extract_strided_slice %50 {offsets = [12, 0], sizes = [1, 128], strides = [1, 1]} : vector<27x128xf32> to vector<1x128xf32>
    %625 = vector.extract_strided_slice %50 {offsets = [13, 0], sizes = [1, 128], strides = [1, 1]} : vector<27x128xf32> to vector<1x128xf32>
    %626 = vector.extract_strided_slice %56 {offsets = [6, 0], sizes = [1, 128], strides = [1, 1]} : vector<9x128xf32> to vector<1x128xf32>
    %cst_181 = arith.constant 1.000000e+00 : f32
    %627 = vector.broadcast %cst_181 : f32 to vector<1x128xf32>
    %628 = arith.addf %15, %627 : vector<1x128xf32>
    %629 = arith.addf %628, %624 : vector<1x128xf32>
    %cst_182 = arith.constant -1.000000e+00 : f32
    %630 = vector.broadcast %cst_182 : f32 to vector<1x128xf32>
    %631 = arith.addf %11, %630 : vector<1x128xf32>
    %632 = arith.addf %631, %625 : vector<1x128xf32>
    %cst_183 = arith.constant -1.000000e+00 : f32
    %633 = vector.broadcast %cst_183 : f32 to vector<1x128xf32>
    %634 = arith.cmpf ogt, %629, %633 : vector<1x128xf32>
    %cst_184 = arith.constant -1.000000e+00 : f32
    %635 = vector.broadcast %cst_184 : f32 to vector<1x128xf32>
    %636 = arith.cmpf ogt, %632, %635 : vector<1x128xf32>
    %637 = arith.andi %634, %636 : vector<1x128xi1>
    %cst_185 = arith.constant 1.600000e+01 : f32
    %638 = vector.broadcast %cst_185 : f32 to vector<1x128xf32>
    %639 = arith.cmpf olt, %629, %638 : vector<1x128xf32>
    %640 = arith.andi %637, %639 : vector<1x128xi1>
    %cst_186 = arith.constant 1.600000e+01 : f32
    %641 = vector.broadcast %cst_186 : f32 to vector<1x128xf32>
    %642 = arith.cmpf olt, %632, %641 : vector<1x128xf32>
    %643 = arith.andi %640, %642 : vector<1x128xi1>
    %644 = arith.extui %643 : vector<1x128xi1> to vector<1x128xi32>
    %645 = arith.sitofp %644 : vector<1x128xi32> to vector<1x128xf32>
    %646 = arith.mulf %645, %626 : vector<1x128xf32>
    %647 = math.floor %629 : vector<1x128xf32>
    %648 = math.floor %632 : vector<1x128xf32>
    %649 = arith.subf %629, %647 : vector<1x128xf32>
    %650 = arith.subf %632, %648 : vector<1x128xf32>
    %651 = arith.fptosi %647 : vector<1x128xf32> to vector<1x128xi32>
    %c1_i32_187 = arith.constant 1 : i32
    %652 = vector.broadcast %c1_i32_187 : i32 to vector<1x128xi32>
    %653 = arith.addi %651, %652 : vector<1x128xi32>
    %c0_i32_188 = arith.constant 0 : i32
    %c17_i32_189 = arith.constant 17 : i32
    %654 = vector.broadcast %c0_i32_188 : i32 to vector<1x128xi32>
    %655 = arith.maxsi %654, %653 : vector<1x128xi32>
    %656 = vector.broadcast %c17_i32_189 : i32 to vector<1x128xi32>
    %657 = arith.minsi %656, %655 : vector<1x128xi32>
    %658 = arith.fptosi %647 : vector<1x128xf32> to vector<1x128xi32>
    %c2_i32_190 = arith.constant 2 : i32
    %659 = vector.broadcast %c2_i32_190 : i32 to vector<1x128xi32>
    %660 = arith.addi %658, %659 : vector<1x128xi32>
    %c0_i32_191 = arith.constant 0 : i32
    %c17_i32_192 = arith.constant 17 : i32
    %661 = vector.broadcast %c0_i32_191 : i32 to vector<1x128xi32>
    %662 = arith.maxsi %661, %660 : vector<1x128xi32>
    %663 = vector.broadcast %c17_i32_192 : i32 to vector<1x128xi32>
    %664 = arith.minsi %663, %662 : vector<1x128xi32>
    %665 = arith.fptosi %648 : vector<1x128xf32> to vector<1x128xi32>
    %c1_i32_193 = arith.constant 1 : i32
    %666 = vector.broadcast %c1_i32_193 : i32 to vector<1x128xi32>
    %667 = arith.addi %665, %666 : vector<1x128xi32>
    %c0_i32_194 = arith.constant 0 : i32
    %c17_i32_195 = arith.constant 17 : i32
    %668 = vector.broadcast %c0_i32_194 : i32 to vector<1x128xi32>
    %669 = arith.maxsi %668, %667 : vector<1x128xi32>
    %670 = vector.broadcast %c17_i32_195 : i32 to vector<1x128xi32>
    %671 = arith.minsi %670, %669 : vector<1x128xi32>
    %672 = arith.fptosi %648 : vector<1x128xf32> to vector<1x128xi32>
    %c2_i32_196 = arith.constant 2 : i32
    %673 = vector.broadcast %c2_i32_196 : i32 to vector<1x128xi32>
    %674 = arith.addi %672, %673 : vector<1x128xi32>
    %c0_i32_197 = arith.constant 0 : i32
    %c17_i32_198 = arith.constant 17 : i32
    %675 = vector.broadcast %c0_i32_197 : i32 to vector<1x128xi32>
    %676 = arith.maxsi %675, %674 : vector<1x128xi32>
    %677 = vector.broadcast %c17_i32_198 : i32 to vector<1x128xi32>
    %678 = arith.minsi %677, %676 : vector<1x128xi32>
    %679 = vector.broadcast %671 : vector<1x128xi32> to vector<18x128xi32>
    %680 = arith.cmpi eq, %58, %679 : vector<18x128xi32>
    %cst_199 = arith.constant 1.000000e+00 : f32
    %681 = vector.broadcast %cst_199 : f32 to vector<1x128xf32>
    %682 = arith.subf %681, %650 : vector<1x128xf32>
    %cst_200 = arith.constant 0.000000e+00 : f32
    %683 = vector.shape_cast %682 : vector<1x128xf32> to vector<1x128xf32>
    %684 = vector.broadcast %683 : vector<1x128xf32> to vector<18x128xf32>
    %685 = vector.broadcast %cst_200 : f32 to vector<18x128xf32>
    %686 = arith.select %680, %684, %685 : vector<18x128xi1>, vector<18x128xf32>
    %687 = vector.broadcast %678 : vector<1x128xi32> to vector<18x128xi32>
    %688 = arith.cmpi eq, %58, %687 : vector<18x128xi32>
    %cst_201 = arith.constant 0.000000e+00 : f32
    %689 = vector.shape_cast %650 : vector<1x128xf32> to vector<1x128xf32>
    %690 = vector.broadcast %689 : vector<1x128xf32> to vector<18x128xf32>
    %691 = vector.broadcast %cst_201 : f32 to vector<18x128xf32>
    %692 = arith.select %688, %690, %691 : vector<18x128xi1>, vector<18x128xf32>
    %693 = arith.addf %686, %692 : vector<18x128xf32>
    %cst_202 = arith.constant dense<0.000000e+00> : vector<72x128xf32>
    %694 = tpu.matmul %3, %693, %cst_202 {dimension_numbers = #tpu.dot_dimension_numbers<[1], [0], [0], [1], [0, 0, 1, 1], [], []>} : vector<72x18xf32>, vector<18x128xf32>, vector<72x128xf32> -> vector<72x128xf32>
    %695 = vector.broadcast %657 : vector<1x128xi32> to vector<18x128xi32>
    %696 = arith.cmpi eq, %57, %695 : vector<18x128xi32>
    %cst_203 = arith.constant 1.000000e+00 : f32
    %697 = vector.broadcast %cst_203 : f32 to vector<1x128xf32>
    %698 = arith.subf %697, %649 : vector<1x128xf32>
    %cst_204 = arith.constant 0.000000e+00 : f32
    %699 = vector.shape_cast %698 : vector<1x128xf32> to vector<1x128xf32>
    %700 = vector.broadcast %699 : vector<1x128xf32> to vector<18x128xf32>
    %701 = vector.broadcast %cst_204 : f32 to vector<18x128xf32>
    %702 = arith.select %696, %700, %701 : vector<18x128xi1>, vector<18x128xf32>
    %703 = vector.broadcast %664 : vector<1x128xi32> to vector<18x128xi32>
    %704 = arith.cmpi eq, %57, %703 : vector<18x128xi32>
    %cst_205 = arith.constant 0.000000e+00 : f32
    %705 = vector.shape_cast %649 : vector<1x128xf32> to vector<1x128xf32>
    %706 = vector.broadcast %705 : vector<1x128xf32> to vector<18x128xf32>
    %707 = vector.broadcast %cst_205 : f32 to vector<18x128xf32>
    %708 = arith.select %704, %706, %707 : vector<18x128xi1>, vector<18x128xf32>
    %709 = arith.addf %702, %708 : vector<18x128xf32>
    %710 = vector.broadcast %646 : vector<1x128xf32> to vector<18x128xf32>
    %711 = arith.mulf %709, %710 : vector<18x128xf32>
    %712 = tpu.concatenate %711, %711, %711, %711 in 0 : vector<18x128xf32>, vector<18x128xf32>, vector<18x128xf32>, vector<18x128xf32> -> vector<72x128xf32>
    %c6 = arith.constant 6 : index
    %c0_206 = arith.constant 0 : index
    %c0_207 = arith.constant 0 : index
    %713 = vector.load %arg6[%c6, %c0_206, %c0_207] : memref<9x8x72xf32, #tpu.memory_space<vmem>>, vector<1x8x72xf32>
    %714 = vector.shape_cast %713 : vector<1x8x72xf32> to vector<8x72xf32>
    %715 = arith.mulf %694, %712 : vector<72x128xf32>
    %cst_208 = arith.constant dense<0.000000e+00> : vector<8x128xf32>
    %716 = tpu.matmul %714, %715, %cst_208 {dimension_numbers = #tpu.dot_dimension_numbers<[1], [0], [0], [1], [0, 0, 1, 1], [], []>} : vector<8x72xf32>, vector<72x128xf32>, vector<8x128xf32> -> vector<8x128xf32>
    %717 = arith.addf %623, %716 : vector<8x128xf32>
    %718 = vector.extract_strided_slice %50 {offsets = [14, 0], sizes = [1, 128], strides = [1, 1]} : vector<27x128xf32> to vector<1x128xf32>
    %719 = vector.extract_strided_slice %50 {offsets = [15, 0], sizes = [1, 128], strides = [1, 1]} : vector<27x128xf32> to vector<1x128xf32>
    %720 = vector.extract_strided_slice %56 {offsets = [7, 0], sizes = [1, 128], strides = [1, 1]} : vector<9x128xf32> to vector<1x128xf32>
    %cst_209 = arith.constant 1.000000e+00 : f32
    %721 = vector.broadcast %cst_209 : f32 to vector<1x128xf32>
    %722 = arith.addf %15, %721 : vector<1x128xf32>
    %723 = arith.addf %722, %718 : vector<1x128xf32>
    %cst_210 = arith.constant 0.000000e+00 : f32
    %724 = vector.broadcast %cst_210 : f32 to vector<1x128xf32>
    %725 = arith.addf %11, %724 : vector<1x128xf32>
    %726 = arith.addf %725, %719 : vector<1x128xf32>
    %cst_211 = arith.constant -1.000000e+00 : f32
    %727 = vector.broadcast %cst_211 : f32 to vector<1x128xf32>
    %728 = arith.cmpf ogt, %723, %727 : vector<1x128xf32>
    %cst_212 = arith.constant -1.000000e+00 : f32
    %729 = vector.broadcast %cst_212 : f32 to vector<1x128xf32>
    %730 = arith.cmpf ogt, %726, %729 : vector<1x128xf32>
    %731 = arith.andi %728, %730 : vector<1x128xi1>
    %cst_213 = arith.constant 1.600000e+01 : f32
    %732 = vector.broadcast %cst_213 : f32 to vector<1x128xf32>
    %733 = arith.cmpf olt, %723, %732 : vector<1x128xf32>
    %734 = arith.andi %731, %733 : vector<1x128xi1>
    %cst_214 = arith.constant 1.600000e+01 : f32
    %735 = vector.broadcast %cst_214 : f32 to vector<1x128xf32>
    %736 = arith.cmpf olt, %726, %735 : vector<1x128xf32>
    %737 = arith.andi %734, %736 : vector<1x128xi1>
    %738 = arith.extui %737 : vector<1x128xi1> to vector<1x128xi32>
    %739 = arith.sitofp %738 : vector<1x128xi32> to vector<1x128xf32>
    %740 = arith.mulf %739, %720 : vector<1x128xf32>
    %741 = math.floor %723 : vector<1x128xf32>
    %742 = math.floor %726 : vector<1x128xf32>
    %743 = arith.subf %723, %741 : vector<1x128xf32>
    %744 = arith.subf %726, %742 : vector<1x128xf32>
    %745 = arith.fptosi %741 : vector<1x128xf32> to vector<1x128xi32>
    %c1_i32_215 = arith.constant 1 : i32
    %746 = vector.broadcast %c1_i32_215 : i32 to vector<1x128xi32>
    %747 = arith.addi %745, %746 : vector<1x128xi32>
    %c0_i32_216 = arith.constant 0 : i32
    %c17_i32_217 = arith.constant 17 : i32
    %748 = vector.broadcast %c0_i32_216 : i32 to vector<1x128xi32>
    %749 = arith.maxsi %748, %747 : vector<1x128xi32>
    %750 = vector.broadcast %c17_i32_217 : i32 to vector<1x128xi32>
    %751 = arith.minsi %750, %749 : vector<1x128xi32>
    %752 = arith.fptosi %741 : vector<1x128xf32> to vector<1x128xi32>
    %c2_i32_218 = arith.constant 2 : i32
    %753 = vector.broadcast %c2_i32_218 : i32 to vector<1x128xi32>
    %754 = arith.addi %752, %753 : vector<1x128xi32>
    %c0_i32_219 = arith.constant 0 : i32
    %c17_i32_220 = arith.constant 17 : i32
    %755 = vector.broadcast %c0_i32_219 : i32 to vector<1x128xi32>
    %756 = arith.maxsi %755, %754 : vector<1x128xi32>
    %757 = vector.broadcast %c17_i32_220 : i32 to vector<1x128xi32>
    %758 = arith.minsi %757, %756 : vector<1x128xi32>
    %759 = arith.fptosi %742 : vector<1x128xf32> to vector<1x128xi32>
    %c1_i32_221 = arith.constant 1 : i32
    %760 = vector.broadcast %c1_i32_221 : i32 to vector<1x128xi32>
    %761 = arith.addi %759, %760 : vector<1x128xi32>
    %c0_i32_222 = arith.constant 0 : i32
    %c17_i32_223 = arith.constant 17 : i32
    %762 = vector.broadcast %c0_i32_222 : i32 to vector<1x128xi32>
    %763 = arith.maxsi %762, %761 : vector<1x128xi32>
    %764 = vector.broadcast %c17_i32_223 : i32 to vector<1x128xi32>
    %765 = arith.minsi %764, %763 : vector<1x128xi32>
    %766 = arith.fptosi %742 : vector<1x128xf32> to vector<1x128xi32>
    %c2_i32_224 = arith.constant 2 : i32
    %767 = vector.broadcast %c2_i32_224 : i32 to vector<1x128xi32>
    %768 = arith.addi %766, %767 : vector<1x128xi32>
    %c0_i32_225 = arith.constant 0 : i32
    %c17_i32_226 = arith.constant 17 : i32
    %769 = vector.broadcast %c0_i32_225 : i32 to vector<1x128xi32>
    %770 = arith.maxsi %769, %768 : vector<1x128xi32>
    %771 = vector.broadcast %c17_i32_226 : i32 to vector<1x128xi32>
    %772 = arith.minsi %771, %770 : vector<1x128xi32>
    %773 = vector.broadcast %765 : vector<1x128xi32> to vector<18x128xi32>
    %774 = arith.cmpi eq, %58, %773 : vector<18x128xi32>
    %cst_227 = arith.constant 1.000000e+00 : f32
    %775 = vector.broadcast %cst_227 : f32 to vector<1x128xf32>
    %776 = arith.subf %775, %744 : vector<1x128xf32>
    %cst_228 = arith.constant 0.000000e+00 : f32
    %777 = vector.shape_cast %776 : vector<1x128xf32> to vector<1x128xf32>
    %778 = vector.broadcast %777 : vector<1x128xf32> to vector<18x128xf32>
    %779 = vector.broadcast %cst_228 : f32 to vector<18x128xf32>
    %780 = arith.select %774, %778, %779 : vector<18x128xi1>, vector<18x128xf32>
    %781 = vector.broadcast %772 : vector<1x128xi32> to vector<18x128xi32>
    %782 = arith.cmpi eq, %58, %781 : vector<18x128xi32>
    %cst_229 = arith.constant 0.000000e+00 : f32
    %783 = vector.shape_cast %744 : vector<1x128xf32> to vector<1x128xf32>
    %784 = vector.broadcast %783 : vector<1x128xf32> to vector<18x128xf32>
    %785 = vector.broadcast %cst_229 : f32 to vector<18x128xf32>
    %786 = arith.select %782, %784, %785 : vector<18x128xi1>, vector<18x128xf32>
    %787 = arith.addf %780, %786 : vector<18x128xf32>
    %cst_230 = arith.constant dense<0.000000e+00> : vector<72x128xf32>
    %788 = tpu.matmul %3, %787, %cst_230 {dimension_numbers = #tpu.dot_dimension_numbers<[1], [0], [0], [1], [0, 0, 1, 1], [], []>} : vector<72x18xf32>, vector<18x128xf32>, vector<72x128xf32> -> vector<72x128xf32>
    %789 = vector.broadcast %751 : vector<1x128xi32> to vector<18x128xi32>
    %790 = arith.cmpi eq, %57, %789 : vector<18x128xi32>
    %cst_231 = arith.constant 1.000000e+00 : f32
    %791 = vector.broadcast %cst_231 : f32 to vector<1x128xf32>
    %792 = arith.subf %791, %743 : vector<1x128xf32>
    %cst_232 = arith.constant 0.000000e+00 : f32
    %793 = vector.shape_cast %792 : vector<1x128xf32> to vector<1x128xf32>
    %794 = vector.broadcast %793 : vector<1x128xf32> to vector<18x128xf32>
    %795 = vector.broadcast %cst_232 : f32 to vector<18x128xf32>
    %796 = arith.select %790, %794, %795 : vector<18x128xi1>, vector<18x128xf32>
    %797 = vector.broadcast %758 : vector<1x128xi32> to vector<18x128xi32>
    %798 = arith.cmpi eq, %57, %797 : vector<18x128xi32>
    %cst_233 = arith.constant 0.000000e+00 : f32
    %799 = vector.shape_cast %743 : vector<1x128xf32> to vector<1x128xf32>
    %800 = vector.broadcast %799 : vector<1x128xf32> to vector<18x128xf32>
    %801 = vector.broadcast %cst_233 : f32 to vector<18x128xf32>
    %802 = arith.select %798, %800, %801 : vector<18x128xi1>, vector<18x128xf32>
    %803 = arith.addf %796, %802 : vector<18x128xf32>
    %804 = vector.broadcast %740 : vector<1x128xf32> to vector<18x128xf32>
    %805 = arith.mulf %803, %804 : vector<18x128xf32>
    %806 = tpu.concatenate %805, %805, %805, %805 in 0 : vector<18x128xf32>, vector<18x128xf32>, vector<18x128xf32>, vector<18x128xf32> -> vector<72x128xf32>
    %c7 = arith.constant 7 : index
    %c0_234 = arith.constant 0 : index
    %c0_235 = arith.constant 0 : index
    %807 = vector.load %arg6[%c7, %c0_234, %c0_235] : memref<9x8x72xf32, #tpu.memory_space<vmem>>, vector<1x8x72xf32>
    %808 = vector.shape_cast %807 : vector<1x8x72xf32> to vector<8x72xf32>
    %809 = arith.mulf %788, %806 : vector<72x128xf32>
    %cst_236 = arith.constant dense<0.000000e+00> : vector<8x128xf32>
    %810 = tpu.matmul %808, %809, %cst_236 {dimension_numbers = #tpu.dot_dimension_numbers<[1], [0], [0], [1], [0, 0, 1, 1], [], []>} : vector<8x72xf32>, vector<72x128xf32>, vector<8x128xf32> -> vector<8x128xf32>
    %811 = arith.addf %717, %810 : vector<8x128xf32>
    %812 = vector.extract_strided_slice %50 {offsets = [16, 0], sizes = [1, 128], strides = [1, 1]} : vector<27x128xf32> to vector<1x128xf32>
    %813 = vector.extract_strided_slice %50 {offsets = [17, 0], sizes = [1, 128], strides = [1, 1]} : vector<27x128xf32> to vector<1x128xf32>
    %814 = vector.extract_strided_slice %56 {offsets = [8, 0], sizes = [1, 128], strides = [1, 1]} : vector<9x128xf32> to vector<1x128xf32>
    %cst_237 = arith.constant 1.000000e+00 : f32
    %815 = vector.broadcast %cst_237 : f32 to vector<1x128xf32>
    %816 = arith.addf %15, %815 : vector<1x128xf32>
    %817 = arith.addf %816, %812 : vector<1x128xf32>
    %cst_238 = arith.constant 1.000000e+00 : f32
    %818 = vector.broadcast %cst_238 : f32 to vector<1x128xf32>
    %819 = arith.addf %11, %818 : vector<1x128xf32>
    %820 = arith.addf %819, %813 : vector<1x128xf32>
    %cst_239 = arith.constant -1.000000e+00 : f32
    %821 = vector.broadcast %cst_239 : f32 to vector<1x128xf32>
    %822 = arith.cmpf ogt, %817, %821 : vector<1x128xf32>
    %cst_240 = arith.constant -1.000000e+00 : f32
    %823 = vector.broadcast %cst_240 : f32 to vector<1x128xf32>
    %824 = arith.cmpf ogt, %820, %823 : vector<1x128xf32>
    %825 = arith.andi %822, %824 : vector<1x128xi1>
    %cst_241 = arith.constant 1.600000e+01 : f32
    %826 = vector.broadcast %cst_241 : f32 to vector<1x128xf32>
    %827 = arith.cmpf olt, %817, %826 : vector<1x128xf32>
    %828 = arith.andi %825, %827 : vector<1x128xi1>
    %cst_242 = arith.constant 1.600000e+01 : f32
    %829 = vector.broadcast %cst_242 : f32 to vector<1x128xf32>
    %830 = arith.cmpf olt, %820, %829 : vector<1x128xf32>
    %831 = arith.andi %828, %830 : vector<1x128xi1>
    %832 = arith.extui %831 : vector<1x128xi1> to vector<1x128xi32>
    %833 = arith.sitofp %832 : vector<1x128xi32> to vector<1x128xf32>
    %834 = arith.mulf %833, %814 : vector<1x128xf32>
    %835 = math.floor %817 : vector<1x128xf32>
    %836 = math.floor %820 : vector<1x128xf32>
    %837 = arith.subf %817, %835 : vector<1x128xf32>
    %838 = arith.subf %820, %836 : vector<1x128xf32>
    %839 = arith.fptosi %835 : vector<1x128xf32> to vector<1x128xi32>
    %c1_i32_243 = arith.constant 1 : i32
    %840 = vector.broadcast %c1_i32_243 : i32 to vector<1x128xi32>
    %841 = arith.addi %839, %840 : vector<1x128xi32>
    %c0_i32_244 = arith.constant 0 : i32
    %c17_i32_245 = arith.constant 17 : i32
    %842 = vector.broadcast %c0_i32_244 : i32 to vector<1x128xi32>
    %843 = arith.maxsi %842, %841 : vector<1x128xi32>
    %844 = vector.broadcast %c17_i32_245 : i32 to vector<1x128xi32>
    %845 = arith.minsi %844, %843 : vector<1x128xi32>
    %846 = arith.fptosi %835 : vector<1x128xf32> to vector<1x128xi32>
    %c2_i32_246 = arith.constant 2 : i32
    %847 = vector.broadcast %c2_i32_246 : i32 to vector<1x128xi32>
    %848 = arith.addi %846, %847 : vector<1x128xi32>
    %c0_i32_247 = arith.constant 0 : i32
    %c17_i32_248 = arith.constant 17 : i32
    %849 = vector.broadcast %c0_i32_247 : i32 to vector<1x128xi32>
    %850 = arith.maxsi %849, %848 : vector<1x128xi32>
    %851 = vector.broadcast %c17_i32_248 : i32 to vector<1x128xi32>
    %852 = arith.minsi %851, %850 : vector<1x128xi32>
    %853 = arith.fptosi %836 : vector<1x128xf32> to vector<1x128xi32>
    %c1_i32_249 = arith.constant 1 : i32
    %854 = vector.broadcast %c1_i32_249 : i32 to vector<1x128xi32>
    %855 = arith.addi %853, %854 : vector<1x128xi32>
    %c0_i32_250 = arith.constant 0 : i32
    %c17_i32_251 = arith.constant 17 : i32
    %856 = vector.broadcast %c0_i32_250 : i32 to vector<1x128xi32>
    %857 = arith.maxsi %856, %855 : vector<1x128xi32>
    %858 = vector.broadcast %c17_i32_251 : i32 to vector<1x128xi32>
    %859 = arith.minsi %858, %857 : vector<1x128xi32>
    %860 = arith.fptosi %836 : vector<1x128xf32> to vector<1x128xi32>
    %c2_i32_252 = arith.constant 2 : i32
    %861 = vector.broadcast %c2_i32_252 : i32 to vector<1x128xi32>
    %862 = arith.addi %860, %861 : vector<1x128xi32>
    %c0_i32_253 = arith.constant 0 : i32
    %c17_i32_254 = arith.constant 17 : i32
    %863 = vector.broadcast %c0_i32_253 : i32 to vector<1x128xi32>
    %864 = arith.maxsi %863, %862 : vector<1x128xi32>
    %865 = vector.broadcast %c17_i32_254 : i32 to vector<1x128xi32>
    %866 = arith.minsi %865, %864 : vector<1x128xi32>
    %867 = vector.broadcast %859 : vector<1x128xi32> to vector<18x128xi32>
    %868 = arith.cmpi eq, %58, %867 : vector<18x128xi32>
    %cst_255 = arith.constant 1.000000e+00 : f32
    %869 = vector.broadcast %cst_255 : f32 to vector<1x128xf32>
    %870 = arith.subf %869, %838 : vector<1x128xf32>
    %cst_256 = arith.constant 0.000000e+00 : f32
    %871 = vector.shape_cast %870 : vector<1x128xf32> to vector<1x128xf32>
    %872 = vector.broadcast %871 : vector<1x128xf32> to vector<18x128xf32>
    %873 = vector.broadcast %cst_256 : f32 to vector<18x128xf32>
    %874 = arith.select %868, %872, %873 : vector<18x128xi1>, vector<18x128xf32>
    %875 = vector.broadcast %866 : vector<1x128xi32> to vector<18x128xi32>
    %876 = arith.cmpi eq, %58, %875 : vector<18x128xi32>
    %cst_257 = arith.constant 0.000000e+00 : f32
    %877 = vector.shape_cast %838 : vector<1x128xf32> to vector<1x128xf32>
    %878 = vector.broadcast %877 : vector<1x128xf32> to vector<18x128xf32>
    %879 = vector.broadcast %cst_257 : f32 to vector<18x128xf32>
    %880 = arith.select %876, %878, %879 : vector<18x128xi1>, vector<18x128xf32>
    %881 = arith.addf %874, %880 : vector<18x128xf32>
    %cst_258 = arith.constant dense<0.000000e+00> : vector<72x128xf32>
    %882 = tpu.matmul %3, %881, %cst_258 {dimension_numbers = #tpu.dot_dimension_numbers<[1], [0], [0], [1], [0, 0, 1, 1], [], []>} : vector<72x18xf32>, vector<18x128xf32>, vector<72x128xf32> -> vector<72x128xf32>
    %883 = vector.broadcast %845 : vector<1x128xi32> to vector<18x128xi32>
    %884 = arith.cmpi eq, %57, %883 : vector<18x128xi32>
    %cst_259 = arith.constant 1.000000e+00 : f32
    %885 = vector.broadcast %cst_259 : f32 to vector<1x128xf32>
    %886 = arith.subf %885, %837 : vector<1x128xf32>
    %cst_260 = arith.constant 0.000000e+00 : f32
    %887 = vector.shape_cast %886 : vector<1x128xf32> to vector<1x128xf32>
    %888 = vector.broadcast %887 : vector<1x128xf32> to vector<18x128xf32>
    %889 = vector.broadcast %cst_260 : f32 to vector<18x128xf32>
    %890 = arith.select %884, %888, %889 : vector<18x128xi1>, vector<18x128xf32>
    %891 = vector.broadcast %852 : vector<1x128xi32> to vector<18x128xi32>
    %892 = arith.cmpi eq, %57, %891 : vector<18x128xi32>
    %cst_261 = arith.constant 0.000000e+00 : f32
    %893 = vector.shape_cast %837 : vector<1x128xf32> to vector<1x128xf32>
    %894 = vector.broadcast %893 : vector<1x128xf32> to vector<18x128xf32>
    %895 = vector.broadcast %cst_261 : f32 to vector<18x128xf32>
    %896 = arith.select %892, %894, %895 : vector<18x128xi1>, vector<18x128xf32>
    %897 = arith.addf %890, %896 : vector<18x128xf32>
    %898 = vector.broadcast %834 : vector<1x128xf32> to vector<18x128xf32>
    %899 = arith.mulf %897, %898 : vector<18x128xf32>
    %900 = tpu.concatenate %899, %899, %899, %899 in 0 : vector<18x128xf32>, vector<18x128xf32>, vector<18x128xf32>, vector<18x128xf32> -> vector<72x128xf32>
    %c8 = arith.constant 8 : index
    %c0_262 = arith.constant 0 : index
    %c0_263 = arith.constant 0 : index
    %901 = vector.load %arg6[%c8, %c0_262, %c0_263] : memref<9x8x72xf32, #tpu.memory_space<vmem>>, vector<1x8x72xf32>
    %902 = vector.shape_cast %901 : vector<1x8x72xf32> to vector<8x72xf32>
    %903 = arith.mulf %882, %900 : vector<72x128xf32>
    %cst_264 = arith.constant dense<0.000000e+00> : vector<8x128xf32>
    %904 = tpu.matmul %902, %903, %cst_264 {dimension_numbers = #tpu.dot_dimension_numbers<[1], [0], [0], [1], [0, 0, 1, 1], [], []>} : vector<8x72xf32>, vector<72x128xf32>, vector<8x128xf32> -> vector<8x128xf32>
    %905 = arith.addf %811, %904 : vector<8x128xf32>
    %c0_265 = arith.constant 0 : index
    %c0_266 = arith.constant 0 : index
    %906 = vector.load %arg7[%c0_265, %c0_266] : memref<8x1xf32, #tpu.memory_space<vmem>>, vector<8x1xf32>
    %907 = vector.broadcast %906 : vector<8x1xf32> to vector<8x128xf32>
    %908 = arith.mulf %905, %907 : vector<8x128xf32>
    %c0_267 = arith.constant 0 : index
    %c0_268 = arith.constant 0 : index
    %909 = vector.load %arg8[%c0_267, %c0_268] : memref<8x1xf32, #tpu.memory_space<vmem>>, vector<8x1xf32>
    %910 = vector.broadcast %909 : vector<8x1xf32> to vector<8x128xf32>
    %911 = arith.addf %908, %910 : vector<8x128xf32>
    %cst_269 = arith.constant 0.000000e+00 : f32
    %912 = vector.broadcast %cst_269 : f32 to vector<8x128xf32>
    %913 = arith.maximumf %911, %912 : vector<8x128xf32>
    %914 = vector.shape_cast %913 : vector<8x128xf32> to vector<1x8x128xf32>
    %c0_270 = arith.constant 0 : index
    %c0_271 = arith.constant 0 : index
    %c0_272 = arith.constant 0 : index
    %915 = vector.load %arg9[%c0_270, %c0_271, %c0_272] : memref<1x8x128xf32, #tpu.memory_space<vmem>>, vector<1x8x128xf32>
    tpu.vector_store %arg9[%c0_270, %c0_271, %c0_272], %914 {strides = array<i32>} : memref<1x8x128xf32, #tpu.memory_space<vmem>>, vector<1x8x128xf32>,
    return
  }
  func.func @transform_0(%arg0: i32, %arg1: i32) -> (i32, i32, i32, i32) {
    %c0_i32 = arith.constant 0 : i32
    %c0_i32_0 = arith.constant 0 : i32
    %c0_i32_1 = arith.constant 0 : i32
    return %arg0, %arg1, %c0_i32, %c0_i32_0 : i32, i32, i32, i32
  }
  func.func @transform_1(%arg0: i32, %arg1: i32) -> (i32, i32, i32) {
    %c0_i32 = arith.constant 0 : i32
    %c0_i32_0 = arith.constant 0 : i32
    %c0_i32_1 = arith.constant 0 : i32
    return %arg0, %c0_i32, %c0_i32_0 : i32, i32, i32
  }
  func.func @transform_2(%arg0: i32, %arg1: i32) -> (i32, i32) {
    %c0_i32 = arith.constant 0 : i32
    %c0_i32_0 = arith.constant 0 : i32
    %c0_i32_1 = arith.constant 0 : i32
    return %c0_i32, %c0_i32_0 : i32, i32
  }
  func.func @transform_3(%arg0: i32, %arg1: i32) -> (i32, i32) {
    %c0_i32 = arith.constant 0 : i32
    %c0_i32_0 = arith.constant 0 : i32
    %c0_i32_1 = arith.constant 0 : i32
    return %c0_i32, %c0_i32_0 : i32, i32
  }
  func.func @transform_4(%arg0: i32, %arg1: i32) -> (i32, i32, i32) {
    %c0_i32 = arith.constant 0 : i32
    %c0_i32_0 = arith.constant 0 : i32
    %c0_i32_1 = arith.constant 0 : i32
    %c0_i32_2 = arith.constant 0 : i32
    return %c0_i32, %c0_i32_0, %c0_i32_1 : i32, i32, i32
  }
  func.func @transform_5(%arg0: i32, %arg1: i32) -> (i32, i32) {
    %c0_i32 = arith.constant 0 : i32
    %c0_i32_0 = arith.constant 0 : i32
    %c0_i32_1 = arith.constant 0 : i32
    return %c0_i32, %c0_i32_0 : i32, i32
  }
  func.func @transform_6(%arg0: i32, %arg1: i32) -> (i32, i32) {
    %c0_i32 = arith.constant 0 : i32
    %c0_i32_0 = arith.constant 0 : i32
    %c0_i32_1 = arith.constant 0 : i32
    return %c0_i32, %c0_i32_0 : i32, i32
  }
  func.func @transform_7(%arg0: i32, %arg1: i32) -> (i32, i32, i32) {
    %c0_i32 = arith.constant 0 : i32
    %c0_i32_0 = arith.constant 0 : i32
    return %arg0, %c0_i32, %arg1 : i32, i32, i32
  }
}

</mosaic_0001>

<llo_original>
// kernel: tpu_custom_call.1
$region0: #{tpu_custom_call.1}
  #allocation0 [shape = 'u32[]', space=smem, size = 0x4, offset = 0x4, fixed_abs, tag = 'smem constant byte address 0x4 - core index']
  #allocation1 [shape = 'u32[72,128]{1,0:T(1,128)}', space=vmem, size = 0x9000, scoped, tag = 'internal scratch']
  %s0 = inlined_call_operand.vmem [shape: f32[2,2,4,162], index: 0, kind: input, shape index: {}]
  %s1 = inlined_call_operand.vmem [shape: f32[2,72,18], index: 1, kind: input, shape index: {}]
  %s2 = inlined_call_operand.vmem [shape: f32[27,36], index: 2, kind: input, shape index: {}]
  %s3 = inlined_call_operand.vmem [shape: f32[27,1], index: 3, kind: input, shape index: {}]
  %s4 = inlined_call_operand.vmem [shape: f32[9,8,72], index: 4, kind: input, shape index: {}]
  %s5 = inlined_call_operand.vmem [shape: f32[8,1], index: 5, kind: input, shape index: {}]
  %s6 = inlined_call_operand.vmem [shape: f32[8,1], index: 6, kind: input, shape index: {}]
  %s7 = inlined_call_operand.hbm [shape: f32[2,8,256], index: 7, kind: output, shape index: {}]
  %s8 = sld [smem:[#allocation0]]
  $region61: #{tpu_custom_call.1} parent=0
    _
  %s10 = ssub.s32 1, %s8
  %s11 = scalar_select 0, %s10, %s8
  $region1: #{tpu_custom_call.1} parent=0
    #allocation2 [shape = 'u8[8192]{0}', space=vmem, size = 0x2000, scoped, tag = 'output window, operand 0']
    #allocation3 [shape = 's32[2]{0}', space=sflag, size = 0x8, scoped, tag = 'scoped memory for tpu_custom_call.1']
    %12 = vsyncpa [#allocation3], 0
    %s13 = scalar_lea.sflag [#allocation3], 1
    %14 = vsyncpa %s13, 0
    loop: start=0, step=1, limit=6
    $region2: #{tpu_custom_call.1} parent=1 // loop_pre_header
      _
    $region3: #{tpu_custom_call.1} parent=1 // loop_header
      %s16 = sphi 0, %s20
      %p17 = scmp.ge.s32.totalorder %s16, 6
      %s23 = sphi 0, %s35
      %s24 = sphi 0, %s31
      %s25 = sphi 0, %s23
      %s26 = sphi 0, %s24
      %s27 = sphi 0, %s25
      %s28 = sphi 0, %s26
      %s40 = sphi 0, %s42
      %s43 = sphi 0, %s40
      %s44 = sphi 0, %s43
      %s60 = sphi 0, %s44
      %s66 = sphi 0, %s68
      %s69 = sphi 0, %s66
      %s70 = sphi 0, %s69
      %s86 = sphi 0, %s70
      %s90 = sphi 0, %s90
      %s92 = sphi 0, %s90
      %s93 = sphi 0, %s92
      %s107 = sphi 0, %s93
      %s111 = sphi 0, %s111
      %s113 = sphi 0, %s111
      %s114 = sphi 0, %s113
      %s128 = sphi 0, %s114
      %s132 = sphi 0, %s132
      %s134 = sphi 0, %s132
      %s135 = sphi 0, %s134
      %s149 = sphi 0, %s135
      %s153 = sphi 0, %s153
      %s155 = sphi 0, %s153
      %s156 = sphi 0, %s155
      %s170 = sphi 0, %s156
      %s174 = sphi 0, %s174
      %s176 = sphi 0, %s174
      %s177 = sphi 0, %s176
      %s191 = sphi 0, %s177
      %s199 = sphi 0, %s201
      %s202 = sphi 0, %s199
      %s203 = sphi 0, %s202
      %s219 = sphi 0, %s203
    $region4: #{tpu_custom_call.1} parent=1 // loop_header_branch
      %19 = sbr.rel (%p17) target = $region8
    $region5: #{tpu_custom_call.1} parent=1 // loop_body
      %s21 = ssub.s32 %s16, 1
      %s22 = ssub.s32 %s16, 2
      %s29 = sadd.s32 1, %s24
      %p30 = scmp.ge.s32.totalorder %s29, 2
      %s31 = scalar_select %p30, 0, %s29
      %s32 = sadd.s32 1, %s23
      %s33 = scalar_select %p30, %s32, %s23
      %p34 = scmp.ge.s32.totalorder %s33, 2
      %s35 = scalar_select %p34, 0, %s33
      %s36 = ssub.s32 %s23, %s35
      %s37 = ssub.s32 %s24, %s31
      %s38 = sor.u32 %s36, %s37
      %p39 = scmp.eq.s32.totalorder %s38, 0
      %s41 = sadd.s32 %s40, 1
      %s42 = scalar_select %p39, %s40, %s41
      %p45 = pneg %p39
      %p46 = scmp.eq.s32.totalorder %s16, 3
      %p47 = por %p45, %p46
      %p48 = scmp.ne.s32.totalorder %s40, %s43
      %p49 = scmp.eq.s32.totalorder %s16, 0
      %p50 = por %p48, %p49
      %p51 = scmp.ne.s32.totalorder %s40, %s43
      %p52 = scmp.eq.s32.totalorder %s21, 3
      %p53 = por %p51, %p52
      %p54 = scmp.ne.s32.totalorder %s43, %s44
      %p55 = scmp.eq.s32.totalorder %s21, 0
      %p56 = por %p54, %p55
      %p57 = scmp.ne.s32.totalorder %s43, %s44
      %p58 = scmp.eq.s32.totalorder %s22, 3
      %p59 = por %p57, %p58
      %p61 = scmp.ne.s32.totalorder %s44, %s60
      %p62 = scmp.eq.s32.totalorder %s22, 0
      %p63 = por %p61, %p62
      %s64 = ssub.s32 %s23, %s35
      %p65 = scmp.eq.s32.totalorder %s64, 0
      %s67 = sadd.s32 %s66, 1
      %s68 = scalar_select %p65, %s66, %s67
      %p71 = pneg %p65
      %p72 = scmp.eq.s32.totalorder %s16, 3
      %p73 = por %p71, %p72
      %p74 = scmp.ne.s32.totalorder %s66, %s69
      %p75 = scmp.eq.s32.totalorder %s16, 0
      %p76 = por %p74, %p75
      %p77 = scmp.ne.s32.totalorder %s66, %s69
      %p78 = scmp.eq.s32.totalorder %s21, 3
      %p79 = por %p77, %p78
      %p80 = scmp.ne.s32.totalorder %s69, %s70
      %p81 = scmp.eq.s32.totalorder %s21, 0
      %p82 = por %p80, %p81
      %p83 = scmp.ne.s32.totalorder %s69, %s70
      %p84 = scmp.eq.s32.totalorder %s22, 3
      %p85 = por %p83, %p84
      %p87 = scmp.ne.s32.totalorder %s70, %s86
      %p88 = scmp.eq.s32.totalorder %s22, 0
      %p89 = por %p87, %p88
      %s91 = sadd.s32 %s90, 1
      %p94 = scmp.eq.s32.totalorder %s16, 3
      %p95 = scmp.ne.s32.totalorder %s90, %s92
      %p96 = scmp.eq.s32.totalorder %s16, 0
      %p97 = por %p95, %p96
      %p98 = scmp.ne.s32.totalorder %s90, %s92
      %p99 = scmp.eq.s32.totalorder %s21, 3
      %p100 = por %p98, %p99
      %p101 = scmp.ne.s32.totalorder %s92, %s93
      %p102 = scmp.eq.s32.totalorder %s21, 0
      %p103 = por %p101, %p102
      %p104 = scmp.ne.s32.totalorder %s92, %s93
      %p105 = scmp.eq.s32.totalorder %s22, 3
      %p106 = por %p104, %p105
      %p108 = scmp.ne.s32.totalorder %s93, %s107
      %p109 = scmp.eq.s32.totalorder %s22, 0
      %p110 = por %p108, %p109
      %s112 = sadd.s32 %s111, 1
      %p115 = scmp.eq.s32.totalorder %s16, 3
      %p116 = scmp.ne.s32.totalorder %s111, %s113
      %p117 = scmp.eq.s32.totalorder %s16, 0
      %p118 = por %p116, %p117
      %p119 = scmp.ne.s32.totalorder %s111, %s113
      %p120 = scmp.eq.s32.totalorder %s21, 3
      %p121 = por %p119, %p120
      %p122 = scmp.ne.s32.totalorder %s113, %s114
      %p123 = scmp.eq.s32.totalorder %s21, 0
      %p124 = por %p122, %p123
      %p125 = scmp.ne.s32.totalorder %s113, %s114
      %p126 = scmp.eq.s32.totalorder %s22, 3
      %p127 = por %p125, %p126
      %p129 = scmp.ne.s32.totalorder %s114, %s128
      %p130 = scmp.eq.s32.totalorder %s22, 0
      %p131 = por %p129, %p130
      %s133 = sadd.s32 %s132, 1
      %p136 = scmp.eq.s32.totalorder %s16, 3
      %p137 = scmp.ne.s32.totalorder %s132, %s134
      %p138 = scmp.eq.s32.totalorder %s16, 0
      %p139 = por %p137, %p138
      %p140 = scmp.ne.s32.totalorder %s132, %s134
      %p141 = scmp.eq.s32.totalorder %s21, 3
      %p142 = por %p140, %p141
      %p143 = scmp.ne.s32.totalorder %s134, %s135
      %p144 = scmp.eq.s32.totalorder %s21, 0
      %p145 = por %p143, %p144
      %p146 = scmp.ne.s32.totalorder %s134, %s135
      %p147 = scmp.eq.s32.totalorder %s22, 3
      %p148 = por %p146, %p147
      %p150 = scmp.ne.s32.totalorder %s135, %s149
      %p151 = scmp.eq.s32.totalorder %s22, 0
      %p152 = por %p150, %p151
      %s154 = sadd.s32 %s153, 1
      %p157 = scmp.eq.s32.totalorder %s16, 3
      %p158 = scmp.ne.s32.totalorder %s153, %s155
      %p159 = scmp.eq.s32.totalorder %s16, 0
      %p160 = por %p158, %p159
      %p161 = scmp.ne.s32.totalorder %s153, %s155
      %p162 = scmp.eq.s32.totalorder %s21, 3
      %p163 = por %p161, %p162
      %p164 = scmp.ne.s32.totalorder %s155, %s156
      %p165 = scmp.eq.s32.totalorder %s21, 0
      %p166 = por %p164, %p165
      %p167 = scmp.ne.s32.totalorder %s155, %s156
      %p168 = scmp.eq.s32.totalorder %s22, 3
      %p169 = por %p167, %p168
      %p171 = scmp.ne.s32.totalorder %s156, %s170
      %p172 = scmp.eq.s32.totalorder %s22, 0
      %p173 = por %p171, %p172
      %s175 = sadd.s32 %s174, 1
      %p178 = scmp.eq.s32.totalorder %s16, 3
      %p179 = scmp.ne.s32.totalorder %s174, %s176
      %p180 = scmp.eq.s32.totalorder %s16, 0
      %p181 = por %p179, %p180
      %p182 = scmp.ne.s32.totalorder %s174, %s176
      %p183 = scmp.eq.s32.totalorder %s21, 3
      %p184 = por %p182, %p183
      %p185 = scmp.ne.s32.totalorder %s176, %s177
      %p186 = scmp.eq.s32.totalorder %s21, 0
      %p187 = por %p185, %p186
      %p188 = scmp.ne.s32.totalorder %s176, %s177
      %p189 = scmp.eq.s32.totalorder %s22, 3
      %p190 = por %p188, %p189
      %p192 = scmp.ne.s32.totalorder %s177, %s191
      %p193 = scmp.eq.s32.totalorder %s22, 0
      %p194 = por %p192, %p193
      %s195 = ssub.s32 %s23, %s35
      %s196 = ssub.s32 %s24, %s31
      %s197 = sor.u32 %s195, %s196
      %p198 = scmp.eq.s32.totalorder %s197, 0
      %s200 = sadd.s32 %s199, 1
      %s201 = scalar_select %p198, %s199, %s200
      %p204 = pneg %p198
      %p205 = scmp.eq.s32.totalorder %s16, 3
      %p206 = por %p204, %p205
      %p207 = scmp.ne.s32.totalorder %s199, %s202
      %p208 = scmp.eq.s32.totalorder %s16, 0
      %p209 = por %p207, %p208
      %p210 = scmp.ne.s32.totalorder %s199, %s202
      %p211 = scmp.eq.s32.totalorder %s21, 3
      %p212 = por %p210, %p211
      %p213 = scmp.ne.s32.totalorder %s202, %s203
      %p214 = scmp.eq.s32.totalorder %s21, 0
      %p215 = por %p213, %p214
      %p216 = scmp.ne.s32.totalorder %s202, %s203
      %p217 = scmp.eq.s32.totalorder %s22, 3
      %p218 = por %p216, %p217
      %p220 = scmp.ne.s32.totalorder %s203, %s219
      %p221 = scmp.eq.s32.totalorder %s22, 0
      %p222 = por %p220, %p221
      %p223 = scmp.le.s32.totalorder 1, %s16
      %p224 = scmp.lt.s32.totalorder %s16, 5
      %p225 = pnand %p223, %p224
      %p226 = pneg %p225
      // Predicated region
      $region9: #{tpu_custom_call.1} parent=5 // pred_check
        _
      $region10: #{tpu_custom_call.1} parent=5 // pred_check_branch
        %228 = sbr.rel (%p225) target = $region12
      $region11: #{tpu_custom_call.1} parent=5 // pred_region
        %s229 = ssub.s32 %s16, 1
        // Predicated region
        $region13: #{tpu_custom_call.1} parent=11 // pred_check
          %p230 = pneg %p103
        $region14: #{tpu_custom_call.1} parent=11 // pred_check_branch
          %232 = sbr.rel (%p230) target = $region16
        $region15: #{tpu_custom_call.1} parent=11 // pred_region
          _
        $region16: #{tpu_custom_call.1} parent=11 // pred_fallthru
          _
        // Predicated region
        $region17: #{tpu_custom_call.1} parent=11 // pred_check
          %p233 = pneg %p124
        $region18: #{tpu_custom_call.1} parent=11 // pred_check_branch
          %235 = sbr.rel (%p233) target = $region20
        $region19: #{tpu_custom_call.1} parent=11 // pred_region
          _
        $region20: #{tpu_custom_call.1} parent=11 // pred_fallthru
          _
        // Predicated region
        $region21: #{tpu_custom_call.1} parent=11 // pred_check
          %p236 = pneg %p145
        $region22: #{tpu_custom_call.1} parent=11 // pred_check_branch
          %238 = sbr.rel (%p236) target = $region24
        $region23: #{tpu_custom_call.1} parent=11 // pred_region
          _
        $region24: #{tpu_custom_call.1} parent=11 // pred_fallthru
          _
        // Predicated region
        $region25: #{tpu_custom_call.1} parent=11 // pred_check
          %p239 = pneg %p166
        $region26: #{tpu_custom_call.1} parent=11 // pred_check_branch
          %241 = sbr.rel (%p239) target = $region28
        $region27: #{tpu_custom_call.1} parent=11 // pred_region
          _
        $region28: #{tpu_custom_call.1} parent=11 // pred_fallthru
          _
        // Predicated region
        $region29: #{tpu_custom_call.1} parent=11 // pred_check
          %p242 = pneg %p187
        $region30: #{tpu_custom_call.1} parent=11 // pred_check_branch
          %244 = sbr.rel (%p242) target = $region32
        $region31: #{tpu_custom_call.1} parent=11 // pred_region
          _
        $region32: #{tpu_custom_call.1} parent=11 // pred_fallthru
          _
      $region12: #{tpu_custom_call.1} parent=5 // pred_fallthru
        _
      %p245 = scmp.lt.s32.totalorder %s16, 4
      // Predicated region
      $region33: #{tpu_custom_call.1} parent=5 // pred_check
        %p246 = pneg %p245
      $region34: #{tpu_custom_call.1} parent=5 // pred_check_branch
        %248 = sbr.rel (%p246) target = $region36
      $region35: #{tpu_custom_call.1} parent=5 // pred_region
        // Predicated region
        $region37: #{tpu_custom_call.1} parent=35 // pred_check
          %p249 = pneg %p50
        $region38: #{tpu_custom_call.1} parent=35 // pred_check_branch
          %251 = sbr.rel (%p249) target = $region40
        $region39: #{tpu_custom_call.1} parent=35 // pred_region
          %p252 = scmp.lt.s32.totalorder %s23, 1
          %s253 = scalar_select %p252, %s23, 1
          %p254 = scmp.lt.s32.totalorder %s24, 1
          %s255 = scalar_select %p254, %s24, 1
          %s256 = smul.addr %s255, 2
          %s257 = smul.addr %s253, 4
          %s258 = sadd.s32 %s256, %s257
          %s259 = smul.addr %s258, 4
          %s260 = scalar_lea.vmem %s0, %s259
        $region40: #{tpu_custom_call.1} parent=35 // pred_fallthru
          _
        // Predicated region
        $region41: #{tpu_custom_call.1} parent=35 // pred_check
          %p261 = pneg %p76
        $region42: #{tpu_custom_call.1} parent=35 // pred_check_branch
          %263 = sbr.rel (%p261) target = $region44
        $region43: #{tpu_custom_call.1} parent=35 // pred_region
          %p264 = scmp.lt.s32.totalorder %s23, 1
          %s265 = scalar_select %p264, %s23, 1
          %s266 = smul.addr %s265, 9
          %s267 = smul.addr %s266, 8
          %s268 = scalar_lea.vmem %s1, %s267
        $region44: #{tpu_custom_call.1} parent=35 // pred_fallthru
          _
      $region36: #{tpu_custom_call.1} parent=5 // pred_fallthru
        _
      %p269 = scmp.le.s32.totalorder 1, %s16
      %p270 = scmp.lt.s32.totalorder %s16, 5
      %p271 = pnand %p269, %p270
      %p272 = pneg %p271
      // Predicated region
      $region45: #{tpu_custom_call.1} parent=5 // pred_check
        _
      $region46: #{tpu_custom_call.1} parent=5 // pred_check_branch
        %274 = sbr.rel (%p271) target = $region48
      $region47: #{tpu_custom_call.1} parent=5 // pred_region
        %s275 = ssub.s32 %s16, 1
        %p276 = scmp.lt.s32.totalorder %s25, 1
        %s277 = scalar_select %p276, %s25, 1
        %p278 = scmp.lt.s32.totalorder %s26, 1
        %s279 = scalar_select %p278, %s26, 1
        %s280 = smul.addr %s279, 2
        %s281 = smul.addr %s277, 4
        %s282 = sadd.s32 %s280, %s281
        %s283 = smul.addr %s282, 4
        %s284 = scalar_lea.vmem %s0, %s283
        %p285 = pneg %p56
        %p286 = pneg %p53
        %p287 = scmp.lt.s32.totalorder %s25, 1
        %s288 = scalar_select %p287, %s25, 1
        %s289 = smul.addr %s288, 9
        %s290 = smul.addr %s289, 8
        %s291 = scalar_lea.vmem %s1, %s290
        %p292 = pneg %p82
        %p293 = pneg %p79
        %p294 = pneg %p103
        %p295 = pneg %p100
        %p296 = pneg %p124
        %p297 = pneg %p121
        %p298 = pneg %p145
        %p299 = pneg %p142
        %p300 = pneg %p166
        %p301 = pneg %p163
        %p302 = pneg %p187
        %p303 = pneg %p184
        %p304 = pneg %p215
        %p305 = pneg %p212
        %s306 = sand.u32 %s202, 1
        %s307 = scalar_lea.sflag [#allocation3], %s306
        %s308 = sand.u32 %s202, 1
        %s309 = smul.addr %s308, 8
        %s310 = scalar_lea.vmem [#allocation2], %s309
        %p311 = scmp.lt.s32.totalorder %s25, 1
        %s312 = scalar_select %p311, %s25, 1
        %p313 = scmp.lt.s32.totalorder %s26, 1
        %s314 = scalar_select %p313, %s26, 1
        %s315 = smul.addr %s314, 2
        %s316 = smul.addr %s312, 4
        %s317 = sadd.s32 %s315, %s316
        %s318 = smul.addr %s317, 4
        %s319 = scalar_lea.vmem %s0, %s318
        %p320 = scmp.lt.s32.totalorder %s25, 1
        %s321 = scalar_select %p320, %s25, 1
        %s322 = smul.addr %s321, 9
        %s323 = smul.addr %s322, 8
        %s324 = scalar_lea.vmem %s1, %s323
        %v325 = vld [vmem:[%s319] sm:$0xff]
        %v326 = vld [vmem:[%s324] sm:$0xff]
        %v327 = vld [vmem:[%s324 + $0x8] sm:$0xff]
        %v328 = vld [vmem:[%s324 + $0x10] sm:$0xff]
        %v329 = vld [vmem:[%s324 + $0x18] sm:$0xff]
        %v330 = vld [vmem:[%s324 + $0x20] sm:$0xff]
        %v331 = vld [vmem:[%s324 + $0x28] sm:$0xff]
        %v332 = vld [vmem:[%s324 + $0x30] sm:$0xff]
        %v333 = vld [vmem:[%s324 + $0x38] sm:$0xff]
        %v334 = vld [vmem:[%s324 + $0x40] sm:$0xff]
        %v335 = vlaneseq
        %v336 = vand.u32 %v335, 127
        %v337 = vcvt.s32.f32 %v336
        %v338 = vrcp.pop 16.0
        %v339 = vmul.f32 16.0, %v338
        %v340 = vsub.f32 1.0, %v339
        %v341 = vmul.f32 %v338, %v340
        %v342 = vadd.f32 %v338, %v341
        %vm343 = vweird.f32 %v338
        %v344 = vsel %vm343, %v338, %v342
        %v345 = vmul.f32 %v337, %v344
        %v346 = vfloor.f32 %v345
        %v347 = vmul.f32 %v346, 16.0
        %v348 = vsub.f32 %v337, %v347
        %s349 = smul.u32 %s26, 8
        %s350 = scvt.s32.f32 %s349
        %v351 = vstv %s350
        %v352 = vadd.f32 %v346, %v351
        %vm353 = vcmp.ge.f32.partialorder %v348, 1.0
        %v354 = vsel %vm353, 1, 0
        %v355 = vcvt.s32.f32 %v354
        %vm356 = vcmp.lt.f32.partialorder %v348, 15.0
        %v357 = vsel %vm356, 1, 0
        %v358 = vcvt.s32.f32 %v357
        %v359 = vmul.f32 %v325, %v355
        %361 = vrot.lane.b32.xlu0 %v358, 2
        %v362 = vpop.permute.xlu0 %361
        %v363 = vrot.slane %v362, 4
        %vm364 = vcmask 15360
        %v365 = vsel %vm364, %v363, %v362
        %v367 = vmul.f32 %v325, %v365
        %369 = vrot.lane.b32.xlu0 %v355, 16
        %v370 = vpop.permute.xlu0 %369
        %v371 = vrot.slane %v370, 4
        %vm372 = vcmask 130048
        %v373 = vsel %vm372, %v371, %v370
        %v375 = vmul.f32 %v325, %v373
        %376 = vrot.lane.b32.xlu0 %v358, 18
        %v377 = vpop.permute.xlu0 %376
        %v378 = vrot.slane %v377, 4
        %vm379 = vcmask 146432
        %v380 = vsel %vm379, %v378, %v377
        %v382 = vmul.f32 %v325, %v380
        %383 = vrot.lane.b32.xlu0 %v355, 32
        %v384 = vpop.permute.xlu0 %383
        %v385 = vrot.slane %v384, 4
        %vm386 = vcmask 261120
        %v387 = vsel %vm386, %v385, %v384
        %v389 = vmul.f32 %v325, %v387
        %390 = vrot.lane.b32.xlu0 %v358, 34
        %v391 = vpop.permute.xlu0 %390
        %v392 = vrot.slane %v391, 4
        %vm393 = vcmask 277504
        %v394 = vsel %vm393, %v392, %v391
        %v396 = vmul.f32 %v325, %v394
        %s398 = scalar_lea.vmem [#allocation1], 1
        %399 = vst [vmem:[%s398] ss:$2 sm:$0xff] %v325
        %v400 = vld.sshfl [vmem:[#allocation1] sm:$0xff pattern:$0x75316420]
        %v401 = vld.sshfl [vmem:[#allocation1 + $0x8] sm:$0xff pattern:$0x75316420]
        %402 = vrot.lane.b32.xlu0 %v400, 127
        %v403 = vpop.permute.xlu0 %402
        %404 = vrot.lane.b32.xlu0 %v401, 127
        %v405 = vpop.permute.xlu0 %404
        %vm406 = vcmask 1039360
        %v407 = vsel %vm406, %v403, %v405
        %410 = vst [vmem:[#allocation1] ss:$2 sm:$0xff] %v367
        %v411 = vld.sshfl [vmem:[#allocation1] sm:$0xff pattern:$0x75316420]
        %v412 = vld.sshfl [vmem:[#allocation1 + $0x8] sm:$0xff pattern:$0x75316420]
        %413 = vrot.lane.b32.xlu0 %v411, 126
        %v414 = vpop.permute.xlu0 %413
        %415 = vrot.lane.b32.xlu0 %v412, 126
        %v416 = vpop.permute.xlu0 %415
        %vm417 = vcmask 1031168
        %v418 = vsel %vm417, %v414, %v416
        %s421 = scalar_lea.vmem [#allocation1], 1
        %422 = vst [vmem:[%s421] ss:$2 sm:$0xff] %v375
        %v423 = vld.sshfl [vmem:[#allocation1] sm:$0xff pattern:$0x75316420]
        %v424 = vld.sshfl [vmem:[#allocation1 + $0x8] sm:$0xff pattern:$0x75316420]
        %425 = vrot.lane.b32.xlu0 %v423, 112
        %v426 = vpop.permute.xlu0 %425
        %427 = vrot.lane.b32.xlu0 %v424, 112
        %v428 = vpop.permute.xlu0 %427
        %vm429 = vcmask 916480
        %v430 = vsel %vm429, %v426, %v428
        %432 = vst [vmem:[#allocation1] ss:$2 sm:$0xff] %v325
        %v433 = vld.sshfl [vmem:[#allocation1] sm:$0xff pattern:$0x75316420]
        %v434 = vld.sshfl [vmem:[#allocation1 + $0x8] sm:$0xff pattern:$0x75316420]
        %435 = vrot.lane.b32.xlu0 %v433, 111
        %v436 = vpop.permute.xlu0 %435
        %437 = vrot.lane.b32.xlu0 %v434, 111
        %v438 = vpop.permute.xlu0 %437
        %vm439 = vcmask 908288
        %v440 = vsel %vm439, %v436, %v438
        %s443 = scalar_lea.vmem [#allocation1], 1
        %444 = vst [vmem:[%s443] ss:$2 sm:$0xff] %v382
        %v445 = vld.sshfl [vmem:[#allocation1] sm:$0xff pattern:$0x75316420]
        %v446 = vld.sshfl [vmem:[#allocation1 + $0x8] sm:$0xff pattern:$0x75316420]
        %447 = vrot.lane.b32.xlu0 %v445, 110
        %v448 = vpop.permute.xlu0 %447
        %449 = vrot.lane.b32.xlu0 %v446, 110
        %v450 = vpop.permute.xlu0 %449
        %vm451 = vcmask 900096
        %v452 = vsel %vm451, %v448, %v450
        %455 = vst [vmem:[#allocation1] ss:$2 sm:$0xff] %v389
        %v456 = vld.sshfl [vmem:[#allocation1] sm:$0xff pattern:$0x75316420]
        %v457 = vld.sshfl [vmem:[#allocation1 + $0x8] sm:$0xff pattern:$0x75316420]
        %458 = vrot.lane.b32.xlu0 %v456, 96
        %v459 = vpop.permute.xlu0 %458
        %460 = vrot.lane.b32.xlu0 %v457, 96
        %v461 = vpop.permute.xlu0 %460
        %vm462 = vcmask 785408
        %v463 = vsel %vm462, %v459, %v461
        %s465 = scalar_lea.vmem [#allocation1], 1
        %466 = vst [vmem:[%s465] ss:$2 sm:$0xff] %v325
        %v467 = vld.sshfl [vmem:[#allocation1] sm:$0xff pattern:$0x75316420]
        %v468 = vld.sshfl [vmem:[#allocation1 + $0x8] sm:$0xff pattern:$0x75316420]
        %469 = vrot.lane.b32.xlu0 %v467, 95
        %v470 = vpop.permute.xlu0 %469
        %471 = vrot.lane.b32.xlu0 %v468, 95
        %v472 = vpop.permute.xlu0 %471
        %vm473 = vcmask 777216
        %v474 = vsel %vm473, %v470, %v472
        %477 = vst [vmem:[#allocation1] ss:$2 sm:$0xff] %v396
        %v478 = vld.sshfl [vmem:[#allocation1] sm:$0xff pattern:$0x75316420]
        %v479 = vld.sshfl [vmem:[#allocation1 + $0x8] sm:$0xff pattern:$0x75316420]
        %480 = vrot.lane.b32.xlu0 %v478, 94
        %v481 = vpop.permute.xlu0 %480
        %482 = vrot.lane.b32.xlu0 %v479, 94
        %v483 = vpop.permute.xlu0 %482
        %vm484 = vcmask 769024
        %v485 = vsel %vm484, %v481, %v483
        %vm486 = vcmask 1043456
        %v487 = vsel %vm486, %v359, %v407
        %v488 = vsel %vm486, %v418, %v430
        %v489 = vsel %vm486, %v440, %v452
        %v490 = vsel %vm486, %v463, %v474
        %v491 = vld [vmem:[%s2] sm:$0xff]
        %v492 = vld [vmem:[%s2 + $0x8] sm:$0xff]
        %v493 = vld [vmem:[%s2 + $0x10] sm:$0xff]
        %v494 = vld [vmem:[%s2 + $0x18] sm:$0x7]
        %v495 = vld [vmem:[%s3] sm:$0xff]
        %v496 = vld [vmem:[%s3 + $0x8] sm:$0xff]
        %v497 = vld [vmem:[%s3 + $0x10] sm:$0xff]
        %v498 = vld [vmem:[%s3 + $0x18] sm:$0x7]
        %500 = vset.pattern.permute.xlu0 0
        %501 = vperm.xlu0 %500, %v495
        %v502 = vpop.permute.xlu0 %501
        %505 = vset.pattern.permute.xlu0 0
        %506 = vperm.xlu0 %505, %v496
        %v507 = vpop.permute.xlu0 %506
        %510 = vset.pattern.permute.xlu0 0
        %511 = vperm.xlu0 %510, %v497
        %v512 = vpop.permute.xlu0 %511
        %515 = vset.pattern.permute.xlu0 0
        %516 = vperm.xlu0 %515, %v498
        %v517 = vpop.permute.xlu0 %516
        %vm519 = vcmask 293888
        %v521 = vsel %vm519, %v491, 0
        %v524 = vsel %vm519, %v492, 0
        %v527 = vsel %vm519, %v493, 0
        %v530 = vsel %vm519, %v494, 0
        %v532 = vsel %vm486, %v485, 0
        %534 = vmatpush.msra.mxu0 0.0
        %535 = vmatpush.msra.mxu0 0.0
        %536 = vmatpush.msra.mxu0 0.0
        %537 = vmatpush.msra.mxu0 0.0
        %538 = vmatpush.msra.mxu0 0.0
        %539 = vmatpush.msra.mxu0 0.0
        %540 = vmatpush.msra.mxu0 0.0
        %541 = vmatpush.msra.mxu0 0.0
        %542 = vmatpush.msra.mxu0 0.0
        %543 = vmatpush.msra.mxu0 0.0
        %544 = vmatpush.msra.mxu0 0.0
        %545 = vmatpush.msra.mxu0 %v532
        %546 = vmatpush.msra.mxu0 %v490
        %547 = vmatpush.msra.mxu0 %v489
        %548 = vmatpush.msra.mxu0 %v488
        %549 = vmatpush.msra.mxu0 %v487
        %550 = vmatmul.f32.gmra.mxu0 %v521
        %v551 = vpop.f32.mrf.mxu0
        %v552 = vadd.f32 %v502, %v551
        %553 = vmatmul.f32.gmra.mxu0 %v524
        %v554 = vpop.f32.mrf.mxu0
        %v555 = vadd.f32 %v507, %v554
        %556 = vmatmul.f32.gmra.mxu0 %v527
        %v557 = vpop.f32.mrf.mxu0
        %v558 = vadd.f32 %v512, %v557
        %559 = vmatmul.f32.gmra.mxu0 %v530
        %v560 = vpop.f32.mrf.mxu0
        %v561 = vadd.f32 %v517, %v560
        %562 = vdwg.mxu0
        %v563 = vxor.u32 %v558, 2147483648
        %v564 = vxor.u32 %v561, 2147483648
        %v565 = vmul.f32 %v563, 1.442695
        %v566 = vpow.pop %v565
        %v567 = vmul.f32 %v564, 1.442695
        %v568 = vpow.pop %v567
        %v569 = vadd.f32 %v566, 1.0
        %v570 = vadd.f32 %v568, 1.0
        %v571 = vrcp.pop %v569
        %v572 = vmul.f32 %v569, %v571
        %v573 = vsub.f32 1.0, %v572
        %v574 = vmul.f32 %v571, %v573
        %v575 = vadd.f32 %v571, %v574
        %vm576 = vweird.f32 %v569
        %vm577 = vweird.f32 %v571
        %vm578 = vmor %vm576, %vm577
        %v579 = vsel %vm578, %v571, %v575
        %v580 = vand.u32 2147483647, %v569
        %vm581 = vcmp.eq.f32.partialorder %v580, 8.507059e+37
        %v582 = vand.u32 %v569, 2147483648
        %v583 = vor.u32 1.1754944e-38, %v582
        %v584 = vsel %vm581, %v583, %v579
        %v585 = vmul.f32 1.0, %v584
        %v586 = vrcp.pop %v570
        %v587 = vmul.f32 %v570, %v586
        %v588 = vsub.f32 1.0, %v587
        %v589 = vmul.f32 %v586, %v588
        %v590 = vadd.f32 %v586, %v589
        %vm591 = vweird.f32 %v570
        %vm592 = vweird.f32 %v586
        %vm593 = vmor %vm591, %vm592
        %v594 = vsel %vm593, %v586, %v590
        %v595 = vand.u32 2147483647, %v570
        %vm596 = vcmp.eq.f32.partialorder %v595, 8.507059e+37
        %v597 = vand.u32 %v570, 2147483648
        %v598 = vor.u32 1.1754944e-38, %v597
        %v599 = vsel %vm596, %v598, %v594
        %v600 = vmul.f32 1.0, %v599
        %v601 = vlaneseq
        %v602 = vshrl.u32 %v601, 7
        %v603 = vadd.s32 %v602, 8
        %v604 = vadd.s32 %v602, 16
        %v605 = vadd.f32 %v352, -1.0
        %v606 = vadd.f32 %v605, %v552
        %v607 = vadd.f32 %v348, -1.0
        %v608 = vadd.f32 %v607, %v552
        %vm609 = vcmp.gt.f32.partialorder %v606, -1.0
        %vm610 = vcmp.gt.f32.partialorder %v608, -1.0
        %v611 = vsel %vm610, 1, 0
        %v612 = vrot.slane %v611, 1
        %vm613 = vcmp.ne.s32.totalorder %v612, 0
        %vm614 = vmand %vm609, %vm613
        %vm615 = vcmp.lt.f32.partialorder %v606, 16.0
        %vm616 = vmand %vm614, %vm615
        %vm617 = vcmp.lt.f32.partialorder %v608, 16.0
        %v618 = vsel %vm617, 1, 0
        %v619 = vrot.slane %v618, 1
        %vm620 = vcmp.ne.s32.totalorder %v619, 0
        %vm621 = vmand %vm616, %vm620
        %v622 = vsel %vm621, 1, 0
        %v623 = vcvt.s32.f32 %v622
        %v625 = vrot.slane %v585, 2
        %v627 = vmul.f32 %v623, %v625
        %v628 = vfloor.f32 %v606
        %v629 = vfloor.f32 %v608
        %v630 = vsub.f32 %v606, %v628
        %v631 = vsub.f32 %v608, %v629
        %v632 = vcvt.f32.s32.to.zero.pseudo %v628
        %v633 = vadd.s32 %v632, 1
        %vm634 = vcmp.gt.s32.totalorder %v633, 0
        %v635 = vsel %vm634, %v633, 0
        %vm636 = vcmp.lt.s32.totalorder %v635, 17
        %v637 = vsel %vm636, %v635, 17
        %v638 = vadd.s32 %v632, 2
        %vm639 = vcmp.gt.s32.totalorder %v638, 0
        %v640 = vsel %vm639, %v638, 0
        %vm641 = vcmp.lt.s32.totalorder %v640, 17
        %v642 = vsel %vm641, %v640, 17
        %v643 = vcvt.f32.s32.to.zero.pseudo %v629
        %v644 = vadd.s32 %v643, 1
        %vm645 = vcmp.gt.s32.totalorder %v644, 0
        %v646 = vsel %vm645, %v644, 0
        %vm647 = vcmp.lt.s32.totalorder %v646, 17
        %v648 = vsel %vm647, %v646, 17
        %v649 = vadd.s32 %v643, 2
        %vm650 = vcmp.gt.s32.totalorder %v649, 0
        %v651 = vsel %vm650, %v649, 0
        %vm652 = vcmp.lt.s32.totalorder %v651, 17
        %v653 = vsel %vm652, %v651, 17
        %v654 = vperm.slane %v648, 1
        %vm655 = vcmp.eq.s32.totalorder %v602, %v654
        %vm656 = vcmp.eq.s32.totalorder %v603, %v654
        %vm657 = vcmp.eq.s32.totalorder %v604, %v654
        %v658 = vsub.f32 1.0, %v631
        %v659 = vperm.slane %v658, 1
        %v660 = vsel %vm655, %v659, 0.0
        %v661 = vsel %vm656, %v659, 0.0
        %v662 = vsel %vm657, %v659, 0.0
        %v663 = vperm.slane %v653, 1
        %vm664 = vcmp.eq.s32.totalorder %v602, %v663
        %vm665 = vcmp.eq.s32.totalorder %v603, %v663
        %vm666 = vcmp.eq.s32.totalorder %v604, %v663
        %v667 = vperm.slane %v631, 1
        %v668 = vsel %vm664, %v667, 0.0
        %v669 = vsel %vm665, %v667, 0.0
        %v670 = vsel %vm666, %v667, 0.0
        %v671 = vadd.f32 %v660, %v668
        %v672 = vadd.f32 %v661, %v669
        %v673 = vadd.f32 %v662, %v670
        %v675 = vsel %vm379, %v326, 0
        %v678 = vsel %vm379, %v327, 0
        %v681 = vsel %vm379, %v328, 0
        %v684 = vsel %vm379, %v329, 0
        %v687 = vsel %vm379, %v330, 0
        %v690 = vsel %vm379, %v331, 0
        %v693 = vsel %vm379, %v332, 0
        %v696 = vsel %vm379, %v333, 0
        %v699 = vsel %vm379, %v334, 0
        %vm701 = vcmask 1041408
        %v703 = vsel %vm701, %v673, 0
        %705 = vmatpush.msra.mxu0 0.0
        %706 = vmatpush.msra.mxu0 0.0
        %707 = vmatpush.msra.mxu0 0.0
        %708 = vmatpush.msra.mxu0 0.0
        %709 = vmatpush.msra.mxu0 0.0
        %710 = vmatpush.msra.mxu0 0.0
        %711 = vmatpush.msra.mxu0 0.0
        %712 = vmatpush.msra.mxu0 0.0
        %713 = vmatpush.msra.mxu0 0.0
        %714 = vmatpush.msra.mxu0 0.0
        %715 = vmatpush.msra.mxu0 0.0
        %716 = vmatpush.msra.mxu0 0.0
        %717 = vmatpush.msra.mxu0 0.0
        %718 = vmatpush.msra.mxu0 %v703
        %719 = vmatpush.msra.mxu0 %v672
        %720 = vmatpush.msra.mxu0 %v671
        %721 = vmatmul.f32.gmra.mxu0 %v675
        %v722 = vpop.f32.mrf.mxu0
        %v723 = vadd.f32 0.0, %v722
        %724 = vmatmul.f32.gmra.mxu0 %v678
        %v725 = vpop.f32.mrf.mxu0
        %v726 = vadd.f32 0.0, %v725
        %727 = vmatmul.f32.gmra.mxu0 %v681
        %v728 = vpop.f32.mrf.mxu0
        %v729 = vadd.f32 0.0, %v728
        %730 = vmatmul.f32.gmra.mxu0 %v684
        %v731 = vpop.f32.mrf.mxu0
        %v732 = vadd.f32 0.0, %v731
        %733 = vmatmul.f32.gmra.mxu0 %v687
        %v734 = vpop.f32.mrf.mxu0
        %v735 = vadd.f32 0.0, %v734
        %736 = vmatmul.f32.gmra.mxu0 %v690
        %v737 = vpop.f32.mrf.mxu0
        %v738 = vadd.f32 0.0, %v737
        %739 = vmatmul.f32.gmra.mxu0 %v693
        %v740 = vpop.f32.mrf.mxu0
        %v741 = vadd.f32 0.0, %v740
        %742 = vmatmul.f32.gmra.mxu0 %v696
        %v743 = vpop.f32.mrf.mxu0
        %v744 = vadd.f32 0.0, %v743
        %745 = vmatmul.f32.gmra.mxu0 %v699
        %v746 = vpop.f32.mrf.mxu0
        %v747 = vadd.f32 0.0, %v746
        %748 = vdwg.mxu0
        %v749 = vperm.slane %v637, 0
        %vm750 = vcmp.eq.s32.totalorder %v602, %v749
        %vm751 = vcmp.eq.s32.totalorder %v603, %v749
        %vm752 = vcmp.eq.s32.totalorder %v604, %v749
        %v753 = vsub.f32 1.0, %v630
        %v754 = vperm.slane %v753, 0
        %v755 = vsel %vm750, %v754, 0.0
        %v756 = vsel %vm751, %v754, 0.0
        %v757 = vsel %vm752, %v754, 0.0
        %v758 = vperm.slane %v642, 0
        %vm759 = vcmp.eq.s32.totalorder %v602, %v758
        %vm760 = vcmp.eq.s32.totalorder %v603, %v758
        %vm761 = vcmp.eq.s32.totalorder %v604, %v758
        %v762 = vperm.slane %v630, 0
        %v763 = vsel %vm759, %v762, 0.0
        %v764 = vsel %vm760, %v762, 0.0
        %v765 = vsel %vm761, %v762, 0.0
        %v766 = vadd.f32 %v755, %v763
        %v767 = vadd.f32 %v756, %v764
        %v768 = vadd.f32 %v757, %v765
        %v769 = vperm.slane %v627, 0
        %v770 = vmul.f32 %v766, %v769
        %v771 = vmul.f32 %v767, %v769
        %v772 = vmul.f32 %v768, %v769
        %v776 = vrot.slane %v770, 6
        %v777 = vrot.slane %v771, 6
        %v778 = vsel %vm701, %v776, %v777
        %v779 = vrot.slane %v772, 6
        %v780 = vsel %vm701, %v777, %v779
        %v784 = vrot.slane %v770, 4
        %v785 = vrot.slane %v771, 4
        %v786 = vsel %vm486, %v784, %v785
        %v787 = vrot.slane %v772, 4
        %v788 = vsel %vm486, %v785, %v787
        %vm792 = vcmask 1045504
        %v793 = vrot.slane %v770, 2
        %v794 = vrot.slane %v771, 2
        %v795 = vsel %vm792, %v793, %v794
        %v796 = vrot.slane %v772, 2
        %v797 = vsel %vm792, %v794, %v796
        %v801 = vsel %vm701, %v772, %v776
        %v802 = vsel %vm486, %v780, %v784
        %v803 = vsel %vm792, %v788, %v793
        %v804 = vld [vmem:[%s4] sm:$0xff]
        %v805 = vmul.f32 %v723, %v770
        %v806 = vmul.f32 %v726, %v771
        %v807 = vmul.f32 %v729, %v801
        %v808 = vmul.f32 %v732, %v778
        %v809 = vmul.f32 %v735, %v802
        %v810 = vmul.f32 %v738, %v786
        %v811 = vmul.f32 %v741, %v803
        %v812 = vmul.f32 %v744, %v795
        %v813 = vmul.f32 %v747, %v797
        %v814 = vadd.f32 %v348, 0.0
        %v815 = vadd.f32 %v814, %v552
        %vm816 = vcmp.gt.f32.partialorder %v815, -1.0
        %v817 = vsel %vm816, 1, 0
        %v818 = vrot.slane %v817, 1
        %vm819 = vcmp.ne.s32.totalorder %v818, 0
        %vm820 = vmand %vm609, %vm819
        %vm821 = vmand %vm820, %vm615
        %vm822 = vcmp.lt.f32.partialorder %v815, 16.0
        %v823 = vsel %vm822, 1, 0
        %v824 = vrot.slane %v823, 1
        %vm825 = vcmp.ne.s32.totalorder %v824, 0
        %vm826 = vmand %vm821, %vm825
        %v827 = vsel %vm826, 1, 0
        %v828 = vcvt.s32.f32 %v827
        %v829 = vrot.slane %v585, 1
        %v831 = vmul.f32 %v828, %v829
        %v832 = vfloor.f32 %v815
        %v833 = vsub.f32 %v815, %v832
        %v834 = vcvt.f32.s32.to.zero.pseudo %v832
        %v835 = vadd.s32 %v834, 1
        %vm836 = vcmp.gt.s32.totalorder %v835, 0
        %v837 = vsel %vm836, %v835, 0
        %vm838 = vcmp.lt.s32.totalorder %v837, 17
        %v839 = vsel %vm838, %v837, 17
        %v840 = vadd.s32 %v834, 2
        %vm841 = vcmp.gt.s32.totalorder %v840, 0
        %v842 = vsel %vm841, %v840, 0
        %vm843 = vcmp.lt.s32.totalorder %v842, 17
        %v844 = vsel %vm843, %v842, 17
        %v845 = vperm.slane %v839, 3
        %vm846 = vcmp.eq.s32.totalorder %v602, %v845
        %vm847 = vcmp.eq.s32.totalorder %v603, %v845
        %vm848 = vcmp.eq.s32.totalorder %v604, %v845
        %v849 = vsub.f32 1.0, %v833
        %v850 = vperm.slane %v849, 3
        %v851 = vsel %vm846, %v850, 0.0
        %v852 = vsel %vm847, %v850, 0.0
        %v853 = vsel %vm848, %v850, 0.0
        %v854 = vperm.slane %v844, 3
        %vm855 = vcmp.eq.s32.totalorder %v602, %v854
        %vm856 = vcmp.eq.s32.totalorder %v603, %v854
        %vm857 = vcmp.eq.s32.totalorder %v604, %v854
        %v858 = vperm.slane %v833, 3
        %v859 = vsel %vm855, %v858, 0.0
        %v860 = vsel %vm856, %v858, 0.0
        %v861 = vsel %vm857, %v858, 0.0
        %v862 = vadd.f32 %v851, %v859
        %v863 = vadd.f32 %v852, %v860
        %v864 = vadd.f32 %v853, %v861
        %v866 = vsel %vm701, %v864, 0
        %868 = vmatpush.msra.mxu0 0.0
        %869 = vmatpush.msra.mxu0 0.0
        %870 = vmatpush.msra.mxu0 0.0
        %871 = vmatpush.msra.mxu0 0.0
        %872 = vmatpush.msra.mxu0 0.0
        %873 = vmatpush.msra.mxu0 0.0
        %874 = vmatpush.msra.mxu0 0.0
        %875 = vmatpush.msra.mxu0 0.0
        %876 = vmatpush.msra.mxu0 0.0
        %877 = vmatpush.msra.mxu0 0.0
        %878 = vmatpush.msra.mxu0 0.0
        %879 = vmatpush.msra.mxu0 0.0
        %880 = vmatpush.msra.mxu0 0.0
        %881 = vmatpush.msra.mxu0 %v866
        %882 = vmatpush.msra.mxu0 %v863
        %883 = vmatpush.msra.mxu0 %v862
        %884 = vmatmul.f32.gmra.mxu0 %v675
        %v885 = vpop.f32.mrf.mxu0
        %v886 = vadd.f32 0.0, %v885
        %887 = vmatmul.f32.gmra.mxu0 %v678
        %v888 = vpop.f32.mrf.mxu0
        %v889 = vadd.f32 0.0, %v888
        %890 = vmatmul.f32.gmra.mxu0 %v681
        %v891 = vpop.f32.mrf.mxu0
        %v892 = vadd.f32 0.0, %v891
        %893 = vmatmul.f32.gmra.mxu0 %v684
        %v894 = vpop.f32.mrf.mxu0
        %v895 = vadd.f32 0.0, %v894
        %896 = vmatmul.f32.gmra.mxu0 %v687
        %v897 = vpop.f32.mrf.mxu0
        %v898 = vadd.f32 0.0, %v897
        %899 = vmatmul.f32.gmra.mxu0 %v690
        %v900 = vpop.f32.mrf.mxu0
        %v901 = vadd.f32 0.0, %v900
        %902 = vmatmul.f32.gmra.mxu0 %v693
        %v903 = vpop.f32.mrf.mxu0
        %v904 = vadd.f32 0.0, %v903
        %905 = vmatmul.f32.gmra.mxu0 %v696
        %v906 = vpop.f32.mrf.mxu0
        %v907 = vadd.f32 0.0, %v906
        %908 = vmatmul.f32.gmra.mxu0 %v699
        %v909 = vpop.f32.mrf.mxu0
        %v910 = vadd.f32 0.0, %v909
        %911 = vdwg.mxu0
        %v912 = vperm.slane %v637, 2
        %vm913 = vcmp.eq.s32.totalorder %v602, %v912
        %vm914 = vcmp.eq.s32.totalorder %v603, %v912
        %vm915 = vcmp.eq.s32.totalorder %v604, %v912
        %v916 = vperm.slane %v753, 2
        %v917 = vsel %vm913, %v916, 0.0
        %v918 = vsel %vm914, %v916, 0.0
        %v919 = vsel %vm915, %v916, 0.0
        %v920 = vperm.slane %v642, 2
        %vm921 = vcmp.eq.s32.totalorder %v602, %v920
        %vm922 = vcmp.eq.s32.totalorder %v603, %v920
        %vm923 = vcmp.eq.s32.totalorder %v604, %v920
        %v924 = vperm.slane %v630, 2
        %v925 = vsel %vm921, %v924, 0.0
        %v926 = vsel %vm922, %v924, 0.0
        %v927 = vsel %vm923, %v924, 0.0
        %v928 = vadd.f32 %v917, %v925
        %v929 = vadd.f32 %v918, %v926
        %v930 = vadd.f32 %v919, %v927
        %v931 = vperm.slane %v831, 2
        %v932 = vmul.f32 %v928, %v931
        %v933 = vmul.f32 %v929, %v931
        %v934 = vmul.f32 %v930, %v931
        %v938 = vrot.slane %v932, 6
        %v939 = vrot.slane %v933, 6
        %v940 = vsel %vm701, %v938, %v939
        %v941 = vrot.slane %v934, 6
        %v942 = vsel %vm701, %v939, %v941
        %v946 = vrot.slane %v932, 4
        %v947 = vrot.slane %v933, 4
        %v948 = vsel %vm486, %v946, %v947
        %v949 = vrot.slane %v934, 4
        %v950 = vsel %vm486, %v947, %v949
        %v954 = vrot.slane %v932, 2
        %v955 = vrot.slane %v933, 2
        %v956 = vsel %vm792, %v954, %v955
        %v957 = vrot.slane %v934, 2
        %v958 = vsel %vm792, %v955, %v957
        %v962 = vsel %vm701, %v934, %v938
        %v963 = vsel %vm486, %v942, %v946
        %v964 = vsel %vm792, %v950, %v954
        %s965 = scalar_lea.vmem %s4, 8
        %v966 = vld [vmem:[%s965] sm:$0xff]
        %v967 = vmul.f32 %v886, %v932
        %v968 = vmul.f32 %v889, %v933
        %v969 = vmul.f32 %v892, %v962
        %v970 = vmul.f32 %v895, %v940
        %v971 = vmul.f32 %v898, %v963
        %v972 = vmul.f32 %v901, %v948
        %v973 = vmul.f32 %v904, %v964
        %v974 = vmul.f32 %v907, %v956
        %v975 = vmul.f32 %v910, %v958
        %vm976 = vcmask 588800
        %v978 = vsel %vm976, %v966, 0
        %980 = vmatpush.msra.mxu0 0.0
        %981 = vmatpush.msra.mxu0 0.0
        %982 = vmatpush.msra.mxu0 0.0
        %983 = vmatpush.msra.mxu0 0.0
        %984 = vmatpush.msra.mxu0 0.0
        %985 = vmatpush.msra.mxu0 0.0
        %986 = vmatpush.msra.mxu0 0.0
        %987 = vmatpush.msra.mxu0 %v975
        %988 = vmatpush.msra.mxu0 %v974
        %989 = vmatpush.msra.mxu0 %v973
        %990 = vmatpush.msra.mxu0 %v972
        %991 = vmatpush.msra.mxu0 %v971
        %992 = vmatpush.msra.mxu0 %v970
        %993 = vmatpush.msra.mxu0 %v969
        %994 = vmatpush.msra.mxu0 %v968
        %995 = vmatpush.msra.mxu0 %v967
        %996 = vmatmul.f32.gmra.mxu0 %v978
        %v997 = vpop.f32.mrf.mxu0
        %v998 = vadd.f32 0.0, %v997
        %999 = vdwg.mxu0
        %v1001 = vsel %vm976, %v804, 0
        %1003 = vmatpush.msra.mxu0 0.0
        %1004 = vmatpush.msra.mxu0 0.0
        %1005 = vmatpush.msra.mxu0 0.0
        %1006 = vmatpush.msra.mxu0 0.0
        %1007 = vmatpush.msra.mxu0 0.0
        %1008 = vmatpush.msra.mxu0 0.0
        %1009 = vmatpush.msra.mxu0 0.0
        %1010 = vmatpush.msra.mxu0 %v813
        %1011 = vmatpush.msra.mxu0 %v812
        %1012 = vmatpush.msra.mxu0 %v811
        %1013 = vmatpush.msra.mxu0 %v810
        %1014 = vmatpush.msra.mxu0 %v809
        %1015 = vmatpush.msra.mxu0 %v808
        %1016 = vmatpush.msra.mxu0 %v807
        %1017 = vmatpush.msra.mxu0 %v806
        %1018 = vmatpush.msra.mxu0 %v805
        %1019 = vmatmul.f32.gmra.mxu0 %v1001
        %v1020 = vpop.f32.mrf.mxu0
        %v1021 = vadd.f32 %v998, %v1020
        %1022 = vdwg.mxu0
        %v1023 = vadd.f32 %v348, 1.0
        %v1024 = vadd.f32 %v1023, %v552
        %vm1025 = vcmp.gt.f32.partialorder %v1024, -1.0
        %v1026 = vsel %vm1025, 1, 0
        %v1027 = vrot.slane %v1026, 1
        %vm1028 = vcmp.ne.s32.totalorder %v1027, 0
        %vm1029 = vmand %vm609, %vm1028
        %vm1030 = vmand %vm1029, %vm615
        %vm1031 = vcmp.lt.f32.partialorder %v1024, 16.0
        %v1032 = vsel %vm1031, 1, 0
        %v1033 = vrot.slane %v1032, 1
        %vm1034 = vcmp.ne.s32.totalorder %v1033, 0
        %vm1035 = vmand %vm1030, %vm1034
        %v1036 = vsel %vm1035, 1, 0
        %v1037 = vcvt.s32.f32 %v1036
        %v1038 = vmul.f32 %v1037, %v585
        %v1039 = vfloor.f32 %v1024
        %v1040 = vsub.f32 %v1024, %v1039
        %v1041 = vcvt.f32.s32.to.zero.pseudo %v1039
        %v1042 = vadd.s32 %v1041, 1
        %vm1043 = vcmp.gt.s32.totalorder %v1042, 0
        %v1044 = vsel %vm1043, %v1042, 0
        %vm1045 = vcmp.lt.s32.totalorder %v1044, 17
        %v1046 = vsel %vm1045, %v1044, 17
        %v1047 = vadd.s32 %v1041, 2
        %vm1048 = vcmp.gt.s32.totalorder %v1047, 0
        %v1049 = vsel %vm1048, %v1047, 0
        %vm1050 = vcmp.lt.s32.totalorder %v1049, 17
        %v1051 = vsel %vm1050, %v1049, 17
        %v1052 = vperm.slane %v1046, 5
        %vm1053 = vcmp.eq.s32.totalorder %v602, %v1052
        %vm1054 = vcmp.eq.s32.totalorder %v603, %v1052
        %vm1055 = vcmp.eq.s32.totalorder %v604, %v1052
        %v1056 = vsub.f32 1.0, %v1040
        %v1057 = vperm.slane %v1056, 5
        %v1058 = vsel %vm1053, %v1057, 0.0
        %v1059 = vsel %vm1054, %v1057, 0.0
        %v1060 = vsel %vm1055, %v1057, 0.0
        %v1061 = vperm.slane %v1051, 5
        %vm1062 = vcmp.eq.s32.totalorder %v602, %v1061
        %vm1063 = vcmp.eq.s32.totalorder %v603, %v1061
        %vm1064 = vcmp.eq.s32.totalorder %v604, %v1061
        %v1065 = vperm.slane %v1040, 5
        %v1066 = vsel %vm1062, %v1065, 0.0
        %v1067 = vsel %vm1063, %v1065, 0.0
        %v1068 = vsel %vm1064, %v1065, 0.0
        %v1069 = vadd.f32 %v1058, %v1066
        %v1070 = vadd.f32 %v1059, %v1067
        %v1071 = vadd.f32 %v1060, %v1068
        %v1073 = vsel %vm701, %v1071, 0
        %1075 = vmatpush.msra.mxu0 0.0
        %1076 = vmatpush.msra.mxu0 0.0
        %1077 = vmatpush.msra.mxu0 0.0
        %1078 = vmatpush.msra.mxu0 0.0
        %1079 = vmatpush.msra.mxu0 0.0
        %1080 = vmatpush.msra.mxu0 0.0
        %1081 = vmatpush.msra.mxu0 0.0
        %1082 = vmatpush.msra.mxu0 0.0
        %1083 = vmatpush.msra.mxu0 0.0
        %1084 = vmatpush.msra.mxu0 0.0
        %1085 = vmatpush.msra.mxu0 0.0
        %1086 = vmatpush.msra.mxu0 0.0
        %1087 = vmatpush.msra.mxu0 0.0
        %1088 = vmatpush.msra.mxu0 %v1073
        %1089 = vmatpush.msra.mxu0 %v1070
        %1090 = vmatpush.msra.mxu0 %v1069
        %1091 = vmatmul.f32.gmra.mxu0 %v675
        %v1092 = vpop.f32.mrf.mxu0
        %v1093 = vadd.f32 0.0, %v1092
        %1094 = vmatmul.f32.gmra.mxu0 %v678
        %v1095 = vpop.f32.mrf.mxu0
        %v1096 = vadd.f32 0.0, %v1095
        %1097 = vmatmul.f32.gmra.mxu0 %v681
        %v1098 = vpop.f32.mrf.mxu0
        %v1099 = vadd.f32 0.0, %v1098
        %1100 = vmatmul.f32.gmra.mxu0 %v684
        %v1101 = vpop.f32.mrf.mxu0
        %v1102 = vadd.f32 0.0, %v1101
        %1103 = vmatmul.f32.gmra.mxu0 %v687
        %v1104 = vpop.f32.mrf.mxu0
        %v1105 = vadd.f32 0.0, %v1104
        %1106 = vmatmul.f32.gmra.mxu0 %v690
        %v1107 = vpop.f32.mrf.mxu0
        %v1108 = vadd.f32 0.0, %v1107
        %1109 = vmatmul.f32.gmra.mxu0 %v693
        %v1110 = vpop.f32.mrf.mxu0
        %v1111 = vadd.f32 0.0, %v1110
        %1112 = vmatmul.f32.gmra.mxu0 %v696
        %v1113 = vpop.f32.mrf.mxu0
        %v1114 = vadd.f32 0.0, %v1113
        %1115 = vmatmul.f32.gmra.mxu0 %v699
        %v1116 = vpop.f32.mrf.mxu0
        %v1117 = vadd.f32 0.0, %v1116
        %1118 = vdwg.mxu0
        %v1119 = vperm.slane %v637, 4
        %vm1120 = vcmp.eq.s32.totalorder %v602, %v1119
        %vm1121 = vcmp.eq.s32.totalorder %v603, %v1119
        %vm1122 = vcmp.eq.s32.totalorder %v604, %v1119
        %v1123 = vperm.slane %v753, 4
        %v1124 = vsel %vm1120, %v1123, 0.0
        %v1125 = vsel %vm1121, %v1123, 0.0
        %v1126 = vsel %vm1122, %v1123, 0.0
        %v1127 = vperm.slane %v642, 4
        %vm1128 = vcmp.eq.s32.totalorder %v602, %v1127
        %vm1129 = vcmp.eq.s32.totalorder %v603, %v1127
        %vm1130 = vcmp.eq.s32.totalorder %v604, %v1127
        %v1131 = vperm.slane %v630, 4
        %v1132 = vsel %vm1128, %v1131, 0.0
        %v1133 = vsel %vm1129, %v1131, 0.0
        %v1134 = vsel %vm1130, %v1131, 0.0
        %v1135 = vadd.f32 %v1124, %v1132
        %v1136 = vadd.f32 %v1125, %v1133
        %v1137 = vadd.f32 %v1126, %v1134
        %v1138 = vperm.slane %v1038, 4
        %v1139 = vmul.f32 %v1135, %v1138
        %v1140 = vmul.f32 %v1136, %v1138
        %v1141 = vmul.f32 %v1137, %v1138
        %v1145 = vrot.slane %v1139, 6
        %v1146 = vrot.slane %v1140, 6
        %v1147 = vsel %vm701, %v1145, %v1146
        %v1148 = vrot.slane %v1141, 6
        %v1149 = vsel %vm701, %v1146, %v1148
        %v1153 = vrot.slane %v1139, 4
        %v1154 = vrot.slane %v1140, 4
        %v1155 = vsel %vm486, %v1153, %v1154
        %v1156 = vrot.slane %v1141, 4
        %v1157 = vsel %vm486, %v1154, %v1156
        %v1161 = vrot.slane %v1139, 2
        %v1162 = vrot.slane %v1140, 2
        %v1163 = vsel %vm792, %v1161, %v1162
        %v1164 = vrot.slane %v1141, 2
        %v1165 = vsel %vm792, %v1162, %v1164
        %v1169 = vsel %vm701, %v1141, %v1145
        %v1170 = vsel %vm486, %v1149, %v1153
        %v1171 = vsel %vm792, %v1157, %v1161
        %s1172 = scalar_lea.vmem %s4, 16
        %v1173 = vld [vmem:[%s1172] sm:$0xff]
        %v1174 = vmul.f32 %v1093, %v1139
        %v1175 = vmul.f32 %v1096, %v1140
        %v1176 = vmul.f32 %v1099, %v1169
        %v1177 = vmul.f32 %v1102, %v1147
        %v1178 = vmul.f32 %v1105, %v1170
        %v1179 = vmul.f32 %v1108, %v1155
        %v1180 = vmul.f32 %v1111, %v1171
        %v1181 = vmul.f32 %v1114, %v1163
        %v1182 = vmul.f32 %v1117, %v1165
        %v1184 = vsel %vm976, %v1173, 0
        %1186 = vmatpush.msra.mxu0 0.0
        %1187 = vmatpush.msra.mxu0 0.0
        %1188 = vmatpush.msra.mxu0 0.0
        %1189 = vmatpush.msra.mxu0 0.0
        %1190 = vmatpush.msra.mxu0 0.0
        %1191 = vmatpush.msra.mxu0 0.0
        %1192 = vmatpush.msra.mxu0 0.0
        %1193 = vmatpush.msra.mxu0 %v1182
        %1194 = vmatpush.msra.mxu0 %v1181
        %1195 = vmatpush.msra.mxu0 %v1180
        %1196 = vmatpush.msra.mxu0 %v1179
        %1197 = vmatpush.msra.mxu0 %v1178
        %1198 = vmatpush.msra.mxu0 %v1177
        %1199 = vmatpush.msra.mxu0 %v1176
        %1200 = vmatpush.msra.mxu0 %v1175
        %1201 = vmatpush.msra.mxu0 %v1174
        %1202 = vmatmul.f32.gmra.mxu0 %v1184
        %v1203 = vpop.f32.mrf.mxu0
        %v1204 = vadd.f32 0.0, %v1203
        %1205 = vdwg.mxu0
        %v1206 = vadd.f32 %v1021, %v1204
        %v1207 = vadd.f32 %v352, 0.0
        %v1208 = vadd.f32 %v1207, %v552
        %vm1209 = vcmp.gt.f32.partialorder %v1208, -1.0
        %vm1210 = vmand %vm1209, %vm613
        %vm1211 = vcmp.lt.f32.partialorder %v1208, 16.0
        %vm1212 = vmand %vm1210, %vm1211
        %vm1213 = vmand %vm1212, %vm620
        %v1214 = vsel %vm1213, 1, 0
        %v1215 = vcvt.s32.f32 %v1214
        %v1216 = vrot.slane %v585, 7
        %v1218 = vmul.f32 %v1215, %v1216
        %v1219 = vfloor.f32 %v1208
        %v1220 = vsub.f32 %v1208, %v1219
        %v1221 = vcvt.f32.s32.to.zero.pseudo %v1219
        %v1222 = vadd.s32 %v1221, 1
        %vm1223 = vcmp.gt.s32.totalorder %v1222, 0
        %v1224 = vsel %vm1223, %v1222, 0
        %vm1225 = vcmp.lt.s32.totalorder %v1224, 17
        %v1226 = vsel %vm1225, %v1224, 17
        %v1227 = vadd.s32 %v1221, 2
        %vm1228 = vcmp.gt.s32.totalorder %v1227, 0
        %v1229 = vsel %vm1228, %v1227, 0
        %vm1230 = vcmp.lt.s32.totalorder %v1229, 17
        %v1231 = vsel %vm1230, %v1229, 17
        %v1232 = vperm.slane %v648, 7
        %vm1233 = vcmp.eq.s32.totalorder %v602, %v1232
        %vm1234 = vcmp.eq.s32.totalorder %v603, %v1232
        %vm1235 = vcmp.eq.s32.totalorder %v604, %v1232
        %v1236 = vperm.slane %v658, 7
        %v1237 = vsel %vm1233, %v1236, 0.0
        %v1238 = vsel %vm1234, %v1236, 0.0
        %v1239 = vsel %vm1235, %v1236, 0.0
        %v1240 = vperm.slane %v653, 7
        %vm1241 = vcmp.eq.s32.totalorder %v602, %v1240
        %vm1242 = vcmp.eq.s32.totalorder %v603, %v1240
        %vm1243 = vcmp.eq.s32.totalorder %v604, %v1240
        %v1244 = vperm.slane %v631, 7
        %v1245 = vsel %vm1241, %v1244, 0.0
        %v1246 = vsel %vm1242, %v1244, 0.0
        %v1247 = vsel %vm1243, %v1244, 0.0
        %v1248 = vadd.f32 %v1237, %v1245
        %v1249 = vadd.f32 %v1238, %v1246
        %v1250 = vadd.f32 %v1239, %v1247
        %v1252 = vsel %vm701, %v1250, 0
        %1254 = vmatpush.msra.mxu0 0.0
        %1255 = vmatpush.msra.mxu0 0.0
        %1256 = vmatpush.msra.mxu0 0.0
        %1257 = vmatpush.msra.mxu0 0.0
        %1258 = vmatpush.msra.mxu0 0.0
        %1259 = vmatpush.msra.mxu0 0.0
        %1260 = vmatpush.msra.mxu0 0.0
        %1261 = vmatpush.msra.mxu0 0.0
        %1262 = vmatpush.msra.mxu0 0.0
        %1263 = vmatpush.msra.mxu0 0.0
        %1264 = vmatpush.msra.mxu0 0.0
        %1265 = vmatpush.msra.mxu0 0.0
        %1266 = vmatpush.msra.mxu0 0.0
        %1267 = vmatpush.msra.mxu0 %v1252
        %1268 = vmatpush.msra.mxu0 %v1249
        %1269 = vmatpush.msra.mxu0 %v1248
        %1270 = vmatmul.f32.gmra.mxu0 %v675
        %v1271 = vpop.f32.mrf.mxu0
        %v1272 = vadd.f32 0.0, %v1271
        %1273 = vmatmul.f32.gmra.mxu0 %v678
        %v1274 = vpop.f32.mrf.mxu0
        %v1275 = vadd.f32 0.0, %v1274
        %1276 = vmatmul.f32.gmra.mxu0 %v681
        %v1277 = vpop.f32.mrf.mxu0
        %v1278 = vadd.f32 0.0, %v1277
        %1279 = vmatmul.f32.gmra.mxu0 %v684
        %v1280 = vpop.f32.mrf.mxu0
        %v1281 = vadd.f32 0.0, %v1280
        %1282 = vmatmul.f32.gmra.mxu0 %v687
        %v1283 = vpop.f32.mrf.mxu0
        %v1284 = vadd.f32 0.0, %v1283
        %1285 = vmatmul.f32.gmra.mxu0 %v690
        %v1286 = vpop.f32.mrf.mxu0
        %v1287 = vadd.f32 0.0, %v1286
        %1288 = vmatmul.f32.gmra.mxu0 %v693
        %v1289 = vpop.f32.mrf.mxu0
        %v1290 = vadd.f32 0.0, %v1289
        %1291 = vmatmul.f32.gmra.mxu0 %v696
        %v1292 = vpop.f32.mrf.mxu0
        %v1293 = vadd.f32 0.0, %v1292
        %1294 = vmatmul.f32.gmra.mxu0 %v699
        %v1295 = vpop.f32.mrf.mxu0
        %v1296 = vadd.f32 0.0, %v1295
        %1297 = vdwg.mxu0
        %v1298 = vperm.slane %v1226, 6
        %vm1299 = vcmp.eq.s32.totalorder %v602, %v1298
        %vm1300 = vcmp.eq.s32.totalorder %v603, %v1298
        %vm1301 = vcmp.eq.s32.totalorder %v604, %v1298
        %v1302 = vsub.f32 1.0, %v1220
        %v1303 = vperm.slane %v1302, 6
        %v1304 = vsel %vm1299, %v1303, 0.0
        %v1305 = vsel %vm1300, %v1303, 0.0
        %v1306 = vsel %vm1301, %v1303, 0.0
        %v1307 = vperm.slane %v1231, 6
        %vm1308 = vcmp.eq.s32.totalorder %v602, %v1307
        %vm1309 = vcmp.eq.s32.totalorder %v603, %v1307
        %vm1310 = vcmp.eq.s32.totalorder %v604, %v1307
        %v1311 = vperm.slane %v1220, 6
        %v1312 = vsel %vm1308, %v1311, 0.0
        %v1313 = vsel %vm1309, %v1311, 0.0
        %v1314 = vsel %vm1310, %v1311, 0.0
        %v1315 = vadd.f32 %v1304, %v1312
        %v1316 = vadd.f32 %v1305, %v1313
        %v1317 = vadd.f32 %v1306, %v1314
        %v1318 = vperm.slane %v1218, 6
        %v1319 = vmul.f32 %v1315, %v1318
        %v1320 = vmul.f32 %v1316, %v1318
        %v1321 = vmul.f32 %v1317, %v1318
        %v1325 = vrot.slane %v1319, 6
        %v1326 = vrot.slane %v1320, 6
        %v1327 = vsel %vm701, %v1325, %v1326
        %v1328 = vrot.slane %v1321, 6
        %v1329 = vsel %vm701, %v1326, %v1328
        %v1333 = vrot.slane %v1319, 4
        %v1334 = vrot.slane %v1320, 4
        %v1335 = vsel %vm486, %v1333, %v1334
        %v1336 = vrot.slane %v1321, 4
        %v1337 = vsel %vm486, %v1334, %v1336
        %v1341 = vrot.slane %v1319, 2
        %v1342 = vrot.slane %v1320, 2
        %v1343 = vsel %vm792, %v1341, %v1342
        %v1344 = vrot.slane %v1321, 2
        %v1345 = vsel %vm792, %v1342, %v1344
        %v1349 = vsel %vm701, %v1321, %v1325
        %v1350 = vsel %vm486, %v1329, %v1333
        %v1351 = vsel %vm792, %v1337, %v1341
        %s1352 = scalar_lea.vmem %s4, 24
        %v1353 = vld [vmem:[%s1352] sm:$0xff]
        %v1354 = vmul.f32 %v1272, %v1319
        %v1355 = vmul.f32 %v1275, %v1320
        %v1356 = vmul.f32 %v1278, %v1349
        %v1357 = vmul.f32 %v1281, %v1327
        %v1358 = vmul.f32 %v1284, %v1350
        %v1359 = vmul.f32 %v1287, %v1335
        %v1360 = vmul.f32 %v1290, %v1351
        %v1361 = vmul.f32 %v1293, %v1343
        %v1362 = vmul.f32 %v1296, %v1345
        %v1364 = vsel %vm976, %v1353, 0
        %1366 = vmatpush.msra.mxu0 0.0
        %1367 = vmatpush.msra.mxu0 0.0
        %1368 = vmatpush.msra.mxu0 0.0
        %1369 = vmatpush.msra.mxu0 0.0
        %1370 = vmatpush.msra.mxu0 0.0
        %1371 = vmatpush.msra.mxu0 0.0
        %1372 = vmatpush.msra.mxu0 0.0
        %1373 = vmatpush.msra.mxu0 %v1362
        %1374 = vmatpush.msra.mxu0 %v1361
        %1375 = vmatpush.msra.mxu0 %v1360
        %1376 = vmatpush.msra.mxu0 %v1359
        %1377 = vmatpush.msra.mxu0 %v1358
        %1378 = vmatpush.msra.mxu0 %v1357
        %1379 = vmatpush.msra.mxu0 %v1356
        %1380 = vmatpush.msra.mxu0 %v1355
        %1381 = vmatpush.msra.mxu0 %v1354
        %1382 = vmatmul.f32.gmra.mxu0 %v1364
        %v1383 = vpop.f32.mrf.mxu0
        %v1384 = vadd.f32 0.0, %v1383
        %1385 = vdwg.mxu0
        %v1386 = vadd.f32 %v1206, %v1384
        %v1387 = vadd.f32 %v1207, %v555
        %v1388 = vadd.f32 %v814, %v555
        %vm1389 = vcmp.gt.f32.partialorder %v1387, -1.0
        %vm1390 = vcmp.gt.f32.partialorder %v1388, -1.0
        %v1391 = vsel %vm1390, 1, 0
        %v1392 = vrot.slane %v1391, 1
        %vm1393 = vcmp.ne.s32.totalorder %v1392, 0
        %vm1394 = vmand %vm1389, %vm1393
        %vm1395 = vcmp.lt.f32.partialorder %v1387, 16.0
        %vm1396 = vmand %vm1394, %vm1395
        %vm1397 = vcmp.lt.f32.partialorder %v1388, 16.0
        %v1398 = vsel %vm1397, 1, 0
        %v1399 = vrot.slane %v1398, 1
        %vm1400 = vcmp.ne.s32.totalorder %v1399, 0
        %vm1401 = vmand %vm1396, %vm1400
        %v1402 = vsel %vm1401, 1, 0
        %v1403 = vcvt.s32.f32 %v1402
        %v1404 = vrot.slane %v585, 6
        %v1406 = vmul.f32 %v1403, %v1404
        %v1407 = vfloor.f32 %v1387
        %v1408 = vfloor.f32 %v1388
        %v1409 = vsub.f32 %v1387, %v1407
        %v1410 = vsub.f32 %v1388, %v1408
        %v1411 = vcvt.f32.s32.to.zero.pseudo %v1407
        %v1412 = vadd.s32 %v1411, 1
        %vm1413 = vcmp.gt.s32.totalorder %v1412, 0
        %v1414 = vsel %vm1413, %v1412, 0
        %vm1415 = vcmp.lt.s32.totalorder %v1414, 17
        %v1416 = vsel %vm1415, %v1414, 17
        %v1417 = vadd.s32 %v1411, 2
        %vm1418 = vcmp.gt.s32.totalorder %v1417, 0
        %v1419 = vsel %vm1418, %v1417, 0
        %vm1420 = vcmp.lt.s32.totalorder %v1419, 17
        %v1421 = vsel %vm1420, %v1419, 17
        %v1422 = vcvt.f32.s32.to.zero.pseudo %v1408
        %v1423 = vadd.s32 %v1422, 1
        %vm1424 = vcmp.gt.s32.totalorder %v1423, 0
        %v1425 = vsel %vm1424, %v1423, 0
        %vm1426 = vcmp.lt.s32.totalorder %v1425, 17
        %v1427 = vsel %vm1426, %v1425, 17
        %v1428 = vadd.s32 %v1422, 2
        %vm1429 = vcmp.gt.s32.totalorder %v1428, 0
        %v1430 = vsel %vm1429, %v1428, 0
        %vm1431 = vcmp.lt.s32.totalorder %v1430, 17
        %v1432 = vsel %vm1431, %v1430, 17
        %v1433 = vperm.slane %v1427, 1
        %vm1434 = vcmp.eq.s32.totalorder %v602, %v1433
        %vm1435 = vcmp.eq.s32.totalorder %v603, %v1433
        %vm1436 = vcmp.eq.s32.totalorder %v604, %v1433
        %v1437 = vsub.f32 1.0, %v1410
        %v1438 = vperm.slane %v1437, 1
        %v1439 = vsel %vm1434, %v1438, 0.0
        %v1440 = vsel %vm1435, %v1438, 0.0
        %v1441 = vsel %vm1436, %v1438, 0.0
        %v1442 = vperm.slane %v1432, 1
        %vm1443 = vcmp.eq.s32.totalorder %v602, %v1442
        %vm1444 = vcmp.eq.s32.totalorder %v603, %v1442
        %vm1445 = vcmp.eq.s32.totalorder %v604, %v1442
        %v1446 = vperm.slane %v1410, 1
        %v1447 = vsel %vm1443, %v1446, 0.0
        %v1448 = vsel %vm1444, %v1446, 0.0
        %v1449 = vsel %vm1445, %v1446, 0.0
        %v1450 = vadd.f32 %v1439, %v1447
        %v1451 = vadd.f32 %v1440, %v1448
        %v1452 = vadd.f32 %v1441, %v1449
        %v1454 = vsel %vm701, %v1452, 0
        %1456 = vmatpush.msra.mxu0 0.0
        %1457 = vmatpush.msra.mxu0 0.0
        %1458 = vmatpush.msra.mxu0 0.0
        %1459 = vmatpush.msra.mxu0 0.0
        %1460 = vmatpush.msra.mxu0 0.0
        %1461 = vmatpush.msra.mxu0 0.0
        %1462 = vmatpush.msra.mxu0 0.0
        %1463 = vmatpush.msra.mxu0 0.0
        %1464 = vmatpush.msra.mxu0 0.0
        %1465 = vmatpush.msra.mxu0 0.0
        %1466 = vmatpush.msra.mxu0 0.0
        %1467 = vmatpush.msra.mxu0 0.0
        %1468 = vmatpush.msra.mxu0 0.0
        %1469 = vmatpush.msra.mxu0 %v1454
        %1470 = vmatpush.msra.mxu0 %v1451
        %1471 = vmatpush.msra.mxu0 %v1450
        %1472 = vmatmul.f32.gmra.mxu0 %v675
        %v1473 = vpop.f32.mrf.mxu0
        %v1474 = vadd.f32 0.0, %v1473
        %1475 = vmatmul.f32.gmra.mxu0 %v678
        %v1476 = vpop.f32.mrf.mxu0
        %v1477 = vadd.f32 0.0, %v1476
        %1478 = vmatmul.f32.gmra.mxu0 %v681
        %v1479 = vpop.f32.mrf.mxu0
        %v1480 = vadd.f32 0.0, %v1479
        %1481 = vmatmul.f32.gmra.mxu0 %v684
        %v1482 = vpop.f32.mrf.mxu0
        %v1483 = vadd.f32 0.0, %v1482
        %1484 = vmatmul.f32.gmra.mxu0 %v687
        %v1485 = vpop.f32.mrf.mxu0
        %v1486 = vadd.f32 0.0, %v1485
        %1487 = vmatmul.f32.gmra.mxu0 %v690
        %v1488 = vpop.f32.mrf.mxu0
        %v1489 = vadd.f32 0.0, %v1488
        %1490 = vmatmul.f32.gmra.mxu0 %v693
        %v1491 = vpop.f32.mrf.mxu0
        %v1492 = vadd.f32 0.0, %v1491
        %1493 = vmatmul.f32.gmra.mxu0 %v696
        %v1494 = vpop.f32.mrf.mxu0
        %v1495 = vadd.f32 0.0, %v1494
        %1496 = vmatmul.f32.gmra.mxu0 %v699
        %v1497 = vpop.f32.mrf.mxu0
        %v1498 = vadd.f32 0.0, %v1497
        %1499 = vdwg.mxu0
        %v1500 = vperm.slane %v1416, 0
        %vm1501 = vcmp.eq.s32.totalorder %v602, %v1500
        %vm1502 = vcmp.eq.s32.totalorder %v603, %v1500
        %vm1503 = vcmp.eq.s32.totalorder %v604, %v1500
        %v1504 = vsub.f32 1.0, %v1409
        %v1505 = vperm.slane %v1504, 0
        %v1506 = vsel %vm1501, %v1505, 0.0
        %v1507 = vsel %vm1502, %v1505, 0.0
        %v1508 = vsel %vm1503, %v1505, 0.0
        %v1509 = vperm.slane %v1421, 0
        %vm1510 = vcmp.eq.s32.totalorder %v602, %v1509
        %vm1511 = vcmp.eq.s32.totalorder %v603, %v1509
        %vm1512 = vcmp.eq.s32.totalorder %v604, %v1509
        %v1513 = vperm.slane %v1409, 0
        %v1514 = vsel %vm1510, %v1513, 0.0
        %v1515 = vsel %vm1511, %v1513, 0.0
        %v1516 = vsel %vm1512, %v1513, 0.0
        %v1517 = vadd.f32 %v1506, %v1514
        %v1518 = vadd.f32 %v1507, %v1515
        %v1519 = vadd.f32 %v1508, %v1516
        %v1520 = vperm.slane %v1406, 0
        %v1521 = vmul.f32 %v1517, %v1520
        %v1522 = vmul.f32 %v1518, %v1520
        %v1523 = vmul.f32 %v1519, %v1520
        %v1527 = vrot.slane %v1521, 6
        %v1528 = vrot.slane %v1522, 6
        %v1529 = vsel %vm701, %v1527, %v1528
        %v1530 = vrot.slane %v1523, 6
        %v1531 = vsel %vm701, %v1528, %v1530
        %v1535 = vrot.slane %v1521, 4
        %v1536 = vrot.slane %v1522, 4
        %v1537 = vsel %vm486, %v1535, %v1536
        %v1538 = vrot.slane %v1523, 4
        %v1539 = vsel %vm486, %v1536, %v1538
        %v1543 = vrot.slane %v1521, 2
        %v1544 = vrot.slane %v1522, 2
        %v1545 = vsel %vm792, %v1543, %v1544
        %v1546 = vrot.slane %v1523, 2
        %v1547 = vsel %vm792, %v1544, %v1546
        %v1551 = vsel %vm701, %v1523, %v1527
        %v1552 = vsel %vm486, %v1531, %v1535
        %v1553 = vsel %vm792, %v1539, %v1543
        %s1554 = scalar_lea.vmem %s4, 32
        %v1555 = vld [vmem:[%s1554] sm:$0xff]
        %v1556 = vmul.f32 %v1474, %v1521
        %v1557 = vmul.f32 %v1477, %v1522
        %v1558 = vmul.f32 %v1480, %v1551
        %v1559 = vmul.f32 %v1483, %v1529
        %v1560 = vmul.f32 %v1486, %v1552
        %v1561 = vmul.f32 %v1489, %v1537
        %v1562 = vmul.f32 %v1492, %v1553
        %v1563 = vmul.f32 %v1495, %v1545
        %v1564 = vmul.f32 %v1498, %v1547
        %v1566 = vsel %vm976, %v1555, 0
        %1568 = vmatpush.msra.mxu0 0.0
        %1569 = vmatpush.msra.mxu0 0.0
        %1570 = vmatpush.msra.mxu0 0.0
        %1571 = vmatpush.msra.mxu0 0.0
        %1572 = vmatpush.msra.mxu0 0.0
        %1573 = vmatpush.msra.mxu0 0.0
        %1574 = vmatpush.msra.mxu0 0.0
        %1575 = vmatpush.msra.mxu0 %v1564
        %1576 = vmatpush.msra.mxu0 %v1563
        %1577 = vmatpush.msra.mxu0 %v1562
        %1578 = vmatpush.msra.mxu0 %v1561
        %1579 = vmatpush.msra.mxu0 %v1560
        %1580 = vmatpush.msra.mxu0 %v1559
        %1581 = vmatpush.msra.mxu0 %v1558
        %1582 = vmatpush.msra.mxu0 %v1557
        %1583 = vmatpush.msra.mxu0 %v1556
        %1584 = vmatmul.f32.gmra.mxu0 %v1566
        %v1585 = vpop.f32.mrf.mxu0
        %v1586 = vadd.f32 0.0, %v1585
        %1587 = vdwg.mxu0
        %v1588 = vadd.f32 %v1386, %v1586
        %v1589 = vadd.f32 %v1023, %v555
        %vm1590 = vcmp.gt.f32.partialorder %v1589, -1.0
        %v1591 = vsel %vm1590, 1, 0
        %v1592 = vrot.slane %v1591, 1
        %vm1593 = vcmp.ne.s32.totalorder %v1592, 0
        %vm1594 = vmand %vm1389, %vm1593
        %vm1595 = vmand %vm1594, %vm1395
        %vm1596 = vcmp.lt.f32.partialorder %v1589, 16.0
        %v1597 = vsel %vm1596, 1, 0
        %v1598 = vrot.slane %v1597, 1
        %vm1599 = vcmp.ne.s32.totalorder %v1598, 0
        %vm1600 = vmand %vm1595, %vm1599
        %v1601 = vsel %vm1600, 1, 0
        %v1602 = vcvt.s32.f32 %v1601
        %v1603 = vrot.slane %v585, 5
        %v1605 = vmul.f32 %v1602, %v1603
        %v1606 = vfloor.f32 %v1589
        %v1607 = vsub.f32 %v1589, %v1606
        %v1608 = vcvt.f32.s32.to.zero.pseudo %v1606
        %v1609 = vadd.s32 %v1608, 1
        %vm1610 = vcmp.gt.s32.totalorder %v1609, 0
        %v1611 = vsel %vm1610, %v1609, 0
        %vm1612 = vcmp.lt.s32.totalorder %v1611, 17
        %v1613 = vsel %vm1612, %v1611, 17
        %v1614 = vadd.s32 %v1608, 2
        %vm1615 = vcmp.gt.s32.totalorder %v1614, 0
        %v1616 = vsel %vm1615, %v1614, 0
        %vm1617 = vcmp.lt.s32.totalorder %v1616, 17
        %v1618 = vsel %vm1617, %v1616, 17
        %v1619 = vperm.slane %v1613, 3
        %vm1620 = vcmp.eq.s32.totalorder %v602, %v1619
        %vm1621 = vcmp.eq.s32.totalorder %v603, %v1619
        %vm1622 = vcmp.eq.s32.totalorder %v604, %v1619
        %v1623 = vsub.f32 1.0, %v1607
        %v1624 = vperm.slane %v1623, 3
        %v1625 = vsel %vm1620, %v1624, 0.0
        %v1626 = vsel %vm1621, %v1624, 0.0
        %v1627 = vsel %vm1622, %v1624, 0.0
        %v1628 = vperm.slane %v1618, 3
        %vm1629 = vcmp.eq.s32.totalorder %v602, %v1628
        %vm1630 = vcmp.eq.s32.totalorder %v603, %v1628
        %vm1631 = vcmp.eq.s32.totalorder %v604, %v1628
        %v1632 = vperm.slane %v1607, 3
        %v1633 = vsel %vm1629, %v1632, 0.0
        %v1634 = vsel %vm1630, %v1632, 0.0
        %v1635 = vsel %vm1631, %v1632, 0.0
        %v1636 = vadd.f32 %v1625, %v1633
        %v1637 = vadd.f32 %v1626, %v1634
        %v1638 = vadd.f32 %v1627, %v1635
        %v1640 = vsel %vm701, %v1638, 0
        %1642 = vmatpush.msra.mxu0 0.0
        %1643 = vmatpush.msra.mxu0 0.0
        %1644 = vmatpush.msra.mxu0 0.0
        %1645 = vmatpush.msra.mxu0 0.0
        %1646 = vmatpush.msra.mxu0 0.0
        %1647 = vmatpush.msra.mxu0 0.0
        %1648 = vmatpush.msra.mxu0 0.0
        %1649 = vmatpush.msra.mxu0 0.0
        %1650 = vmatpush.msra.mxu0 0.0
        %1651 = vmatpush.msra.mxu0 0.0
        %1652 = vmatpush.msra.mxu0 0.0
        %1653 = vmatpush.msra.mxu0 0.0
        %1654 = vmatpush.msra.mxu0 0.0
        %1655 = vmatpush.msra.mxu0 %v1640
        %1656 = vmatpush.msra.mxu0 %v1637
        %1657 = vmatpush.msra.mxu0 %v1636
        %1658 = vmatmul.f32.gmra.mxu0 %v675
        %v1659 = vpop.f32.mrf.mxu0
        %v1660 = vadd.f32 0.0, %v1659
        %1661 = vmatmul.f32.gmra.mxu0 %v678
        %v1662 = vpop.f32.mrf.mxu0
        %v1663 = vadd.f32 0.0, %v1662
        %1664 = vmatmul.f32.gmra.mxu0 %v681
        %v1665 = vpop.f32.mrf.mxu0
        %v1666 = vadd.f32 0.0, %v1665
        %1667 = vmatmul.f32.gmra.mxu0 %v684
        %v1668 = vpop.f32.mrf.mxu0
        %v1669 = vadd.f32 0.0, %v1668
        %1670 = vmatmul.f32.gmra.mxu0 %v687
        %v1671 = vpop.f32.mrf.mxu0
        %v1672 = vadd.f32 0.0, %v1671
        %1673 = vmatmul.f32.gmra.mxu0 %v690
        %v1674 = vpop.f32.mrf.mxu0
        %v1675 = vadd.f32 0.0, %v1674
        %1676 = vmatmul.f32.gmra.mxu0 %v693
        %v1677 = vpop.f32.mrf.mxu0
        %v1678 = vadd.f32 0.0, %v1677
        %1679 = vmatmul.f32.gmra.mxu0 %v696
        %v1680 = vpop.f32.mrf.mxu0
        %v1681 = vadd.f32 0.0, %v1680
        %1682 = vmatmul.f32.gmra.mxu0 %v699
        %v1683 = vpop.f32.mrf.mxu0
        %v1684 = vadd.f32 0.0, %v1683
        %1685 = vdwg.mxu0
        %v1686 = vperm.slane %v1416, 2
        %vm1687 = vcmp.eq.s32.totalorder %v602, %v1686
        %vm1688 = vcmp.eq.s32.totalorder %v603, %v1686
        %vm1689 = vcmp.eq.s32.totalorder %v604, %v1686
        %v1690 = vperm.slane %v1504, 2
        %v1691 = vsel %vm1687, %v1690, 0.0
        %v1692 = vsel %vm1688, %v1690, 0.0
        %v1693 = vsel %vm1689, %v1690, 0.0
        %v1694 = vperm.slane %v1421, 2
        %vm1695 = vcmp.eq.s32.totalorder %v602, %v1694
        %vm1696 = vcmp.eq.s32.totalorder %v603, %v1694
        %vm1697 = vcmp.eq.s32.totalorder %v604, %v1694
        %v1698 = vperm.slane %v1409, 2
        %v1699 = vsel %vm1695, %v1698, 0.0
        %v1700 = vsel %vm1696, %v1698, 0.0
        %v1701 = vsel %vm1697, %v1698, 0.0
        %v1702 = vadd.f32 %v1691, %v1699
        %v1703 = vadd.f32 %v1692, %v1700
        %v1704 = vadd.f32 %v1693, %v1701
        %v1705 = vperm.slane %v1605, 2
        %v1706 = vmul.f32 %v1702, %v1705
        %v1707 = vmul.f32 %v1703, %v1705
        %v1708 = vmul.f32 %v1704, %v1705
        %v1712 = vrot.slane %v1706, 6
        %v1713 = vrot.slane %v1707, 6
        %v1714 = vsel %vm701, %v1712, %v1713
        %v1715 = vrot.slane %v1708, 6
        %v1716 = vsel %vm701, %v1713, %v1715
        %v1720 = vrot.slane %v1706, 4
        %v1721 = vrot.slane %v1707, 4
        %v1722 = vsel %vm486, %v1720, %v1721
        %v1723 = vrot.slane %v1708, 4
        %v1724 = vsel %vm486, %v1721, %v1723
        %v1728 = vrot.slane %v1706, 2
        %v1729 = vrot.slane %v1707, 2
        %v1730 = vsel %vm792, %v1728, %v1729
        %v1731 = vrot.slane %v1708, 2
        %v1732 = vsel %vm792, %v1729, %v1731
        %v1736 = vsel %vm701, %v1708, %v1712
        %v1737 = vsel %vm486, %v1716, %v1720
        %v1738 = vsel %vm792, %v1724, %v1728
        %s1739 = scalar_lea.vmem %s4, 40
        %v1740 = vld [vmem:[%s1739] sm:$0xff]
        %v1741 = vmul.f32 %v1660, %v1706
        %v1742 = vmul.f32 %v1663, %v1707
        %v1743 = vmul.f32 %v1666, %v1736
        %v1744 = vmul.f32 %v1669, %v1714
        %v1745 = vmul.f32 %v1672, %v1737
        %v1746 = vmul.f32 %v1675, %v1722
        %v1747 = vmul.f32 %v1678, %v1738
        %v1748 = vmul.f32 %v1681, %v1730
        %v1749 = vmul.f32 %v1684, %v1732
        %v1751 = vsel %vm976, %v1740, 0
        %1753 = vmatpush.msra.mxu0 0.0
        %1754 = vmatpush.msra.mxu0 0.0
        %1755 = vmatpush.msra.mxu0 0.0
        %1756 = vmatpush.msra.mxu0 0.0
        %1757 = vmatpush.msra.mxu0 0.0
        %1758 = vmatpush.msra.mxu0 0.0
        %1759 = vmatpush.msra.mxu0 0.0
        %1760 = vmatpush.msra.mxu0 %v1749
        %1761 = vmatpush.msra.mxu0 %v1748
        %1762 = vmatpush.msra.mxu0 %v1747
        %1763 = vmatpush.msra.mxu0 %v1746
        %1764 = vmatpush.msra.mxu0 %v1745
        %1765 = vmatpush.msra.mxu0 %v1744
        %1766 = vmatpush.msra.mxu0 %v1743
        %1767 = vmatpush.msra.mxu0 %v1742
        %1768 = vmatpush.msra.mxu0 %v1741
        %1769 = vmatmul.f32.gmra.mxu0 %v1751
        %v1770 = vpop.f32.mrf.mxu0
        %v1771 = vadd.f32 0.0, %v1770
        %1772 = vdwg.mxu0
        %v1773 = vadd.f32 %v1588, %v1771
        %v1774 = vadd.f32 %v352, 1.0
        %v1775 = vadd.f32 %v1774, %v555
        %v1776 = vadd.f32 %v607, %v555
        %vm1777 = vcmp.gt.f32.partialorder %v1775, -1.0
        %vm1778 = vcmp.gt.f32.partialorder %v1776, -1.0
        %v1779 = vsel %vm1778, 1, 0
        %v1780 = vrot.slane %v1779, 1
        %vm1781 = vcmp.ne.s32.totalorder %v1780, 0
        %vm1782 = vmand %vm1777, %vm1781
        %vm1783 = vcmp.lt.f32.partialorder %v1775, 16.0
        %vm1784 = vmand %vm1782, %vm1783
        %vm1785 = vcmp.lt.f32.partialorder %v1776, 16.0
        %v1786 = vsel %vm1785, 1, 0
        %v1787 = vrot.slane %v1786, 1
        %vm1788 = vcmp.ne.s32.totalorder %v1787, 0
        %vm1789 = vmand %vm1784, %vm1788
        %v1790 = vsel %vm1789, 1, 0
        %v1791 = vcvt.s32.f32 %v1790
        %v1793 = vrot.slane %v600, 4
        %v1795 = vmul.f32 %v1791, %v1793
        %v1796 = vfloor.f32 %v1775
        %v1797 = vfloor.f32 %v1776
        %v1798 = vsub.f32 %v1775, %v1796
        %v1799 = vsub.f32 %v1776, %v1797
        %v1800 = vcvt.f32.s32.to.zero.pseudo %v1796
        %v1801 = vadd.s32 %v1800, 1
        %vm1802 = vcmp.gt.s32.totalorder %v1801, 0
        %v1803 = vsel %vm1802, %v1801, 0
        %vm1804 = vcmp.lt.s32.totalorder %v1803, 17
        %v1805 = vsel %vm1804, %v1803, 17
        %v1806 = vadd.s32 %v1800, 2
        %vm1807 = vcmp.gt.s32.totalorder %v1806, 0
        %v1808 = vsel %vm1807, %v1806, 0
        %vm1809 = vcmp.lt.s32.totalorder %v1808, 17
        %v1810 = vsel %vm1809, %v1808, 17
        %v1811 = vcvt.f32.s32.to.zero.pseudo %v1797
        %v1812 = vadd.s32 %v1811, 1
        %vm1813 = vcmp.gt.s32.totalorder %v1812, 0
        %v1814 = vsel %vm1813, %v1812, 0
        %vm1815 = vcmp.lt.s32.totalorder %v1814, 17
        %v1816 = vsel %vm1815, %v1814, 17
        %v1817 = vadd.s32 %v1811, 2
        %vm1818 = vcmp.gt.s32.totalorder %v1817, 0
        %v1819 = vsel %vm1818, %v1817, 0
        %vm1820 = vcmp.lt.s32.totalorder %v1819, 17
        %v1821 = vsel %vm1820, %v1819, 17
        %v1822 = vperm.slane %v1816, 5
        %vm1823 = vcmp.eq.s32.totalorder %v602, %v1822
        %vm1824 = vcmp.eq.s32.totalorder %v603, %v1822
        %vm1825 = vcmp.eq.s32.totalorder %v604, %v1822
        %v1826 = vsub.f32 1.0, %v1799
        %v1827 = vperm.slane %v1826, 5
        %v1828 = vsel %vm1823, %v1827, 0.0
        %v1829 = vsel %vm1824, %v1827, 0.0
        %v1830 = vsel %vm1825, %v1827, 0.0
        %v1831 = vperm.slane %v1821, 5
        %vm1832 = vcmp.eq.s32.totalorder %v602, %v1831
        %vm1833 = vcmp.eq.s32.totalorder %v603, %v1831
        %vm1834 = vcmp.eq.s32.totalorder %v604, %v1831
        %v1835 = vperm.slane %v1799, 5
        %v1836 = vsel %vm1832, %v1835, 0.0
        %v1837 = vsel %vm1833, %v1835, 0.0
        %v1838 = vsel %vm1834, %v1835, 0.0
        %v1839 = vadd.f32 %v1828, %v1836
        %v1840 = vadd.f32 %v1829, %v1837
        %v1841 = vadd.f32 %v1830, %v1838
        %v1843 = vsel %vm701, %v1841, 0
        %1845 = vmatpush.msra.mxu0 0.0
        %1846 = vmatpush.msra.mxu0 0.0
        %1847 = vmatpush.msra.mxu0 0.0
        %1848 = vmatpush.msra.mxu0 0.0
        %1849 = vmatpush.msra.mxu0 0.0
        %1850 = vmatpush.msra.mxu0 0.0
        %1851 = vmatpush.msra.mxu0 0.0
        %1852 = vmatpush.msra.mxu0 0.0
        %1853 = vmatpush.msra.mxu0 0.0
        %1854 = vmatpush.msra.mxu0 0.0
        %1855 = vmatpush.msra.mxu0 0.0
        %1856 = vmatpush.msra.mxu0 0.0
        %1857 = vmatpush.msra.mxu0 0.0
        %1858 = vmatpush.msra.mxu0 %v1843
        %1859 = vmatpush.msra.mxu0 %v1840
        %1860 = vmatpush.msra.mxu0 %v1839
        %1861 = vmatmul.f32.gmra.mxu0 %v675
        %v1862 = vpop.f32.mrf.mxu0
        %v1863 = vadd.f32 0.0, %v1862
        %1864 = vmatmul.f32.gmra.mxu0 %v678
        %v1865 = vpop.f32.mrf.mxu0
        %v1866 = vadd.f32 0.0, %v1865
        %1867 = vmatmul.f32.gmra.mxu0 %v681
        %v1868 = vpop.f32.mrf.mxu0
        %v1869 = vadd.f32 0.0, %v1868
        %1870 = vmatmul.f32.gmra.mxu0 %v684
        %v1871 = vpop.f32.mrf.mxu0
        %v1872 = vadd.f32 0.0, %v1871
        %1873 = vmatmul.f32.gmra.mxu0 %v687
        %v1874 = vpop.f32.mrf.mxu0
        %v1875 = vadd.f32 0.0, %v1874
        %1876 = vmatmul.f32.gmra.mxu0 %v690
        %v1877 = vpop.f32.mrf.mxu0
        %v1878 = vadd.f32 0.0, %v1877
        %1879 = vmatmul.f32.gmra.mxu0 %v693
        %v1880 = vpop.f32.mrf.mxu0
        %v1881 = vadd.f32 0.0, %v1880
        %1882 = vmatmul.f32.gmra.mxu0 %v696
        %v1883 = vpop.f32.mrf.mxu0
        %v1884 = vadd.f32 0.0, %v1883
        %1885 = vmatmul.f32.gmra.mxu0 %v699
        %v1886 = vpop.f32.mrf.mxu0
        %v1887 = vadd.f32 0.0, %v1886
        %1888 = vdwg.mxu0
        %v1889 = vperm.slane %v1805, 4
        %vm1890 = vcmp.eq.s32.totalorder %v602, %v1889
        %vm1891 = vcmp.eq.s32.totalorder %v603, %v1889
        %vm1892 = vcmp.eq.s32.totalorder %v604, %v1889
        %v1893 = vsub.f32 1.0, %v1798
        %v1894 = vperm.slane %v1893, 4
        %v1895 = vsel %vm1890, %v1894, 0.0
        %v1896 = vsel %vm1891, %v1894, 0.0
        %v1897 = vsel %vm1892, %v1894, 0.0
        %v1898 = vperm.slane %v1810, 4
        %vm1899 = vcmp.eq.s32.totalorder %v602, %v1898
        %vm1900 = vcmp.eq.s32.totalorder %v603, %v1898
        %vm1901 = vcmp.eq.s32.totalorder %v604, %v1898
        %v1902 = vperm.slane %v1798, 4
        %v1903 = vsel %vm1899, %v1902, 0.0
        %v1904 = vsel %vm1900, %v1902, 0.0
        %v1905 = vsel %vm1901, %v1902, 0.0
        %v1906 = vadd.f32 %v1895, %v1903
        %v1907 = vadd.f32 %v1896, %v1904
        %v1908 = vadd.f32 %v1897, %v1905
        %v1909 = vperm.slane %v1795, 4
        %v1910 = vmul.f32 %v1906, %v1909
        %v1911 = vmul.f32 %v1907, %v1909
        %v1912 = vmul.f32 %v1908, %v1909
        %v1916 = vrot.slane %v1910, 6
        %v1917 = vrot.slane %v1911, 6
        %v1918 = vsel %vm701, %v1916, %v1917
        %v1919 = vrot.slane %v1912, 6
        %v1920 = vsel %vm701, %v1917, %v1919
        %v1924 = vrot.slane %v1910, 4
        %v1925 = vrot.slane %v1911, 4
        %v1926 = vsel %vm486, %v1924, %v1925
        %v1927 = vrot.slane %v1912, 4
        %v1928 = vsel %vm486, %v1925, %v1927
        %v1932 = vrot.slane %v1910, 2
        %v1933 = vrot.slane %v1911, 2
        %v1934 = vsel %vm792, %v1932, %v1933
        %v1935 = vrot.slane %v1912, 2
        %v1936 = vsel %vm792, %v1933, %v1935
        %v1940 = vsel %vm701, %v1912, %v1916
        %v1941 = vsel %vm486, %v1920, %v1924
        %v1942 = vsel %vm792, %v1928, %v1932
        %s1943 = scalar_lea.vmem %s4, 48
        %v1944 = vld [vmem:[%s1943] sm:$0xff]
        %v1945 = vmul.f32 %v1863, %v1910
        %v1946 = vmul.f32 %v1866, %v1911
        %v1947 = vmul.f32 %v1869, %v1940
        %v1948 = vmul.f32 %v1872, %v1918
        %v1949 = vmul.f32 %v1875, %v1941
        %v1950 = vmul.f32 %v1878, %v1926
        %v1951 = vmul.f32 %v1881, %v1942
        %v1952 = vmul.f32 %v1884, %v1934
        %v1953 = vmul.f32 %v1887, %v1936
        %v1955 = vsel %vm976, %v1944, 0
        %1957 = vmatpush.msra.mxu0 0.0
        %1958 = vmatpush.msra.mxu0 0.0
        %1959 = vmatpush.msra.mxu0 0.0
        %1960 = vmatpush.msra.mxu0 0.0
        %1961 = vmatpush.msra.mxu0 0.0
        %1962 = vmatpush.msra.mxu0 0.0
        %1963 = vmatpush.msra.mxu0 0.0
        %1964 = vmatpush.msra.mxu0 %v1953
        %1965 = vmatpush.msra.mxu0 %v1952
        %1966 = vmatpush.msra.mxu0 %v1951
        %1967 = vmatpush.msra.mxu0 %v1950
        %1968 = vmatpush.msra.mxu0 %v1949
        %1969 = vmatpush.msra.mxu0 %v1948
        %1970 = vmatpush.msra.mxu0 %v1947
        %1971 = vmatpush.msra.mxu0 %v1946
        %1972 = vmatpush.msra.mxu0 %v1945
        %1973 = vmatmul.f32.gmra.mxu0 %v1955
        %v1974 = vpop.f32.mrf.mxu0
        %v1975 = vadd.f32 0.0, %v1974
        %1976 = vdwg.mxu0
        %v1977 = vadd.f32 %v1773, %v1975
        %vm1978 = vmand %vm1777, %vm1393
        %vm1979 = vmand %vm1978, %vm1783
        %vm1980 = vmand %vm1979, %vm1400
        %v1981 = vsel %vm1980, 1, 0
        %v1982 = vcvt.s32.f32 %v1981
        %v1983 = vrot.slane %v600, 3
        %v1985 = vmul.f32 %v1982, %v1983
        %v1986 = vperm.slane %v1427, 7
        %vm1987 = vcmp.eq.s32.totalorder %v602, %v1986
        %vm1988 = vcmp.eq.s32.totalorder %v603, %v1986
        %vm1989 = vcmp.eq.s32.totalorder %v604, %v1986
        %v1990 = vperm.slane %v1437, 7
        %v1991 = vsel %vm1987, %v1990, 0.0
        %v1992 = vsel %vm1988, %v1990, 0.0
        %v1993 = vsel %vm1989, %v1990, 0.0
        %v1994 = vperm.slane %v1432, 7
        %vm1995 = vcmp.eq.s32.totalorder %v602, %v1994
        %vm1996 = vcmp.eq.s32.totalorder %v603, %v1994
        %vm1997 = vcmp.eq.s32.totalorder %v604, %v1994
        %v1998 = vperm.slane %v1410, 7
        %v1999 = vsel %vm1995, %v1998, 0.0
        %v2000 = vsel %vm1996, %v1998, 0.0
        %v2001 = vsel %vm1997, %v1998, 0.0
        %v2002 = vadd.f32 %v1991, %v1999
        %v2003 = vadd.f32 %v1992, %v2000
        %v2004 = vadd.f32 %v1993, %v2001
        %v2006 = vsel %vm701, %v2004, 0
        %2008 = vmatpush.msra.mxu0 0.0
        %2009 = vmatpush.msra.mxu0 0.0
        %2010 = vmatpush.msra.mxu0 0.0
        %2011 = vmatpush.msra.mxu0 0.0
        %2012 = vmatpush.msra.mxu0 0.0
        %2013 = vmatpush.msra.mxu0 0.0
        %2014 = vmatpush.msra.mxu0 0.0
        %2015 = vmatpush.msra.mxu0 0.0
        %2016 = vmatpush.msra.mxu0 0.0
        %2017 = vmatpush.msra.mxu0 0.0
        %2018 = vmatpush.msra.mxu0 0.0
        %2019 = vmatpush.msra.mxu0 0.0
        %2020 = vmatpush.msra.mxu0 0.0
        %2021 = vmatpush.msra.mxu0 %v2006
        %2022 = vmatpush.msra.mxu0 %v2003
        %2023 = vmatpush.msra.mxu0 %v2002
        %2024 = vmatmul.f32.gmra.mxu0 %v675
        %v2025 = vpop.f32.mrf.mxu0
        %v2026 = vadd.f32 0.0, %v2025
        %2027 = vmatmul.f32.gmra.mxu0 %v678
        %v2028 = vpop.f32.mrf.mxu0
        %v2029 = vadd.f32 0.0, %v2028
        %2030 = vmatmul.f32.gmra.mxu0 %v681
        %v2031 = vpop.f32.mrf.mxu0
        %v2032 = vadd.f32 0.0, %v2031
        %2033 = vmatmul.f32.gmra.mxu0 %v684
        %v2034 = vpop.f32.mrf.mxu0
        %v2035 = vadd.f32 0.0, %v2034
        %2036 = vmatmul.f32.gmra.mxu0 %v687
        %v2037 = vpop.f32.mrf.mxu0
        %v2038 = vadd.f32 0.0, %v2037
        %2039 = vmatmul.f32.gmra.mxu0 %v690
        %v2040 = vpop.f32.mrf.mxu0
        %v2041 = vadd.f32 0.0, %v2040
        %2042 = vmatmul.f32.gmra.mxu0 %v693
        %v2043 = vpop.f32.mrf.mxu0
        %v2044 = vadd.f32 0.0, %v2043
        %2045 = vmatmul.f32.gmra.mxu0 %v696
        %v2046 = vpop.f32.mrf.mxu0
        %v2047 = vadd.f32 0.0, %v2046
        %2048 = vmatmul.f32.gmra.mxu0 %v699
        %v2049 = vpop.f32.mrf.mxu0
        %v2050 = vadd.f32 0.0, %v2049
        %2051 = vdwg.mxu0
        %v2052 = vperm.slane %v1805, 6
        %vm2053 = vcmp.eq.s32.totalorder %v602, %v2052
        %vm2054 = vcmp.eq.s32.totalorder %v603, %v2052
        %vm2055 = vcmp.eq.s32.totalorder %v604, %v2052
        %v2056 = vperm.slane %v1893, 6
        %v2057 = vsel %vm2053, %v2056, 0.0
        %v2058 = vsel %vm2054, %v2056, 0.0
        %v2059 = vsel %vm2055, %v2056, 0.0
        %v2060 = vperm.slane %v1810, 6
        %vm2061 = vcmp.eq.s32.totalorder %v602, %v2060
        %vm2062 = vcmp.eq.s32.totalorder %v603, %v2060
        %vm2063 = vcmp.eq.s32.totalorder %v604, %v2060
        %v2064 = vperm.slane %v1798, 6
        %v2065 = vsel %vm2061, %v2064, 0.0
        %v2066 = vsel %vm2062, %v2064, 0.0
        %v2067 = vsel %vm2063, %v2064, 0.0
        %v2068 = vadd.f32 %v2057, %v2065
        %v2069 = vadd.f32 %v2058, %v2066
        %v2070 = vadd.f32 %v2059, %v2067
        %v2071 = vperm.slane %v1985, 6
        %v2072 = vmul.f32 %v2068, %v2071
        %v2073 = vmul.f32 %v2069, %v2071
        %v2074 = vmul.f32 %v2070, %v2071
        %v2078 = vrot.slane %v2072, 6
        %v2079 = vrot.slane %v2073, 6
        %v2080 = vsel %vm701, %v2078, %v2079
        %v2081 = vrot.slane %v2074, 6
        %v2082 = vsel %vm701, %v2079, %v2081
        %v2086 = vrot.slane %v2072, 4
        %v2087 = vrot.slane %v2073, 4
        %v2088 = vsel %vm486, %v2086, %v2087
        %v2089 = vrot.slane %v2074, 4
        %v2090 = vsel %vm486, %v2087, %v2089
        %v2094 = vrot.slane %v2072, 2
        %v2095 = vrot.slane %v2073, 2
        %v2096 = vsel %vm792, %v2094, %v2095
        %v2097 = vrot.slane %v2074, 2
        %v2098 = vsel %vm792, %v2095, %v2097
        %v2102 = vsel %vm701, %v2074, %v2078
        %v2103 = vsel %vm486, %v2082, %v2086
        %v2104 = vsel %vm792, %v2090, %v2094
        %s2105 = scalar_lea.vmem %s4, 56
        %v2106 = vld [vmem:[%s2105] sm:$0xff]
        %v2107 = vmul.f32 %v2026, %v2072
        %v2108 = vmul.f32 %v2029, %v2073
        %v2109 = vmul.f32 %v2032, %v2102
        %v2110 = vmul.f32 %v2035, %v2080
        %v2111 = vmul.f32 %v2038, %v2103
        %v2112 = vmul.f32 %v2041, %v2088
        %v2113 = vmul.f32 %v2044, %v2104
        %v2114 = vmul.f32 %v2047, %v2096
        %v2115 = vmul.f32 %v2050, %v2098
        %v2117 = vsel %vm976, %v2106, 0
        %2119 = vmatpush.msra.mxu0 0.0
        %2120 = vmatpush.msra.mxu0 0.0
        %2121 = vmatpush.msra.mxu0 0.0
        %2122 = vmatpush.msra.mxu0 0.0
        %2123 = vmatpush.msra.mxu0 0.0
        %2124 = vmatpush.msra.mxu0 0.0
        %2125 = vmatpush.msra.mxu0 0.0
        %2126 = vmatpush.msra.mxu0 %v2115
        %2127 = vmatpush.msra.mxu0 %v2114
        %2128 = vmatpush.msra.mxu0 %v2113
        %2129 = vmatpush.msra.mxu0 %v2112
        %2130 = vmatpush.msra.mxu0 %v2111
        %2131 = vmatpush.msra.mxu0 %v2110
        %2132 = vmatpush.msra.mxu0 %v2109
        %2133 = vmatpush.msra.mxu0 %v2108
        %2134 = vmatpush.msra.mxu0 %v2107
        %2135 = vmatmul.f32.gmra.mxu0 %v2117
        %v2136 = vpop.f32.mrf.mxu0
        %v2137 = vadd.f32 0.0, %v2136
        %2138 = vdwg.mxu0
        %v2139 = vadd.f32 %v1977, %v2137
        %v2140 = vadd.f32 %v1774, %v558
        %v2141 = vadd.f32 %v1023, %v558
        %vm2142 = vcmp.gt.f32.partialorder %v2140, -1.0
        %vm2143 = vcmp.gt.f32.partialorder %v2141, -1.0
        %v2144 = vsel %vm2143, 1, 0
        %v2145 = vrot.slane %v2144, 1
        %vm2146 = vcmp.ne.s32.totalorder %v2145, 0
        %vm2147 = vmand %vm2142, %vm2146
        %vm2148 = vcmp.lt.f32.partialorder %v2140, 16.0
        %vm2149 = vmand %vm2147, %vm2148
        %vm2150 = vcmp.lt.f32.partialorder %v2141, 16.0
        %v2151 = vsel %vm2150, 1, 0
        %v2152 = vrot.slane %v2151, 1
        %vm2153 = vcmp.ne.s32.totalorder %v2152, 0
        %vm2154 = vmand %vm2149, %vm2153
        %v2155 = vsel %vm2154, 1, 0
        %v2156 = vcvt.s32.f32 %v2155
        %v2157 = vrot.slane %v600, 2
        %v2159 = vmul.f32 %v2156, %v2157
        %v2160 = vfloor.f32 %v2140
        %v2161 = vfloor.f32 %v2141
        %v2162 = vsub.f32 %v2140, %v2160
        %v2163 = vsub.f32 %v2141, %v2161
        %v2164 = vcvt.f32.s32.to.zero.pseudo %v2160
        %v2165 = vadd.s32 %v2164, 1
        %vm2166 = vcmp.gt.s32.totalorder %v2165, 0
        %v2167 = vsel %vm2166, %v2165, 0
        %vm2168 = vcmp.lt.s32.totalorder %v2167, 17
        %v2169 = vsel %vm2168, %v2167, 17
        %v2170 = vadd.s32 %v2164, 2
        %vm2171 = vcmp.gt.s32.totalorder %v2170, 0
        %v2172 = vsel %vm2171, %v2170, 0
        %vm2173 = vcmp.lt.s32.totalorder %v2172, 17
        %v2174 = vsel %vm2173, %v2172, 17
        %v2175 = vcvt.f32.s32.to.zero.pseudo %v2161
        %v2176 = vadd.s32 %v2175, 1
        %vm2177 = vcmp.gt.s32.totalorder %v2176, 0
        %v2178 = vsel %vm2177, %v2176, 0
        %vm2179 = vcmp.lt.s32.totalorder %v2178, 17
        %v2180 = vsel %vm2179, %v2178, 17
        %v2181 = vadd.s32 %v2175, 2
        %vm2182 = vcmp.gt.s32.totalorder %v2181, 0
        %v2183 = vsel %vm2182, %v2181, 0
        %vm2184 = vcmp.lt.s32.totalorder %v2183, 17
        %v2185 = vsel %vm2184, %v2183, 17
        %v2186 = vperm.slane %v2180, 1
        %vm2187 = vcmp.eq.s32.totalorder %v602, %v2186
        %vm2188 = vcmp.eq.s32.totalorder %v603, %v2186
        %vm2189 = vcmp.eq.s32.totalorder %v604, %v2186
        %v2190 = vsub.f32 1.0, %v2163
        %v2191 = vperm.slane %v2190, 1
        %v2192 = vsel %vm2187, %v2191, 0.0
        %v2193 = vsel %vm2188, %v2191, 0.0
        %v2194 = vsel %vm2189, %v2191, 0.0
        %v2195 = vperm.slane %v2185, 1
        %vm2196 = vcmp.eq.s32.totalorder %v602, %v2195
        %vm2197 = vcmp.eq.s32.totalorder %v603, %v2195
        %vm2198 = vcmp.eq.s32.totalorder %v604, %v2195
        %v2199 = vperm.slane %v2163, 1
        %v2200 = vsel %vm2196, %v2199, 0.0
        %v2201 = vsel %vm2197, %v2199, 0.0
        %v2202 = vsel %vm2198, %v2199, 0.0
        %v2203 = vadd.f32 %v2192, %v2200
        %v2204 = vadd.f32 %v2193, %v2201
        %v2205 = vadd.f32 %v2194, %v2202
        %v2207 = vsel %vm701, %v2205, 0
        %2209 = vmatpush.msra.mxu0 0.0
        %2210 = vmatpush.msra.mxu0 0.0
        %2211 = vmatpush.msra.mxu0 0.0
        %2212 = vmatpush.msra.mxu0 0.0
        %2213 = vmatpush.msra.mxu0 0.0
        %2214 = vmatpush.msra.mxu0 0.0
        %2215 = vmatpush.msra.mxu0 0.0
        %2216 = vmatpush.msra.mxu0 0.0
        %2217 = vmatpush.msra.mxu0 0.0
        %2218 = vmatpush.msra.mxu0 0.0
        %2219 = vmatpush.msra.mxu0 0.0
        %2220 = vmatpush.msra.mxu0 0.0
        %2221 = vmatpush.msra.mxu0 0.0
        %2222 = vmatpush.msra.mxu0 %v2207
        %2223 = vmatpush.msra.mxu0 %v2204
        %2224 = vmatpush.msra.mxu0 %v2203
        %2225 = vmatmul.f32.gmra.mxu0 %v675
        %v2226 = vpop.f32.mrf.mxu0
        %v2227 = vadd.f32 0.0, %v2226
        %2228 = vmatmul.f32.gmra.mxu0 %v678
        %v2229 = vpop.f32.mrf.mxu0
        %v2230 = vadd.f32 0.0, %v2229
        %2231 = vmatmul.f32.gmra.mxu0 %v681
        %v2232 = vpop.f32.mrf.mxu0
        %v2233 = vadd.f32 0.0, %v2232
        %2234 = vmatmul.f32.gmra.mxu0 %v684
        %v2235 = vpop.f32.mrf.mxu0
        %v2236 = vadd.f32 0.0, %v2235
        %2237 = vmatmul.f32.gmra.mxu0 %v687
        %v2238 = vpop.f32.mrf.mxu0
        %v2239 = vadd.f32 0.0, %v2238
        %2240 = vmatmul.f32.gmra.mxu0 %v690
        %v2241 = vpop.f32.mrf.mxu0
        %v2242 = vadd.f32 0.0, %v2241
        %2243 = vmatmul.f32.gmra.mxu0 %v693
        %v2244 = vpop.f32.mrf.mxu0
        %v2245 = vadd.f32 0.0, %v2244
        %2246 = vmatmul.f32.gmra.mxu0 %v696
        %v2247 = vpop.f32.mrf.mxu0
        %v2248 = vadd.f32 0.0, %v2247
        %2249 = vmatmul.f32.gmra.mxu0 %v699
        %v2250 = vpop.f32.mrf.mxu0
        %v2251 = vadd.f32 0.0, %v2250
        %2252 = vdwg.mxu0
        %v2253 = vperm.slane %v2169, 0
        %vm2254 = vcmp.eq.s32.totalorder %v602, %v2253
        %vm2255 = vcmp.eq.s32.totalorder %v603, %v2253
        %vm2256 = vcmp.eq.s32.totalorder %v604, %v2253
        %v2257 = vsub.f32 1.0, %v2162
        %v2258 = vperm.slane %v2257, 0
        %v2259 = vsel %vm2254, %v2258, 0.0
        %v2260 = vsel %vm2255, %v2258, 0.0
        %v2261 = vsel %vm2256, %v2258, 0.0
        %v2262 = vperm.slane %v2174, 0
        %vm2263 = vcmp.eq.s32.totalorder %v602, %v2262
        %vm2264 = vcmp.eq.s32.totalorder %v603, %v2262
        %vm2265 = vcmp.eq.s32.totalorder %v604, %v2262
        %v2266 = vperm.slane %v2162, 0
        %v2267 = vsel %vm2263, %v2266, 0.0
        %v2268 = vsel %vm2264, %v2266, 0.0
        %v2269 = vsel %vm2265, %v2266, 0.0
        %v2270 = vadd.f32 %v2259, %v2267
        %v2271 = vadd.f32 %v2260, %v2268
        %v2272 = vadd.f32 %v2261, %v2269
        %v2273 = vperm.slane %v2159, 0
        %v2274 = vmul.f32 %v2270, %v2273
        %v2275 = vmul.f32 %v2271, %v2273
        %v2276 = vmul.f32 %v2272, %v2273
        %v2280 = vrot.slane %v2274, 6
        %v2281 = vrot.slane %v2275, 6
        %v2282 = vsel %vm701, %v2280, %v2281
        %v2283 = vrot.slane %v2276, 6
        %v2284 = vsel %vm701, %v2281, %v2283
        %v2288 = vrot.slane %v2274, 4
        %v2289 = vrot.slane %v2275, 4
        %v2290 = vsel %vm486, %v2288, %v2289
        %v2291 = vrot.slane %v2276, 4
        %v2292 = vsel %vm486, %v2289, %v2291
        %v2296 = vrot.slane %v2274, 2
        %v2297 = vrot.slane %v2275, 2
        %v2298 = vsel %vm792, %v2296, %v2297
        %v2299 = vrot.slane %v2276, 2
        %v2300 = vsel %vm792, %v2297, %v2299
        %v2304 = vsel %vm701, %v2276, %v2280
        %v2305 = vsel %vm486, %v2284, %v2288
        %v2306 = vsel %vm792, %v2292, %v2296
        %s2307 = scalar_lea.vmem %s4, 64
        %v2308 = vld [vmem:[%s2307] sm:$0xff]
        %v2309 = vmul.f32 %v2227, %v2274
        %v2310 = vmul.f32 %v2230, %v2275
        %v2311 = vmul.f32 %v2233, %v2304
        %v2312 = vmul.f32 %v2236, %v2282
        %v2313 = vmul.f32 %v2239, %v2305
        %v2314 = vmul.f32 %v2242, %v2290
        %v2315 = vmul.f32 %v2245, %v2306
        %v2316 = vmul.f32 %v2248, %v2298
        %v2317 = vmul.f32 %v2251, %v2300
        %v2319 = vsel %vm976, %v2308, 0
        %2321 = vmatpush.msra.mxu0 0.0
        %2322 = vmatpush.msra.mxu0 0.0
        %2323 = vmatpush.msra.mxu0 0.0
        %2324 = vmatpush.msra.mxu0 0.0
        %2325 = vmatpush.msra.mxu0 0.0
        %2326 = vmatpush.msra.mxu0 0.0
        %2327 = vmatpush.msra.mxu0 0.0
        %2328 = vmatpush.msra.mxu0 %v2317
        %2329 = vmatpush.msra.mxu0 %v2316
        %2330 = vmatpush.msra.mxu0 %v2315
        %2331 = vmatpush.msra.mxu0 %v2314
        %2332 = vmatpush.msra.mxu0 %v2313
        %2333 = vmatpush.msra.mxu0 %v2312
        %2334 = vmatpush.msra.mxu0 %v2311
        %2335 = vmatpush.msra.mxu0 %v2310
        %2336 = vmatpush.msra.mxu0 %v2309
        %2337 = vmatmul.f32.gmra.mxu0 %v2319
        %v2338 = vpop.f32.mrf.mxu0
        %v2339 = vadd.f32 0.0, %v2338
        %2340 = vdwg.mxu0
        %v2341 = vadd.f32 %v2139, %v2339
        %v2342 = vld [vmem:[%s5] sm:$0xff]
        %2344 = vset.pattern.permute.xlu0 0
        %2345 = vperm.xlu0 %2344, %v2342
        %v2346 = vpop.permute.xlu0 %2345
        %v2348 = vmul.f32 %v2341, %v2346
        %v2349 = vld [vmem:[%s6] sm:$0xff]
        %2351 = vset.pattern.permute.xlu0 0
        %2352 = vperm.xlu0 %2351, %v2349
        %v2353 = vpop.permute.xlu0 %2352
        %v2355 = vadd.f32 %v2348, %v2353
        %v2356 = vmax.f32 %v2355, 0.0
        %2357 = vst [vmem:[%s310] sm:$0xff] %v2356
        %s2358 = sand.u32 %s202, 1
        %s2359 = scalar_lea.sflag [#allocation3], %s2358
        %s2360 = sand.u32 %s202, 1
        %s2361 = smul.addr %s2360, 8
        %s2362 = scalar_lea.vmem [#allocation2], %s2361
        // Predicated region
        $region49: #{tpu_custom_call.1} parent=47 // pred_check
          %p2363 = pneg %p212
        $region50: #{tpu_custom_call.1} parent=47 // pred_check_branch
          %2365 = sbr.rel (%p2363) target = $region52
        $region51: #{tpu_custom_call.1} parent=47 // pred_region
          %2367 = vsyncadd %s2359, 0
          %s2368 = smul.addr %s25, 2
          %s2369 = sadd.s32 %s26, %s2368
          %s2370 = smul.addr %s2369, 8
          %s2371 = scalar_lea.hbm %s7, %s2370
          %s2373 = sshll.u32 %s2362, 4
          %s2374 = int_to_ptr.vmem [resolvable:$true] %s2373
          %s2375 = sshll.u32 %s2371, 4
          %s2376 = int_to_ptr.hbm [resolvable:$true] %s2375
          %2378 = dma.vmem_to_hbm [thread:$0]  %s2374, 128, %s2376, %s2359
        $region52: #{tpu_custom_call.1} parent=47 // pred_fallthru
          _
      $region48: #{tpu_custom_call.1} parent=5 // pred_fallthru
        _
      %p2379 = scmp.le.s32.totalorder 2, %s16
      // Predicated region
      $region53: #{tpu_custom_call.1} parent=5 // pred_check
        %p2380 = pneg %p2379
      $region54: #{tpu_custom_call.1} parent=5 // pred_check_branch
        %2382 = sbr.rel (%p2380) target = $region56
      $region55: #{tpu_custom_call.1} parent=5 // pred_region
        %s2383 = ssub.s32 %s16, 2
        // Predicated region
        $region57: #{tpu_custom_call.1} parent=55 // pred_check
          %p2384 = pneg %p218
        $region58: #{tpu_custom_call.1} parent=55 // pred_check_branch
          %2386 = sbr.rel (%p2384) target = $region60
        $region59: #{tpu_custom_call.1} parent=55 // pred_region
          %s2387 = sand.u32 %s203, 1
          %s2388 = scalar_lea.sflag [#allocation3], %s2387
          %s2389 = sand.u32 %s203, 1
          %s2390 = smul.addr %s2389, 8
          %s2391 = scalar_lea.vmem [#allocation2], %s2390
          %2393 = dma.done %s2388, 128
        $region60: #{tpu_custom_call.1} parent=55 // pred_fallthru
          _
      $region56: #{tpu_custom_call.1} parent=5 // pred_fallthru
        _
    $region6: #{tpu_custom_call.1} parent=1 // loop_footer
      %s20 = sadd.s32 1, %s16
    $region7: #{tpu_custom_call.1} parent=1 // loop_footer_branch
      %15 = sbr.rel target = $region3
    $region8: #{tpu_custom_call.1} parent=1 // loop_exit
      _
    %2394 = vsyncpa [#allocation3], 1
    %s2395 = scalar_lea.sflag [#allocation3], 1
    %2396 = vsyncpa %s2395, 1

</llo_original>
